<compile_context>
chip_gen: v6e
topology: v6e:2x2x1
jax: 0.10.0
libtpu: 0.0.40
codegen_flags: <defaults>
</compile_context>

<pallas_src>
import math
from functools import partial

import jax
import jax.numpy as jnp
from jax.experimental import pallas as pl
from jax.experimental.pallas import tpu as pltpu


# ----------------------------------------------------------------------------
# In-kernel helpers (operate on VMEM-resident jnp values)
# ----------------------------------------------------------------------------

def _layer_norm(y, gamma, beta, eps=1e-5):
    # y: (S, D) f32; gamma/beta: (1, D).  Biased variance (PyTorch default).
    mean = jnp.mean(y, axis=-1, keepdims=True)
    var = jnp.mean(jnp.square(y - mean), axis=-1, keepdims=True)
    return (y - mean) * jax.lax.rsqrt(var + eps) * gamma + beta


def _mha_ln(q, k, v, bias, wo, bo, residual, gamma, beta, num_head):
    """Multi-head attention + output projection + residual + LayerNorm.

    q: (Sq, D) f32, k/v: (Sk, D) f32, bias: (Sq, Sk) f32 additive mask,
    wo: (D, D) bf16, bo/gamma/beta: (1, D) f32, residual: (Sq, D) f32.
    Returns (Sq, D) f32.
    """
    Sq, D = q.shape
    Dh = D // num_head
    scale = jnp.float32(1.0 / math.sqrt(Dh))
    q16 = (q * scale).astype(jnp.bfloat16)        # fold 1/sqrt(Dh) into Q once
    k16 = k.astype(jnp.bfloat16)
    v16 = v.astype(jnp.bfloat16)

    heads = []
    for h in range(num_head):                     # static unroll over heads
        sl = slice(h * Dh, (h + 1) * Dh)
        # scores: contract head dims directly (no materialized k.T transpose)
        s = jax.lax.dot_general(q16[:, sl], k16[:, sl],
                                (((1,), (1,)), ((), ())),
                                preferred_element_type=jnp.float32)
        s = s + bias                              # additive mask, f32
        s = s - jnp.max(s, axis=-1, keepdims=True)
        p = jnp.exp(s)
        p = p * pl.reciprocal(jnp.sum(p, axis=-1, keepdims=True), approx=True)
        heads.append(jnp.dot(p.astype(jnp.bfloat16), v16[:, sl],
                             preferred_element_type=jnp.float32))

    o = jnp.concatenate(heads, axis=-1)           # (Sq, D) f32
    # ONE output projection matmul (K = D), not H small K = Dh matmuls.
    y = jnp.dot(o.astype(jnp.bfloat16), wo, preferred_element_type=jnp.float32)
    y = y + bo + residual
    return _layer_norm(y, gamma, beta)


# ----------------------------------------------------------------------------
# Fused whole-layer kernel (one grid step = one batch element)
# ----------------------------------------------------------------------------

def _decoder_layer_kernel(x_ref, enc_ref, sb_ref, cb_ref,
                          wqkv_ref, bqkv_ref, wo1_ref, bo1_ref, g1_ref, be1_ref,
                          wq2_ref, bq2_ref, wkv2_ref, bkv2_ref, wo2_ref,
                          bo2_ref, g2_ref, be2_ref,
                          wf1_ref, bf1_ref, wf2_ref, bf2_ref, g3_ref, be3_ref,
                          o_ref, *, num_head):
    f32 = jnp.float32
    bf16 = jnp.bfloat16

    x = x_ref[0].astype(f32)                                      # (Sq, D)
    enc = enc_ref[0].astype(f32)                                  # (Sk, D)
    D = x.shape[-1]

    # ---- masked self-attention + residual + LN1 (fused QKV projection) ----
    qkv = jnp.dot(x.astype(bf16), wqkv_ref[...],
                  preferred_element_type=f32) + bqkv_ref[...]     # (Sq, 3D)
    out1 = _mha_ln(qkv[:, :D], qkv[:, D:2 * D], qkv[:, 2 * D:],
                   sb_ref[0], wo1_ref[...], bo1_ref[...],
                   x, g1_ref[...], be1_ref[...], num_head)

    # ---- cross-attention + residual + LN2 (fused KV projection) ----
    q2 = jnp.dot(out1.astype(bf16), wq2_ref[...],
                 preferred_element_type=f32) + bq2_ref[...]       # (Sq, D)
    kv2 = jnp.dot(enc.astype(bf16), wkv2_ref[...],
                  preferred_element_type=f32) + bkv2_ref[...]     # (Sk, 2D)
    out2 = _mha_ln(q2, kv2[:, :D], kv2[:, D:],
                   cb_ref[0], wo2_ref[...], bo2_ref[...],
                   out1, g2_ref[...], be2_ref[...], num_head)

    # ---- position-wise FFN + residual + LN3 ----
    h = jnp.dot(out2.astype(bf16), wf1_ref[...],
                preferred_element_type=f32) + bf1_ref[...]        # (Sq, F)
    h = jnp.maximum(h, 0.0)                                       # ReLU, f32
    y = jnp.dot(h.astype(bf16), wf2_ref[...],
                preferred_element_type=f32) + bf2_ref[...]        # (Sq, D)

    o_ref[0] = _layer_norm(y + out2, g3_ref[...], be3_ref[...]).astype(o_ref.dtype)


# ----------------------------------------------------------------------------
# Wrapper: mask prep + single pallas_call for the whole decoder layer
# ----------------------------------------------------------------------------

def _prep_bias(mask, sq, sk):
    """(mB, 1, Sq|1, Sk) mask -> (mB, Sq, Sk) f32 additive bias (0 / -1e9)."""
    m_b = mask.shape[0]
    m = jnp.broadcast_to(mask, (m_b, 1, sq, sk)).reshape(m_b, sq, sk)
    return jnp.where(m == 0, jnp.float32(-1e9), jnp.float32(0.0))


def _bias_index_map(n_batch):
    if n_batch == 1:
        return lambda b: (0, 0, 0)      # shared mask block, reused across batch
    return lambda b: (b, 0, 0)


def decoder_layer(enc_output, src_mask, tgt, look_ahead_mask, params, num_head):
    B, Sq, D = tgt.shape
    Sk = enc_output.shape[1]
    F = params["ffn_w1"].shape[1]

    self_bias = _prep_bias(look_ahead_mask, Sq, Sq)
    cross_bias = _prep_bias(src_mask, Sq, Sk)
    assert self_bias.shape[0] in (1, B), "look_ahead_mask batch must be 1 or B"
    assert cross_bias.shape[0] in (1, B), "src_mask batch must be 1 or B"

    bf16 = jnp.bfloat16
    sa, ca = params["self_attn"], params["cross_attn"]
    row = lambda v: v.reshape(1, -1).astype(jnp.float32)

    def wspec(shape):       # constant-index weight block (VMEM-resident)
        return pl.BlockSpec(shape, lambda b: (0, 0))

    kernel = partial(_decoder_layer_kernel, num_head=num_head)

    return pl.pallas_call(
        kernel,
        out_shape=jax.ShapeDtypeStruct((B, Sq, D), tgt.dtype),
        grid=(B,),
        in_specs=[
            pl.BlockSpec((1, Sq, D), lambda b: (b, 0, 0)),                 # tgt
            pl.BlockSpec((1, Sk, D), lambda b: (b, 0, 0)),                 # enc
            pl.BlockSpec((1, Sq, Sq), _bias_index_map(self_bias.shape[0])),
            pl.BlockSpec((1, Sq, Sk), _bias_index_map(cross_bias.shape[0])),
            # self-attention weights
            wspec((D, 3 * D)), wspec((1, 3 * D)),
            wspec((D, D)), wspec((1, D)), wspec((1, D)), wspec((1, D)),
            # cross-attention weights
            wspec((D, D)), wspec((1, D)),
            wspec((D, 2 * D)), wspec((1, 2 * D)),
            wspec((D, D)), wspec((1, D)), wspec((1, D)), wspec((1, D)),
            # FFN weights
            wspec((D, F)), wspec((1, F)),
            wspec((F, D)), wspec((1, D)), wspec((1, D)), wspec((1, D)),
        ],
        out_specs=pl.BlockSpec((1, Sq, D), lambda b: (b, 0, 0)),
        compiler_params=pltpu.CompilerParams(
            dimension_semantics=("parallel",),        # 2 steps -> 2 TCs on v7x
            vmem_limit_bytes=64 * 1024 * 1024),
    )(
        tgt, enc_output, self_bias, cross_bias,
        sa["wqkv"].astype(bf16), row(sa["bqkv"]),
        sa["wo"].astype(bf16), row(sa["bo"]),
        row(params["ln1_g"]), row(params["ln1_b"]),
        ca["wq"].astype(bf16), row(ca["bq"]),
        ca["wkv"].astype(bf16), row(ca["bkv"]),
        ca["wo"].astype(bf16), row(ca["bo"]),
        row(params["ln2_g"]), row(params["ln2_b"]),
        params["ffn_w1"].astype(bf16), row(params["ffn_b1"]),
        params["ffn_w2"].astype(bf16), row(params["ffn_b2"]),
        row(params["ln3_g"]), row(params["ln3_b"]),
    )


# ----------------------------------------------------------------------------
# Deterministic parameter init (PyTorch nn.Linear-style uniform init)
# ----------------------------------------------------------------------------

def init_params(key, dim_model, d_ffn):
    def dense(k, fan_in, fan_out):
        kw, kb = jax.random.split(k)
        lim = 1.0 / math.sqrt(fan_in)
        w = jax.random.uniform(kw, (fan_in, fan_out), jnp.float32, -lim, lim)
        b = jax.random.uniform(kb, (fan_out,), jnp.float32, -lim, lim)
        return w, b

    keys = jax.random.split(key, 10)

    # self-attention: fused (D, 3D) QKV projection
    wq, bq = dense(keys[0], dim_model, dim_model)
    wk, bk = dense(keys[1], dim_model, dim_model)
    wv, bv = dense(keys[2], dim_model, dim_model)
    wo, bo = dense(keys[3], dim_model, dim_model)
    self_attn = dict(wqkv=jnp.concatenate([wq, wk, wv], axis=1),
                     bqkv=jnp.concatenate([bq, bk, bv]),
                     wo=wo, bo=bo)

    # cross-attention: Q from decoder state, fused (D, 2D) KV from encoder
    wq2, bq2 = dense(keys[4], dim_model, dim_model)
    wk2, bk2 = dense(keys[5], dim_model, dim_model)
    wv2, bv2 = dense(keys[6], dim_model, dim_model)
    wo2, bo2 = dense(keys[7], dim_model, dim_model)
    cross_attn = dict(wq=wq2, bq=bq2,
                      wkv=jnp.concatenate([wk2, wv2], axis=1),
                      bkv=jnp.concatenate([bk2, bv2]),
                      wo=wo2, bo=bo2)

    w1, b1 = dense(keys[8], dim_model, d_ffn)
    w2, b2 = dense(keys[9], d_ffn, dim_model)

    return dict(
        self_attn=self_attn,
        cross_attn=cross_attn,
        ffn_w1=w1, ffn_b1=b1, ffn_w2=w2, ffn_b2=b2,
        ln1_g=jnp.ones((dim_model,), jnp.float32),
        ln1_b=jnp.zeros((dim_model,), jnp.float32),
        ln2_g=jnp.ones((dim_model,), jnp.float32),
        ln2_b=jnp.zeros((dim_model,), jnp.float32),
        ln3_g=jnp.ones((dim_model,), jnp.float32),
        ln3_b=jnp.zeros((dim_model,), jnp.float32),
    )


# ----------------------------------------------------------------------------
# Main
# ----------------------------------------------------------------------------

if __name__ == "__main__":
    # dim_model = 128 keeps the output store lane-dense (last dim = 128) and
    # all big contraction dims 128-aligned (review items 4/5).
    B, S_tgt, S_src = 2, 8, 8
    num_head, dim_model, d_ffn = 4, 128, 256

    key = jax.random.PRNGKey(0)
    k_enc, k_tgt, k_par = jax.random.split(key, 3)

    enc_output = jax.random.normal(k_enc, (B, S_src, dim_model), jnp.float32)
    tgt = jax.random.normal(k_tgt, (B, S_tgt, dim_model), jnp.float32)

    # masks: 1 = keep, 0 = masked-out (PyTorch: masked_fill(mask == 0, -1e9))
    look_ahead_mask = jnp.tril(jnp.ones((S_tgt, S_tgt), jnp.float32))[None, None]
    src_mask = jnp.ones((1, 1, 1, S_src), jnp.float32)

    params = init_params(k_par, dim_model, d_ffn)

    fwd = jax.jit(partial(decoder_layer, num_head=num_head))
    out = fwd(enc_output, src_mask, tgt, look_ahead_mask, params)
    jax.block_until_ready(out)

    assert out.shape == (B, S_tgt, dim_model)
    assert bool(jnp.all(jnp.isfinite(out)))
    print("KERNEL_OK")
</pallas_src>

<mosaic_0001>
module attributes {stable_mosaic.version = 11 : i64} {
  func.func @_decoder_layer_kernel(%arg0: i32, %arg1: memref<1x8x128xf32, #tpu.memory_space<vmem>>, %arg2: memref<1x8x128xf32, #tpu.memory_space<vmem>>, %arg3: memref<1x8x8xf32, #tpu.memory_space<vmem>>, %arg4: memref<1x8x8xf32, #tpu.memory_space<vmem>>, %arg5: memref<128x384xbf16, #tpu.memory_space<vmem>>, %arg6: memref<1x384xf32, #tpu.memory_space<vmem>>, %arg7: memref<128x128xbf16, #tpu.memory_space<vmem>>, %arg8: memref<1x128xf32, #tpu.memory_space<vmem>>, %arg9: memref<1x128xf32, #tpu.memory_space<vmem>>, %arg10: memref<1x128xf32, #tpu.memory_space<vmem>>, %arg11: memref<128x128xbf16, #tpu.memory_space<vmem>>, %arg12: memref<1x128xf32, #tpu.memory_space<vmem>>, %arg13: memref<128x256xbf16, #tpu.memory_space<vmem>>, %arg14: memref<1x256xf32, #tpu.memory_space<vmem>>, %arg15: memref<128x128xbf16, #tpu.memory_space<vmem>>, %arg16: memref<1x128xf32, #tpu.memory_space<vmem>>, %arg17: memref<1x128xf32, #tpu.memory_space<vmem>>, %arg18: memref<1x128xf32, #tpu.memory_space<vmem>>, %arg19: memref<128x256xbf16, #tpu.memory_space<vmem>>, %arg20: memref<1x256xf32, #tpu.memory_space<vmem>>, %arg21: memref<256x128xbf16, #tpu.memory_space<vmem>>, %arg22: memref<1x128xf32, #tpu.memory_space<vmem>>, %arg23: memref<1x128xf32, #tpu.memory_space<vmem>>, %arg24: memref<1x128xf32, #tpu.memory_space<vmem>>, %arg25: memref<1x8x128xf32, #tpu.memory_space<vmem>>) attributes {dimension_semantics = [#tpu.dimension_semantics<parallel>], iteration_bounds = array<i64: 2>, scalar_prefetch = 0 : i64, scratch_operands = 0 : i64, tpu.core_type = #tpu.core_type<tc>, window_params = [{transform_indices = @transform_0, window_bounds = array<i64: 1, 8, 128>}, {transform_indices = @transform_1, window_bounds = array<i64: 1, 8, 128>}, {pipeline_mode = #tpu.pipeline_mode<synchronous>, transform_indices = @transform_2, window_bounds = array<i64: 1, 8, 8>}, {pipeline_mode = #tpu.pipeline_mode<synchronous>, transform_indices = @transform_3, window_bounds = array<i64: 1, 8, 8>}, {pipeline_mode = #tpu.pipeline_mode<synchronous>, transform_indices = @transform_4, window_bounds = array<i64: 128, 384>}, {pipeline_mode = #tpu.pipeline_mode<synchronous>, transform_indices = @transform_5, window_bounds = array<i64: 1, 384>}, {pipeline_mode = #tpu.pipeline_mode<synchronous>, transform_indices = @transform_6, window_bounds = array<i64: 128, 128>}, {pipeline_mode = #tpu.pipeline_mode<synchronous>, transform_indices = @transform_7, window_bounds = array<i64: 1, 128>}, {pipeline_mode = #tpu.pipeline_mode<synchronous>, transform_indices = @transform_8, window_bounds = array<i64: 1, 128>}, {pipeline_mode = #tpu.pipeline_mode<synchronous>, transform_indices = @transform_9, window_bounds = array<i64: 1, 128>}, {pipeline_mode = #tpu.pipeline_mode<synchronous>, transform_indices = @transform_10, window_bounds = array<i64: 128, 128>}, {pipeline_mode = #tpu.pipeline_mode<synchronous>, transform_indices = @transform_11, window_bounds = array<i64: 1, 128>}, {pipeline_mode = #tpu.pipeline_mode<synchronous>, transform_indices = @transform_12, window_bounds = array<i64: 128, 256>}, {pipeline_mode = #tpu.pipeline_mode<synchronous>, transform_indices = @transform_13, window_bounds = array<i64: 1, 256>}, {pipeline_mode = #tpu.pipeline_mode<synchronous>, transform_indices = @transform_14, window_bounds = array<i64: 128, 128>}, {pipeline_mode = #tpu.pipeline_mode<synchronous>, transform_indices = @transform_15, window_bounds = array<i64: 1, 128>}, {pipeline_mode = #tpu.pipeline_mode<synchronous>, transform_indices = @transform_16, window_bounds = array<i64: 1, 128>}, {pipeline_mode = #tpu.pipeline_mode<synchronous>, transform_indices = @transform_17, window_bounds = array<i64: 1, 128>}, {pipeline_mode = #tpu.pipeline_mode<synchronous>, transform_indices = @transform_18, window_bounds = array<i64: 128, 256>}, {pipeline_mode = #tpu.pipeline_mode<synchronous>, transform_indices = @transform_19, window_bounds = array<i64: 1, 256>}, {pipeline_mode = #tpu.pipeline_mode<synchronous>, transform_indices = @transform_20, window_bounds = array<i64: 256, 128>}, {pipeline_mode = #tpu.pipeline_mode<synchronous>, transform_indices = @transform_21, window_bounds = array<i64: 1, 128>}, {pipeline_mode = #tpu.pipeline_mode<synchronous>, transform_indices = @transform_22, window_bounds = array<i64: 1, 128>}, {pipeline_mode = #tpu.pipeline_mode<synchronous>, transform_indices = @transform_23, window_bounds = array<i64: 1, 128>}, {transform_indices = @transform_24, window_bounds = array<i64: 1, 8, 128>}]} {
    %c0 = arith.constant 0 : index
    %c0_0 = arith.constant 0 : index
    %c0_1 = arith.constant 0 : index
    %0 = vector.load %arg1[%c0, %c0_0, %c0_1] : memref<1x8x128xf32, #tpu.memory_space<vmem>>, vector<1x8x128xf32>
    %1 = vector.shape_cast %0 : vector<1x8x128xf32> to vector<8x128xf32>
    %c0_2 = arith.constant 0 : index
    %c0_3 = arith.constant 0 : index
    %c0_4 = arith.constant 0 : index
    %2 = vector.load %arg2[%c0_2, %c0_3, %c0_4] : memref<1x8x128xf32, #tpu.memory_space<vmem>>, vector<1x8x128xf32>
    %3 = vector.shape_cast %2 : vector<1x8x128xf32> to vector<8x128xf32>
    %4 = arith.truncf %1 : vector<8x128xf32> to vector<8x128xbf16>
    %c0_5 = arith.constant 0 : index
    %c0_6 = arith.constant 0 : index
    %5 = vector.load %arg5[%c0_5, %c0_6] : memref<128x384xbf16, #tpu.memory_space<vmem>>, vector<128x384xbf16>
    %cst = arith.constant dense<0.000000e+00> : vector<8x384xf32>
    %6 = tpu.matmul %4, %5, %cst {dimension_numbers = #tpu.dot_dimension_numbers<[1], [0], [0], [1], [0, 0, 1, 1], [], []>} : vector<8x128xbf16>, vector<128x384xbf16>, vector<8x384xf32> -> vector<8x384xf32>
    %c0_7 = arith.constant 0 : index
    %c0_8 = arith.constant 0 : index
    %7 = vector.load %arg6[%c0_7, %c0_8] : memref<1x384xf32, #tpu.memory_space<vmem>>, vector<1x384xf32>
    %8 = vector.broadcast %7 : vector<1x384xf32> to vector<8x384xf32>
    %9 = arith.addf %6, %8 : vector<8x384xf32>
    %10 = vector.extract_strided_slice %9 {offsets = [0, 0], sizes = [8, 128], strides = [1, 1]} : vector<8x384xf32> to vector<8x128xf32>
    %11 = vector.extract_strided_slice %9 {offsets = [0, 128], sizes = [8, 128], strides = [1, 1]} : vector<8x384xf32> to vector<8x128xf32>
    %12 = vector.extract_strided_slice %9 {offsets = [0, 256], sizes = [8, 128], strides = [1, 1]} : vector<8x384xf32> to vector<8x128xf32>
    %c0_9 = arith.constant 0 : index
    %c0_10 = arith.constant 0 : index
    %c0_11 = arith.constant 0 : index
    %13 = vector.load %arg3[%c0_9, %c0_10, %c0_11] : memref<1x8x8xf32, #tpu.memory_space<vmem>>, vector<1x8x8xf32>
    %14 = vector.shape_cast %13 : vector<1x8x8xf32> to vector<8x8xf32>
    %c0_12 = arith.constant 0 : index
    %c0_13 = arith.constant 0 : index
    %15 = vector.load %arg7[%c0_12, %c0_13] : memref<128x128xbf16, #tpu.memory_space<vmem>>, vector<128x128xbf16>
    %c0_14 = arith.constant 0 : index
    %c0_15 = arith.constant 0 : index
    %16 = vector.load %arg8[%c0_14, %c0_15] : memref<1x128xf32, #tpu.memory_space<vmem>>, vector<1x128xf32>
    %c0_16 = arith.constant 0 : index
    %c0_17 = arith.constant 0 : index
    %17 = vector.load %arg9[%c0_16, %c0_17] : memref<1x128xf32, #tpu.memory_space<vmem>>, vector<1x128xf32>
    %c0_18 = arith.constant 0 : index
    %c0_19 = arith.constant 0 : index
    %18 = vector.load %arg10[%c0_18, %c0_19] : memref<1x128xf32, #tpu.memory_space<vmem>>, vector<1x128xf32>
    %cst_20 = arith.constant 0.176776692 : f32
    %19 = vector.broadcast %cst_20 : f32 to vector<8x128xf32>
    %20 = arith.mulf %10, %19 : vector<8x128xf32>
    %21 = arith.truncf %20 : vector<8x128xf32> to vector<8x128xbf16>
    %22 = arith.truncf %11 : vector<8x128xf32> to vector<8x128xbf16>
    %23 = arith.truncf %12 : vector<8x128xf32> to vector<8x128xbf16>
    %24 = vector.extract_strided_slice %21 {offsets = [0, 0], sizes = [8, 32], strides = [1, 1]} : vector<8x128xbf16> to vector<8x32xbf16>
    %25 = vector.extract_strided_slice %22 {offsets = [0, 0], sizes = [8, 32], strides = [1, 1]} : vector<8x128xbf16> to vector<8x32xbf16>
    %cst_21 = arith.constant dense<0.000000e+00> : vector<8x8xf32>
    %26 = tpu.matmul %24, %25, %cst_21 {dimension_numbers = #tpu.dot_dimension_numbers<[1], [1], [0], [0], [0, 0, 1, 0], [], []>} : vector<8x32xbf16>, vector<8x32xbf16>, vector<8x8xf32> -> vector<8x8xf32>
    %27 = arith.addf %26, %14 : vector<8x8xf32>
    %cst_22 = arith.constant dense<0xFF800000> : vector<8xf32>
    %28 = vector.multi_reduction <maximumf>, %27, %cst_22 [1] : vector<8x8xf32> to vector<8xf32>
    %29 = vector.shape_cast %28 : vector<8xf32> to vector<8x1xf32>
    %30 = vector.broadcast %29 : vector<8x1xf32> to vector<8x8xf32>
    %31 = arith.subf %27, %30 : vector<8x8xf32>
    %32 = math.exp %31 : vector<8x8xf32>
    %cst_23 = arith.constant dense<0.000000e+00> : vector<8xf32>
    %33 = vector.multi_reduction <add>, %32, %cst_23 [1] : vector<8x8xf32> to vector<8xf32>
    %34 = vector.shape_cast %33 : vector<8xf32> to vector<8x1xf32>
    %35 = tpu.reciprocal %34 {approx = true} : vector<8x1xf32> -> vector<8x1xf32>
    %36 = vector.broadcast %35 : vector<8x1xf32> to vector<8x8xf32>
    %37 = arith.mulf %32, %36 : vector<8x8xf32>
    %38 = arith.truncf %37 : vector<8x8xf32> to vector<8x8xbf16>
    %39 = vector.extract_strided_slice %23 {offsets = [0, 0], sizes = [8, 32], strides = [1, 1]} : vector<8x128xbf16> to vector<8x32xbf16>
    %cst_24 = arith.constant dense<0.000000e+00> : vector<8x32xf32>
    %40 = tpu.matmul %38, %39, %cst_24 {dimension_numbers = #tpu.dot_dimension_numbers<[1], [0], [0], [1], [0, 0, 1, 1], [], []>} : vector<8x8xbf16>, vector<8x32xbf16>, vector<8x32xf32> -> vector<8x32xf32>
    %41 = vector.extract_strided_slice %21 {offsets = [0, 32], sizes = [8, 32], strides = [1, 1]} : vector<8x128xbf16> to vector<8x32xbf16>
    %42 = vector.extract_strided_slice %22 {offsets = [0, 32], sizes = [8, 32], strides = [1, 1]} : vector<8x128xbf16> to vector<8x32xbf16>
    %cst_25 = arith.constant dense<0.000000e+00> : vector<8x8xf32>
    %43 = tpu.matmul %41, %42, %cst_25 {dimension_numbers = #tpu.dot_dimension_numbers<[1], [1], [0], [0], [0, 0, 1, 0], [], []>} : vector<8x32xbf16>, vector<8x32xbf16>, vector<8x8xf32> -> vector<8x8xf32>
    %44 = arith.addf %43, %14 : vector<8x8xf32>
    %cst_26 = arith.constant dense<0xFF800000> : vector<8xf32>
    %45 = vector.multi_reduction <maximumf>, %44, %cst_26 [1] : vector<8x8xf32> to vector<8xf32>
    %46 = vector.shape_cast %45 : vector<8xf32> to vector<8x1xf32>
    %47 = vector.broadcast %46 : vector<8x1xf32> to vector<8x8xf32>
    %48 = arith.subf %44, %47 : vector<8x8xf32>
    %49 = math.exp %48 : vector<8x8xf32>
    %cst_27 = arith.constant dense<0.000000e+00> : vector<8xf32>
    %50 = vector.multi_reduction <add>, %49, %cst_27 [1] : vector<8x8xf32> to vector<8xf32>
    %51 = vector.shape_cast %50 : vector<8xf32> to vector<8x1xf32>
    %52 = tpu.reciprocal %51 {approx = true} : vector<8x1xf32> -> vector<8x1xf32>
    %53 = vector.broadcast %52 : vector<8x1xf32> to vector<8x8xf32>
    %54 = arith.mulf %49, %53 : vector<8x8xf32>
    %55 = arith.truncf %54 : vector<8x8xf32> to vector<8x8xbf16>
    %56 = vector.extract_strided_slice %23 {offsets = [0, 32], sizes = [8, 32], strides = [1, 1]} : vector<8x128xbf16> to vector<8x32xbf16>
    %cst_28 = arith.constant dense<0.000000e+00> : vector<8x32xf32>
    %57 = tpu.matmul %55, %56, %cst_28 {dimension_numbers = #tpu.dot_dimension_numbers<[1], [0], [0], [1], [0, 0, 1, 1], [], []>} : vector<8x8xbf16>, vector<8x32xbf16>, vector<8x32xf32> -> vector<8x32xf32>
    %58 = vector.extract_strided_slice %21 {offsets = [0, 64], sizes = [8, 32], strides = [1, 1]} : vector<8x128xbf16> to vector<8x32xbf16>
    %59 = vector.extract_strided_slice %22 {offsets = [0, 64], sizes = [8, 32], strides = [1, 1]} : vector<8x128xbf16> to vector<8x32xbf16>
    %cst_29 = arith.constant dense<0.000000e+00> : vector<8x8xf32>
    %60 = tpu.matmul %58, %59, %cst_29 {dimension_numbers = #tpu.dot_dimension_numbers<[1], [1], [0], [0], [0, 0, 1, 0], [], []>} : vector<8x32xbf16>, vector<8x32xbf16>, vector<8x8xf32> -> vector<8x8xf32>
    %61 = arith.addf %60, %14 : vector<8x8xf32>
    %cst_30 = arith.constant dense<0xFF800000> : vector<8xf32>
    %62 = vector.multi_reduction <maximumf>, %61, %cst_30 [1] : vector<8x8xf32> to vector<8xf32>
    %63 = vector.shape_cast %62 : vector<8xf32> to vector<8x1xf32>
    %64 = vector.broadcast %63 : vector<8x1xf32> to vector<8x8xf32>
    %65 = arith.subf %61, %64 : vector<8x8xf32>
    %66 = math.exp %65 : vector<8x8xf32>
    %cst_31 = arith.constant dense<0.000000e+00> : vector<8xf32>
    %67 = vector.multi_reduction <add>, %66, %cst_31 [1] : vector<8x8xf32> to vector<8xf32>
    %68 = vector.shape_cast %67 : vector<8xf32> to vector<8x1xf32>
    %69 = tpu.reciprocal %68 {approx = true} : vector<8x1xf32> -> vector<8x1xf32>
    %70 = vector.broadcast %69 : vector<8x1xf32> to vector<8x8xf32>
    %71 = arith.mulf %66, %70 : vector<8x8xf32>
    %72 = arith.truncf %71 : vector<8x8xf32> to vector<8x8xbf16>
    %73 = vector.extract_strided_slice %23 {offsets = [0, 64], sizes = [8, 32], strides = [1, 1]} : vector<8x128xbf16> to vector<8x32xbf16>
    %cst_32 = arith.constant dense<0.000000e+00> : vector<8x32xf32>
    %74 = tpu.matmul %72, %73, %cst_32 {dimension_numbers = #tpu.dot_dimension_numbers<[1], [0], [0], [1], [0, 0, 1, 1], [], []>} : vector<8x8xbf16>, vector<8x32xbf16>, vector<8x32xf32> -> vector<8x32xf32>
    %75 = vector.extract_strided_slice %21 {offsets = [0, 96], sizes = [8, 32], strides = [1, 1]} : vector<8x128xbf16> to vector<8x32xbf16>
    %76 = vector.extract_strided_slice %22 {offsets = [0, 96], sizes = [8, 32], strides = [1, 1]} : vector<8x128xbf16> to vector<8x32xbf16>
    %cst_33 = arith.constant dense<0.000000e+00> : vector<8x8xf32>
    %77 = tpu.matmul %75, %76, %cst_33 {dimension_numbers = #tpu.dot_dimension_numbers<[1], [1], [0], [0], [0, 0, 1, 0], [], []>} : vector<8x32xbf16>, vector<8x32xbf16>, vector<8x8xf32> -> vector<8x8xf32>
    %78 = arith.addf %77, %14 : vector<8x8xf32>
    %cst_34 = arith.constant dense<0xFF800000> : vector<8xf32>
    %79 = vector.multi_reduction <maximumf>, %78, %cst_34 [1] : vector<8x8xf32> to vector<8xf32>
    %80 = vector.shape_cast %79 : vector<8xf32> to vector<8x1xf32>
    %81 = vector.broadcast %80 : vector<8x1xf32> to vector<8x8xf32>
    %82 = arith.subf %78, %81 : vector<8x8xf32>
    %83 = math.exp %82 : vector<8x8xf32>
    %cst_35 = arith.constant dense<0.000000e+00> : vector<8xf32>
    %84 = vector.multi_reduction <add>, %83, %cst_35 [1] : vector<8x8xf32> to vector<8xf32>
    %85 = vector.shape_cast %84 : vector<8xf32> to vector<8x1xf32>
    %86 = tpu.reciprocal %85 {approx = true} : vector<8x1xf32> -> vector<8x1xf32>
    %87 = vector.broadcast %86 : vector<8x1xf32> to vector<8x8xf32>
    %88 = arith.mulf %83, %87 : vector<8x8xf32>
    %89 = arith.truncf %88 : vector<8x8xf32> to vector<8x8xbf16>
    %90 = vector.extract_strided_slice %23 {offsets = [0, 96], sizes = [8, 32], strides = [1, 1]} : vector<8x128xbf16> to vector<8x32xbf16>
    %cst_36 = arith.constant dense<0.000000e+00> : vector<8x32xf32>
    %91 = tpu.matmul %89, %90, %cst_36 {dimension_numbers = #tpu.dot_dimension_numbers<[1], [0], [0], [1], [0, 0, 1, 1], [], []>} : vector<8x8xbf16>, vector<8x32xbf16>, vector<8x32xf32> -> vector<8x32xf32>
    %92 = tpu.concatenate %40, %57, %74, %91 in 1 : vector<8x32xf32>, vector<8x32xf32>, vector<8x32xf32>, vector<8x32xf32> -> vector<8x128xf32>
    %93 = arith.truncf %92 : vector<8x128xf32> to vector<8x128xbf16>
    %cst_37 = arith.constant dense<0.000000e+00> : vector<8x128xf32>
    %94 = tpu.matmul %93, %15, %cst_37 {dimension_numbers = #tpu.dot_dimension_numbers<[1], [0], [0], [1], [0, 0, 1, 1], [], []>} : vector<8x128xbf16>, vector<128x128xbf16>, vector<8x128xf32> -> vector<8x128xf32>
    %95 = vector.broadcast %16 : vector<1x128xf32> to vector<8x128xf32>
    %96 = arith.addf %94, %95 : vector<8x128xf32>
    %97 = arith.addf %96, %1 : vector<8x128xf32>
    %cst_38 = arith.constant dense<0.000000e+00> : vector<8xf32>
    %98 = vector.multi_reduction <add>, %97, %cst_38 [1] : vector<8x128xf32> to vector<8xf32>
    %99 = vector.shape_cast %98 : vector<8xf32> to vector<8x1xf32>
    %cst_39 = arith.constant 1.280000e+02 : f32
    %100 = vector.broadcast %cst_39 : f32 to vector<8x1xf32>
    %101 = arith.divf %99, %100 : vector<8x1xf32>
    %102 = vector.broadcast %101 : vector<8x1xf32> to vector<8x128xf32>
    %103 = arith.subf %97, %102 : vector<8x128xf32>
    %104 = arith.mulf %103, %103 : vector<8x128xf32>
    %cst_40 = arith.constant dense<0.000000e+00> : vector<8xf32>
    %105 = vector.multi_reduction <add>, %104, %cst_40 [1] : vector<8x128xf32> to vector<8xf32>
    %106 = vector.shape_cast %105 : vector<8xf32> to vector<8x1xf32>
    %cst_41 = arith.constant 1.280000e+02 : f32
    %107 = vector.broadcast %cst_41 : f32 to vector<8x1xf32>
    %108 = arith.divf %106, %107 : vector<8x1xf32>
    %109 = vector.broadcast %101 : vector<8x1xf32> to vector<8x128xf32>
    %110 = arith.subf %97, %109 : vector<8x128xf32>
    %cst_42 = arith.constant 9.99999974E-6 : f32
    %111 = vector.broadcast %cst_42 : f32 to vector<8x1xf32>
    %112 = arith.addf %108, %111 : vector<8x1xf32>
    %113 = math.rsqrt %112 : vector<8x1xf32>
    %114 = vector.broadcast %113 : vector<8x1xf32> to vector<8x128xf32>
    %115 = arith.mulf %110, %114 : vector<8x128xf32>
    %116 = vector.broadcast %17 : vector<1x128xf32> to vector<8x128xf32>
    %117 = arith.mulf %115, %116 : vector<8x128xf32>
    %118 = vector.broadcast %18 : vector<1x128xf32> to vector<8x128xf32>
    %119 = arith.addf %117, %118 : vector<8x128xf32>
    %120 = arith.truncf %119 : vector<8x128xf32> to vector<8x128xbf16>
    %c0_43 = arith.constant 0 : index
    %c0_44 = arith.constant 0 : index
    %121 = vector.load %arg11[%c0_43, %c0_44] : memref<128x128xbf16, #tpu.memory_space<vmem>>, vector<128x128xbf16>
    %cst_45 = arith.constant dense<0.000000e+00> : vector<8x128xf32>
    %122 = tpu.matmul %120, %121, %cst_45 {dimension_numbers = #tpu.dot_dimension_numbers<[1], [0], [0], [1], [0, 0, 1, 1], [], []>} : vector<8x128xbf16>, vector<128x128xbf16>, vector<8x128xf32> -> vector<8x128xf32>
    %c0_46 = arith.constant 0 : index
    %c0_47 = arith.constant 0 : index
    %123 = vector.load %arg12[%c0_46, %c0_47] : memref<1x128xf32, #tpu.memory_space<vmem>>, vector<1x128xf32>
    %124 = vector.broadcast %123 : vector<1x128xf32> to vector<8x128xf32>
    %125 = arith.addf %122, %124 : vector<8x128xf32>
    %126 = arith.truncf %3 : vector<8x128xf32> to vector<8x128xbf16>
    %c0_48 = arith.constant 0 : index
    %c0_49 = arith.constant 0 : index
    %127 = vector.load %arg13[%c0_48, %c0_49] : memref<128x256xbf16, #tpu.memory_space<vmem>>, vector<128x256xbf16>
    %cst_50 = arith.constant dense<0.000000e+00> : vector<8x256xf32>
    %128 = tpu.matmul %126, %127, %cst_50 {dimension_numbers = #tpu.dot_dimension_numbers<[1], [0], [0], [1], [0, 0, 1, 1], [], []>} : vector<8x128xbf16>, vector<128x256xbf16>, vector<8x256xf32> -> vector<8x256xf32>
    %c0_51 = arith.constant 0 : index
    %c0_52 = arith.constant 0 : index
    %129 = vector.load %arg14[%c0_51, %c0_52] : memref<1x256xf32, #tpu.memory_space<vmem>>, vector<1x256xf32>
    %130 = vector.broadcast %129 : vector<1x256xf32> to vector<8x256xf32>
    %131 = arith.addf %128, %130 : vector<8x256xf32>
    %132 = vector.extract_strided_slice %131 {offsets = [0, 0], sizes = [8, 128], strides = [1, 1]} : vector<8x256xf32> to vector<8x128xf32>
    %133 = vector.extract_strided_slice %131 {offsets = [0, 128], sizes = [8, 128], strides = [1, 1]} : vector<8x256xf32> to vector<8x128xf32>
    %c0_53 = arith.constant 0 : index
    %c0_54 = arith.constant 0 : index
    %c0_55 = arith.constant 0 : index
    %134 = vector.load %arg4[%c0_53, %c0_54, %c0_55] : memref<1x8x8xf32, #tpu.memory_space<vmem>>, vector<1x8x8xf32>
    %135 = vector.shape_cast %134 : vector<1x8x8xf32> to vector<8x8xf32>
    %c0_56 = arith.constant 0 : index
    %c0_57 = arith.constant 0 : index
    %136 = vector.load %arg15[%c0_56, %c0_57] : memref<128x128xbf16, #tpu.memory_space<vmem>>, vector<128x128xbf16>
    %c0_58 = arith.constant 0 : index
    %c0_59 = arith.constant 0 : index
    %137 = vector.load %arg16[%c0_58, %c0_59] : memref<1x128xf32, #tpu.memory_space<vmem>>, vector<1x128xf32>
    %c0_60 = arith.constant 0 : index
    %c0_61 = arith.constant 0 : index
    %138 = vector.load %arg17[%c0_60, %c0_61] : memref<1x128xf32, #tpu.memory_space<vmem>>, vector<1x128xf32>
    %c0_62 = arith.constant 0 : index
    %c0_63 = arith.constant 0 : index
    %139 = vector.load %arg18[%c0_62, %c0_63] : memref<1x128xf32, #tpu.memory_space<vmem>>, vector<1x128xf32>
    %cst_64 = arith.constant 0.176776692 : f32
    %140 = vector.broadcast %cst_64 : f32 to vector<8x128xf32>
    %141 = arith.mulf %125, %140 : vector<8x128xf32>
    %142 = arith.truncf %141 : vector<8x128xf32> to vector<8x128xbf16>
    %143 = arith.truncf %132 : vector<8x128xf32> to vector<8x128xbf16>
    %144 = arith.truncf %133 : vector<8x128xf32> to vector<8x128xbf16>
    %145 = vector.extract_strided_slice %142 {offsets = [0, 0], sizes = [8, 32], strides = [1, 1]} : vector<8x128xbf16> to vector<8x32xbf16>
    %146 = vector.extract_strided_slice %143 {offsets = [0, 0], sizes = [8, 32], strides = [1, 1]} : vector<8x128xbf16> to vector<8x32xbf16>
    %cst_65 = arith.constant dense<0.000000e+00> : vector<8x8xf32>
    %147 = tpu.matmul %145, %146, %cst_65 {dimension_numbers = #tpu.dot_dimension_numbers<[1], [1], [0], [0], [0, 0, 1, 0], [], []>} : vector<8x32xbf16>, vector<8x32xbf16>, vector<8x8xf32> -> vector<8x8xf32>
    %148 = arith.addf %147, %135 : vector<8x8xf32>
    %cst_66 = arith.constant dense<0xFF800000> : vector<8xf32>
    %149 = vector.multi_reduction <maximumf>, %148, %cst_66 [1] : vector<8x8xf32> to vector<8xf32>
    %150 = vector.shape_cast %149 : vector<8xf32> to vector<8x1xf32>
    %151 = vector.broadcast %150 : vector<8x1xf32> to vector<8x8xf32>
    %152 = arith.subf %148, %151 : vector<8x8xf32>
    %153 = math.exp %152 : vector<8x8xf32>
    %cst_67 = arith.constant dense<0.000000e+00> : vector<8xf32>
    %154 = vector.multi_reduction <add>, %153, %cst_67 [1] : vector<8x8xf32> to vector<8xf32>
    %155 = vector.shape_cast %154 : vector<8xf32> to vector<8x1xf32>
    %156 = tpu.reciprocal %155 {approx = true} : vector<8x1xf32> -> vector<8x1xf32>
    %157 = vector.broadcast %156 : vector<8x1xf32> to vector<8x8xf32>
    %158 = arith.mulf %153, %157 : vector<8x8xf32>
    %159 = arith.truncf %158 : vector<8x8xf32> to vector<8x8xbf16>
    %160 = vector.extract_strided_slice %144 {offsets = [0, 0], sizes = [8, 32], strides = [1, 1]} : vector<8x128xbf16> to vector<8x32xbf16>
    %cst_68 = arith.constant dense<0.000000e+00> : vector<8x32xf32>
    %161 = tpu.matmul %159, %160, %cst_68 {dimension_numbers = #tpu.dot_dimension_numbers<[1], [0], [0], [1], [0, 0, 1, 1], [], []>} : vector<8x8xbf16>, vector<8x32xbf16>, vector<8x32xf32> -> vector<8x32xf32>
    %162 = vector.extract_strided_slice %142 {offsets = [0, 32], sizes = [8, 32], strides = [1, 1]} : vector<8x128xbf16> to vector<8x32xbf16>
    %163 = vector.extract_strided_slice %143 {offsets = [0, 32], sizes = [8, 32], strides = [1, 1]} : vector<8x128xbf16> to vector<8x32xbf16>
    %cst_69 = arith.constant dense<0.000000e+00> : vector<8x8xf32>
    %164 = tpu.matmul %162, %163, %cst_69 {dimension_numbers = #tpu.dot_dimension_numbers<[1], [1], [0], [0], [0, 0, 1, 0], [], []>} : vector<8x32xbf16>, vector<8x32xbf16>, vector<8x8xf32> -> vector<8x8xf32>
    %165 = arith.addf %164, %135 : vector<8x8xf32>
    %cst_70 = arith.constant dense<0xFF800000> : vector<8xf32>
    %166 = vector.multi_reduction <maximumf>, %165, %cst_70 [1] : vector<8x8xf32> to vector<8xf32>
    %167 = vector.shape_cast %166 : vector<8xf32> to vector<8x1xf32>
    %168 = vector.broadcast %167 : vector<8x1xf32> to vector<8x8xf32>
    %169 = arith.subf %165, %168 : vector<8x8xf32>
    %170 = math.exp %169 : vector<8x8xf32>
    %cst_71 = arith.constant dense<0.000000e+00> : vector<8xf32>
    %171 = vector.multi_reduction <add>, %170, %cst_71 [1] : vector<8x8xf32> to vector<8xf32>
    %172 = vector.shape_cast %171 : vector<8xf32> to vector<8x1xf32>
    %173 = tpu.reciprocal %172 {approx = true} : vector<8x1xf32> -> vector<8x1xf32>
    %174 = vector.broadcast %173 : vector<8x1xf32> to vector<8x8xf32>
    %175 = arith.mulf %170, %174 : vector<8x8xf32>
    %176 = arith.truncf %175 : vector<8x8xf32> to vector<8x8xbf16>
    %177 = vector.extract_strided_slice %144 {offsets = [0, 32], sizes = [8, 32], strides = [1, 1]} : vector<8x128xbf16> to vector<8x32xbf16>
    %cst_72 = arith.constant dense<0.000000e+00> : vector<8x32xf32>
    %178 = tpu.matmul %176, %177, %cst_72 {dimension_numbers = #tpu.dot_dimension_numbers<[1], [0], [0], [1], [0, 0, 1, 1], [], []>} : vector<8x8xbf16>, vector<8x32xbf16>, vector<8x32xf32> -> vector<8x32xf32>
    %179 = vector.extract_strided_slice %142 {offsets = [0, 64], sizes = [8, 32], strides = [1, 1]} : vector<8x128xbf16> to vector<8x32xbf16>
    %180 = vector.extract_strided_slice %143 {offsets = [0, 64], sizes = [8, 32], strides = [1, 1]} : vector<8x128xbf16> to vector<8x32xbf16>
    %cst_73 = arith.constant dense<0.000000e+00> : vector<8x8xf32>
    %181 = tpu.matmul %179, %180, %cst_73 {dimension_numbers = #tpu.dot_dimension_numbers<[1], [1], [0], [0], [0, 0, 1, 0], [], []>} : vector<8x32xbf16>, vector<8x32xbf16>, vector<8x8xf32> -> vector<8x8xf32>
    %182 = arith.addf %181, %135 : vector<8x8xf32>
    %cst_74 = arith.constant dense<0xFF800000> : vector<8xf32>
    %183 = vector.multi_reduction <maximumf>, %182, %cst_74 [1] : vector<8x8xf32> to vector<8xf32>
    %184 = vector.shape_cast %183 : vector<8xf32> to vector<8x1xf32>
    %185 = vector.broadcast %184 : vector<8x1xf32> to vector<8x8xf32>
    %186 = arith.subf %182, %185 : vector<8x8xf32>
    %187 = math.exp %186 : vector<8x8xf32>
    %cst_75 = arith.constant dense<0.000000e+00> : vector<8xf32>
    %188 = vector.multi_reduction <add>, %187, %cst_75 [1] : vector<8x8xf32> to vector<8xf32>
    %189 = vector.shape_cast %188 : vector<8xf32> to vector<8x1xf32>
    %190 = tpu.reciprocal %189 {approx = true} : vector<8x1xf32> -> vector<8x1xf32>
    %191 = vector.broadcast %190 : vector<8x1xf32> to vector<8x8xf32>
    %192 = arith.mulf %187, %191 : vector<8x8xf32>
    %193 = arith.truncf %192 : vector<8x8xf32> to vector<8x8xbf16>
    %194 = vector.extract_strided_slice %144 {offsets = [0, 64], sizes = [8, 32], strides = [1, 1]} : vector<8x128xbf16> to vector<8x32xbf16>
    %cst_76 = arith.constant dense<0.000000e+00> : vector<8x32xf32>
    %195 = tpu.matmul %193, %194, %cst_76 {dimension_numbers = #tpu.dot_dimension_numbers<[1], [0], [0], [1], [0, 0, 1, 1], [], []>} : vector<8x8xbf16>, vector<8x32xbf16>, vector<8x32xf32> -> vector<8x32xf32>
    %196 = vector.extract_strided_slice %142 {offsets = [0, 96], sizes = [8, 32], strides = [1, 1]} : vector<8x128xbf16> to vector<8x32xbf16>
    %197 = vector.extract_strided_slice %143 {offsets = [0, 96], sizes = [8, 32], strides = [1, 1]} : vector<8x128xbf16> to vector<8x32xbf16>
    %cst_77 = arith.constant dense<0.000000e+00> : vector<8x8xf32>
    %198 = tpu.matmul %196, %197, %cst_77 {dimension_numbers = #tpu.dot_dimension_numbers<[1], [1], [0], [0], [0, 0, 1, 0], [], []>} : vector<8x32xbf16>, vector<8x32xbf16>, vector<8x8xf32> -> vector<8x8xf32>
    %199 = arith.addf %198, %135 : vector<8x8xf32>
    %cst_78 = arith.constant dense<0xFF800000> : vector<8xf32>
    %200 = vector.multi_reduction <maximumf>, %199, %cst_78 [1] : vector<8x8xf32> to vector<8xf32>
    %201 = vector.shape_cast %200 : vector<8xf32> to vector<8x1xf32>
    %202 = vector.broadcast %201 : vector<8x1xf32> to vector<8x8xf32>
    %203 = arith.subf %199, %202 : vector<8x8xf32>
    %204 = math.exp %203 : vector<8x8xf32>
    %cst_79 = arith.constant dense<0.000000e+00> : vector<8xf32>
    %205 = vector.multi_reduction <add>, %204, %cst_79 [1] : vector<8x8xf32> to vector<8xf32>
    %206 = vector.shape_cast %205 : vector<8xf32> to vector<8x1xf32>
    %207 = tpu.reciprocal %206 {approx = true} : vector<8x1xf32> -> vector<8x1xf32>
    %208 = vector.broadcast %207 : vector<8x1xf32> to vector<8x8xf32>
    %209 = arith.mulf %204, %208 : vector<8x8xf32>
    %210 = arith.truncf %209 : vector<8x8xf32> to vector<8x8xbf16>
    %211 = vector.extract_strided_slice %144 {offsets = [0, 96], sizes = [8, 32], strides = [1, 1]} : vector<8x128xbf16> to vector<8x32xbf16>
    %cst_80 = arith.constant dense<0.000000e+00> : vector<8x32xf32>
    %212 = tpu.matmul %210, %211, %cst_80 {dimension_numbers = #tpu.dot_dimension_numbers<[1], [0], [0], [1], [0, 0, 1, 1], [], []>} : vector<8x8xbf16>, vector<8x32xbf16>, vector<8x32xf32> -> vector<8x32xf32>
    %213 = tpu.concatenate %161, %178, %195, %212 in 1 : vector<8x32xf32>, vector<8x32xf32>, vector<8x32xf32>, vector<8x32xf32> -> vector<8x128xf32>
    %214 = arith.truncf %213 : vector<8x128xf32> to vector<8x128xbf16>
    %cst_81 = arith.constant dense<0.000000e+00> : vector<8x128xf32>
    %215 = tpu.matmul %214, %136, %cst_81 {dimension_numbers = #tpu.dot_dimension_numbers<[1], [0], [0], [1], [0, 0, 1, 1], [], []>} : vector<8x128xbf16>, vector<128x128xbf16>, vector<8x128xf32> -> vector<8x128xf32>
    %216 = vector.broadcast %137 : vector<1x128xf32> to vector<8x128xf32>
    %217 = arith.addf %215, %216 : vector<8x128xf32>
    %218 = arith.addf %217, %119 : vector<8x128xf32>
    %cst_82 = arith.constant dense<0.000000e+00> : vector<8xf32>
    %219 = vector.multi_reduction <add>, %218, %cst_82 [1] : vector<8x128xf32> to vector<8xf32>
    %220 = vector.shape_cast %219 : vector<8xf32> to vector<8x1xf32>
    %cst_83 = arith.constant 1.280000e+02 : f32
    %221 = vector.broadcast %cst_83 : f32 to vector<8x1xf32>
    %222 = arith.divf %220, %221 : vector<8x1xf32>
    %223 = vector.broadcast %222 : vector<8x1xf32> to vector<8x128xf32>
    %224 = arith.subf %218, %223 : vector<8x128xf32>
    %225 = arith.mulf %224, %224 : vector<8x128xf32>
    %cst_84 = arith.constant dense<0.000000e+00> : vector<8xf32>
    %226 = vector.multi_reduction <add>, %225, %cst_84 [1] : vector<8x128xf32> to vector<8xf32>
    %227 = vector.shape_cast %226 : vector<8xf32> to vector<8x1xf32>
    %cst_85 = arith.constant 1.280000e+02 : f32
    %228 = vector.broadcast %cst_85 : f32 to vector<8x1xf32>
    %229 = arith.divf %227, %228 : vector<8x1xf32>
    %230 = vector.broadcast %222 : vector<8x1xf32> to vector<8x128xf32>
    %231 = arith.subf %218, %230 : vector<8x128xf32>
    %cst_86 = arith.constant 9.99999974E-6 : f32
    %232 = vector.broadcast %cst_86 : f32 to vector<8x1xf32>
    %233 = arith.addf %229, %232 : vector<8x1xf32>
    %234 = math.rsqrt %233 : vector<8x1xf32>
    %235 = vector.broadcast %234 : vector<8x1xf32> to vector<8x128xf32>
    %236 = arith.mulf %231, %235 : vector<8x128xf32>
    %237 = vector.broadcast %138 : vector<1x128xf32> to vector<8x128xf32>
    %238 = arith.mulf %236, %237 : vector<8x128xf32>
    %239 = vector.broadcast %139 : vector<1x128xf32> to vector<8x128xf32>
    %240 = arith.addf %238, %239 : vector<8x128xf32>
    %241 = arith.truncf %240 : vector<8x128xf32> to vector<8x128xbf16>
    %c0_87 = arith.constant 0 : index
    %c0_88 = arith.constant 0 : index
    %242 = vector.load %arg19[%c0_87, %c0_88] : memref<128x256xbf16, #tpu.memory_space<vmem>>, vector<128x256xbf16>
    %cst_89 = arith.constant dense<0.000000e+00> : vector<8x256xf32>
    %243 = tpu.matmul %241, %242, %cst_89 {dimension_numbers = #tpu.dot_dimension_numbers<[1], [0], [0], [1], [0, 0, 1, 1], [], []>} : vector<8x128xbf16>, vector<128x256xbf16>, vector<8x256xf32> -> vector<8x256xf32>
    %c0_90 = arith.constant 0 : index
    %c0_91 = arith.constant 0 : index
    %244 = vector.load %arg20[%c0_90, %c0_91] : memref<1x256xf32, #tpu.memory_space<vmem>>, vector<1x256xf32>
    %245 = vector.broadcast %244 : vector<1x256xf32> to vector<8x256xf32>
    %246 = arith.addf %243, %245 : vector<8x256xf32>
    %cst_92 = arith.constant 0.000000e+00 : f32
    %247 = vector.broadcast %cst_92 : f32 to vector<8x256xf32>
    %248 = arith.maximumf %246, %247 : vector<8x256xf32>
    %249 = arith.truncf %248 : vector<8x256xf32> to vector<8x256xbf16>
    %c0_93 = arith.constant 0 : index
    %c0_94 = arith.constant 0 : index
    %250 = vector.load %arg21[%c0_93, %c0_94] : memref<256x128xbf16, #tpu.memory_space<vmem>>, vector<256x128xbf16>
    %cst_95 = arith.constant dense<0.000000e+00> : vector<8x128xf32>
    %251 = tpu.matmul %249, %250, %cst_95 {dimension_numbers = #tpu.dot_dimension_numbers<[1], [0], [0], [1], [0, 0, 1, 1], [], []>} : vector<8x256xbf16>, vector<256x128xbf16>, vector<8x128xf32> -> vector<8x128xf32>
    %c0_96 = arith.constant 0 : index
    %c0_97 = arith.constant 0 : index
    %252 = vector.load %arg22[%c0_96, %c0_97] : memref<1x128xf32, #tpu.memory_space<vmem>>, vector<1x128xf32>
    %253 = vector.broadcast %252 : vector<1x128xf32> to vector<8x128xf32>
    %254 = arith.addf %251, %253 : vector<8x128xf32>
    %255 = arith.addf %254, %240 : vector<8x128xf32>
    %c0_98 = arith.constant 0 : index
    %c0_99 = arith.constant 0 : index
    %256 = vector.load %arg23[%c0_98, %c0_99] : memref<1x128xf32, #tpu.memory_space<vmem>>, vector<1x128xf32>
    %c0_100 = arith.constant 0 : index
    %c0_101 = arith.constant 0 : index
    %257 = vector.load %arg24[%c0_100, %c0_101] : memref<1x128xf32, #tpu.memory_space<vmem>>, vector<1x128xf32>
    %cst_102 = arith.constant dense<0.000000e+00> : vector<8xf32>
    %258 = vector.multi_reduction <add>, %255, %cst_102 [1] : vector<8x128xf32> to vector<8xf32>
    %259 = vector.shape_cast %258 : vector<8xf32> to vector<8x1xf32>
    %cst_103 = arith.constant 1.280000e+02 : f32
    %260 = vector.broadcast %cst_103 : f32 to vector<8x1xf32>
    %261 = arith.divf %259, %260 : vector<8x1xf32>
    %262 = vector.broadcast %261 : vector<8x1xf32> to vector<8x128xf32>
    %263 = arith.subf %255, %262 : vector<8x128xf32>
    %264 = arith.mulf %263, %263 : vector<8x128xf32>
    %cst_104 = arith.constant dense<0.000000e+00> : vector<8xf32>
    %265 = vector.multi_reduction <add>, %264, %cst_104 [1] : vector<8x128xf32> to vector<8xf32>
    %266 = vector.shape_cast %265 : vector<8xf32> to vector<8x1xf32>
    %cst_105 = arith.constant 1.280000e+02 : f32
    %267 = vector.broadcast %cst_105 : f32 to vector<8x1xf32>
    %268 = arith.divf %266, %267 : vector<8x1xf32>
    %269 = vector.broadcast %261 : vector<8x1xf32> to vector<8x128xf32>
    %270 = arith.subf %255, %269 : vector<8x128xf32>
    %cst_106 = arith.constant 9.99999974E-6 : f32
    %271 = vector.broadcast %cst_106 : f32 to vector<8x1xf32>
    %272 = arith.addf %268, %271 : vector<8x1xf32>
    %273 = math.rsqrt %272 : vector<8x1xf32>
    %274 = vector.broadcast %273 : vector<8x1xf32> to vector<8x128xf32>
    %275 = arith.mulf %270, %274 : vector<8x128xf32>
    %276 = vector.broadcast %256 : vector<1x128xf32> to vector<8x128xf32>
    %277 = arith.mulf %275, %276 : vector<8x128xf32>
    %278 = vector.broadcast %257 : vector<1x128xf32> to vector<8x128xf32>
    %279 = arith.addf %277, %278 : vector<8x128xf32>
    %c0_107 = arith.constant 0 : index
    %c0_108 = arith.constant 0 : index
    %c0_109 = arith.constant 0 : index
    %280 = vector.load %arg25[%c0_107, %c0_108, %c0_109] : memref<1x8x128xf32, #tpu.memory_space<vmem>>, vector<1x8x128xf32>
    %281 = vector.shape_cast %280 : vector<1x8x128xf32> to vector<8x128xf32>
    %282 = vector.shape_cast %279 : vector<8x128xf32> to vector<1x8x128xf32>
    tpu.vector_store %arg25[%c0_107, %c0_108, %c0_109], %282 {strides = array<i32>} : memref<1x8x128xf32, #tpu.memory_space<vmem>>, vector<1x8x128xf32>,
    return
  }
  func.func @transform_0(%arg0: i32) -> (i32, i32, i32) {
    %c0_i32 = arith.constant 0 : i32
    %c0_i32_0 = arith.constant 0 : i32
    %c0_i32_1 = arith.constant 0 : i32
    return %arg0, %c0_i32, %c0_i32_0 : i32, i32, i32
  }
  func.func @transform_1(%arg0: i32) -> (i32, i32, i32) {
    %c0_i32 = arith.constant 0 : i32
    %c0_i32_0 = arith.constant 0 : i32
    %c0_i32_1 = arith.constant 0 : i32
    return %arg0, %c0_i32, %c0_i32_0 : i32, i32, i32
  }
  func.func @transform_2(%arg0: i32) -> (i32, i32, i32) {
    %c0_i32 = arith.constant 0 : i32
    %c0_i32_0 = arith.constant 0 : i32
    %c0_i32_1 = arith.constant 0 : i32
    %c0_i32_2 = arith.constant 0 : i32
    return %c0_i32, %c0_i32_0, %c0_i32_1 : i32, i32, i32
  }
  func.func @transform_3(%arg0: i32) -> (i32, i32, i32) {
    %c0_i32 = arith.constant 0 : i32
    %c0_i32_0 = arith.constant 0 : i32
    %c0_i32_1 = arith.constant 0 : i32
    %c0_i32_2 = arith.constant 0 : i32
    return %c0_i32, %c0_i32_0, %c0_i32_1 : i32, i32, i32
  }
  func.func @transform_4(%arg0: i32) -> (i32, i32) {
    %c0_i32 = arith.constant 0 : i32
    %c0_i32_0 = arith.constant 0 : i32
    %c0_i32_1 = arith.constant 0 : i32
    return %c0_i32, %c0_i32_0 : i32, i32
  }
  func.func @transform_5(%arg0: i32) -> (i32, i32) {
    %c0_i32 = arith.constant 0 : i32
    %c0_i32_0 = arith.constant 0 : i32
    %c0_i32_1 = arith.constant 0 : i32
    return %c0_i32, %c0_i32_0 : i32, i32
  }
  func.func @transform_6(%arg0: i32) -> (i32, i32) {
    %c0_i32 = arith.constant 0 : i32
    %c0_i32_0 = arith.constant 0 : i32
    %c0_i32_1 = arith.constant 0 : i32
    return %c0_i32, %c0_i32_0 : i32, i32
  }
  func.func @transform_7(%arg0: i32) -> (i32, i32) {
    %c0_i32 = arith.constant 0 : i32
    %c0_i32_0 = arith.constant 0 : i32
    %c0_i32_1 = arith.constant 0 : i32
    return %c0_i32, %c0_i32_0 : i32, i32
  }
  func.func @transform_8(%arg0: i32) -> (i32, i32) {
    %c0_i32 = arith.constant 0 : i32
    %c0_i32_0 = arith.constant 0 : i32
    %c0_i32_1 = arith.constant 0 : i32
    return %c0_i32, %c0_i32_0 : i32, i32
  }
  func.func @transform_9(%arg0: i32) -> (i32, i32) {
    %c0_i32 = arith.constant 0 : i32
    %c0_i32_0 = arith.constant 0 : i32
    %c0_i32_1 = arith.constant 0 : i32
    return %c0_i32, %c0_i32_0 : i32, i32
  }
  func.func @transform_10(%arg0: i32) -> (i32, i32) {
    %c0_i32 = arith.constant 0 : i32
    %c0_i32_0 = arith.constant 0 : i32
    %c0_i32_1 = arith.constant 0 : i32
    return %c0_i32, %c0_i32_0 : i32, i32
  }
  func.func @transform_11(%arg0: i32) -> (i32, i32) {
    %c0_i32 = arith.constant 0 : i32
    %c0_i32_0 = arith.constant 0 : i32
    %c0_i32_1 = arith.constant 0 : i32
    return %c0_i32, %c0_i32_0 : i32, i32
  }
  func.func @transform_12(%arg0: i32) -> (i32, i32) {
    %c0_i32 = arith.constant 0 : i32
    %c0_i32_0 = arith.constant 0 : i32
    %c0_i32_1 = arith.constant 0 : i32
    return %c0_i32, %c0_i32_0 : i32, i32
  }
  func.func @transform_13(%arg0: i32) -> (i32, i32) {
    %c0_i32 = arith.constant 0 : i32
    %c0_i32_0 = arith.constant 0 : i32
    %c0_i32_1 = arith.constant 0 : i32
    return %c0_i32, %c0_i32_0 : i32, i32
  }
  func.func @transform_14(%arg0: i32) -> (i32, i32) {
    %c0_i32 = arith.constant 0 : i32
    %c0_i32_0 = arith.constant 0 : i32
    %c0_i32_1 = arith.constant 0 : i32
    return %c0_i32, %c0_i32_0 : i32, i32
  }
  func.func @transform_15(%arg0: i32) -> (i32, i32) {
    %c0_i32 = arith.constant 0 : i32
    %c0_i32_0 = arith.constant 0 : i32
    %c0_i32_1 = arith.constant 0 : i32
    return %c0_i32, %c0_i32_0 : i32, i32
  }
  func.func @transform_16(%arg0: i32) -> (i32, i32) {
    %c0_i32 = arith.constant 0 : i32
    %c0_i32_0 = arith.constant 0 : i32
    %c0_i32_1 = arith.constant 0 : i32
    return %c0_i32, %c0_i32_0 : i32, i32
  }
  func.func @transform_17(%arg0: i32) -> (i32, i32) {
    %c0_i32 = arith.constant 0 : i32
    %c0_i32_0 = arith.constant 0 : i32
    %c0_i32_1 = arith.constant 0 : i32
    return %c0_i32, %c0_i32_0 : i32, i32
  }
  func.func @transform_18(%arg0: i32) -> (i32, i32) {
    %c0_i32 = arith.constant 0 : i32
    %c0_i32_0 = arith.constant 0 : i32
    %c0_i32_1 = arith.constant 0 : i32
    return %c0_i32, %c0_i32_0 : i32, i32
  }
  func.func @transform_19(%arg0: i32) -> (i32, i32) {
    %c0_i32 = arith.constant 0 : i32
    %c0_i32_0 = arith.constant 0 : i32
    %c0_i32_1 = arith.constant 0 : i32
    return %c0_i32, %c0_i32_0 : i32, i32
  }
  func.func @transform_20(%arg0: i32) -> (i32, i32) {
    %c0_i32 = arith.constant 0 : i32
    %c0_i32_0 = arith.constant 0 : i32
    %c0_i32_1 = arith.constant 0 : i32
    return %c0_i32, %c0_i32_0 : i32, i32
  }
  func.func @transform_21(%arg0: i32) -> (i32, i32) {
    %c0_i32 = arith.constant 0 : i32
    %c0_i32_0 = arith.constant 0 : i32
    %c0_i32_1 = arith.constant 0 : i32
    return %c0_i32, %c0_i32_0 : i32, i32
  }
  func.func @transform_22(%arg0: i32) -> (i32, i32) {
    %c0_i32 = arith.constant 0 : i32
    %c0_i32_0 = arith.constant 0 : i32
    %c0_i32_1 = arith.constant 0 : i32
    return %c0_i32, %c0_i32_0 : i32, i32
  }
  func.func @transform_23(%arg0: i32) -> (i32, i32) {
    %c0_i32 = arith.constant 0 : i32
    %c0_i32_0 = arith.constant 0 : i32
    %c0_i32_1 = arith.constant 0 : i32
    return %c0_i32, %c0_i32_0 : i32, i32
  }
  func.func @transform_24(%arg0: i32) -> (i32, i32, i32) {
    %c0_i32 = arith.constant 0 : i32
    %c0_i32_0 = arith.constant 0 : i32
    %c0_i32_1 = arith.constant 0 : i32
    return %arg0, %c0_i32, %c0_i32_0 : i32, i32, i32
  }
}

</mosaic_0001>

<llo_original>
// kernel: decoder_layer.1
$region0: #{decoder_layer.1}
  #allocation0 [shape = 'u32[]', space=smem, size = 0x4, offset = 0x4, fixed_abs, tag = 'smem constant byte address 0x4 - core index']
  #allocation1 [shape = 'u32[144,128]{1,0:T(1,128)}', space=vmem, size = 0x12000, scoped, tag = 'internal scratch']
  %s0 = inlined_call_operand.vmem [shape: f32[2,8,128], index: 0, kind: input, shape index: {}]
  %s1 = inlined_call_operand.vmem [shape: f32[2,8,128], index: 1, kind: input, shape index: {}]
  %s2 = inlined_call_operand.vmem [shape: f32[1,8,8], index: 2, kind: input, shape index: {}]
  %s3 = inlined_call_operand.vmem [shape: f32[1,8,8], index: 3, kind: input, shape index: {}]
  %s4 = inlined_call_operand.vmem [shape: bf16[128,384], index: 4, kind: input, shape index: {}]
  %s5 = inlined_call_operand.vmem [shape: f32[1,384], index: 5, kind: input, shape index: {}]
  %s6 = inlined_call_operand.vmem [shape: bf16[128,128], index: 6, kind: input, shape index: {}]
  %s7 = inlined_call_operand.vmem [shape: f32[1,128], index: 7, kind: input, shape index: {}]
  %s8 = inlined_call_operand.vmem [shape: f32[1,128], index: 8, kind: input, shape index: {}]
  %s9 = inlined_call_operand.vmem [shape: f32[1,128], index: 9, kind: input, shape index: {}]
  %s10 = inlined_call_operand.vmem [shape: bf16[128,128], index: 10, kind: input, shape index: {}]
  %s11 = inlined_call_operand.vmem [shape: f32[1,128], index: 11, kind: input, shape index: {}]
  %s12 = inlined_call_operand.vmem [shape: bf16[128,256], index: 12, kind: input, shape index: {}]
  %s13 = inlined_call_operand.vmem [shape: f32[1,256], index: 13, kind: input, shape index: {}]
  %s14 = inlined_call_operand.vmem [shape: bf16[128,128], index: 14, kind: input, shape index: {}]
  %s15 = inlined_call_operand.vmem [shape: f32[1,128], index: 15, kind: input, shape index: {}]
  %s16 = inlined_call_operand.vmem [shape: f32[1,128], index: 16, kind: input, shape index: {}]
  %s17 = inlined_call_operand.vmem [shape: f32[1,128], index: 17, kind: input, shape index: {}]
  %s18 = inlined_call_operand.vmem [shape: bf16[128,256], index: 18, kind: input, shape index: {}]
  %s19 = inlined_call_operand.vmem [shape: f32[1,256], index: 19, kind: input, shape index: {}]
  %s20 = inlined_call_operand.vmem [shape: bf16[256,128], index: 20, kind: input, shape index: {}]
  %s21 = inlined_call_operand.vmem [shape: f32[1,128], index: 21, kind: input, shape index: {}]
  %s22 = inlined_call_operand.vmem [shape: f32[1,128], index: 22, kind: input, shape index: {}]
  %s23 = inlined_call_operand.vmem [shape: f32[1,128], index: 23, kind: input, shape index: {}]
  %s24 = inlined_call_operand.hbm [shape: f32[2,8,128], index: 24, kind: output, shape index: {}]
  %s25 = sld [smem:[#allocation0]]
  $region129: #{decoder_layer.1} parent=0
    _
  %s27 = ssub.s32 1, %s25
  %s28 = scalar_select 0, %s27, %s25
  $region1: #{decoder_layer.1} parent=0
    #allocation2 [shape = 'u8[8192]{0}', space=vmem, size = 0x2000, scoped, tag = 'output window, operand 0']
    #allocation3 [shape = 's32[2]{0}', space=sflag, size = 0x8, scoped, tag = 'scoped memory for decoder_layer.1']
    %29 = vsyncpa [#allocation3], 0
    %s30 = scalar_lea.sflag [#allocation3], 1
    %31 = vsyncpa %s30, 0
    loop: start=0, step=1, limit=4
    $region2: #{decoder_layer.1} parent=1 // loop_pre_header
      _
    $region3: #{decoder_layer.1} parent=1 // loop_header
      %s33 = sphi 0, %s37
      %p34 = scmp.ge.s32.totalorder %s33, 4
      %s43 = sphi 0, %s45
      %s46 = sphi 0, %s43
      %s47 = sphi 0, %s46
      %s63 = sphi 0, %s47
      %s69 = sphi 0, %s71
      %s72 = sphi 0, %s69
      %s73 = sphi 0, %s72
      %s89 = sphi 0, %s73
      %s93 = sphi 0, %s93
      %s95 = sphi 0, %s93
      %s96 = sphi 0, %s95
      %s110 = sphi 0, %s96
      %s114 = sphi 0, %s114
      %s116 = sphi 0, %s114
      %s117 = sphi 0, %s116
      %s131 = sphi 0, %s117
      %s135 = sphi 0, %s135
      %s137 = sphi 0, %s135
      %s138 = sphi 0, %s137
      %s152 = sphi 0, %s138
      %s156 = sphi 0, %s156
      %s158 = sphi 0, %s156
      %s159 = sphi 0, %s158
      %s173 = sphi 0, %s159
      %s177 = sphi 0, %s177
      %s179 = sphi 0, %s177
      %s180 = sphi 0, %s179
      %s194 = sphi 0, %s180
      %s198 = sphi 0, %s198
      %s200 = sphi 0, %s198
      %s201 = sphi 0, %s200
      %s215 = sphi 0, %s201
      %s219 = sphi 0, %s219
      %s221 = sphi 0, %s219
      %s222 = sphi 0, %s221
      %s236 = sphi 0, %s222
      %s240 = sphi 0, %s240
      %s242 = sphi 0, %s240
      %s243 = sphi 0, %s242
      %s257 = sphi 0, %s243
      %s261 = sphi 0, %s261
      %s263 = sphi 0, %s261
      %s264 = sphi 0, %s263
      %s278 = sphi 0, %s264
      %s282 = sphi 0, %s282
      %s284 = sphi 0, %s282
      %s285 = sphi 0, %s284
      %s299 = sphi 0, %s285
      %s303 = sphi 0, %s303
      %s305 = sphi 0, %s303
      %s306 = sphi 0, %s305
      %s320 = sphi 0, %s306
      %s324 = sphi 0, %s324
      %s326 = sphi 0, %s324
      %s327 = sphi 0, %s326
      %s341 = sphi 0, %s327
      %s345 = sphi 0, %s345
      %s347 = sphi 0, %s345
      %s348 = sphi 0, %s347
      %s362 = sphi 0, %s348
      %s366 = sphi 0, %s366
      %s368 = sphi 0, %s366
      %s369 = sphi 0, %s368
      %s383 = sphi 0, %s369
      %s387 = sphi 0, %s387
      %s389 = sphi 0, %s387
      %s390 = sphi 0, %s389
      %s404 = sphi 0, %s390
      %s408 = sphi 0, %s408
      %s410 = sphi 0, %s408
      %s411 = sphi 0, %s410
      %s425 = sphi 0, %s411
      %s429 = sphi 0, %s429
      %s431 = sphi 0, %s429
      %s432 = sphi 0, %s431
      %s446 = sphi 0, %s432
      %s450 = sphi 0, %s450
      %s452 = sphi 0, %s450
      %s453 = sphi 0, %s452
      %s467 = sphi 0, %s453
      %s471 = sphi 0, %s471
      %s473 = sphi 0, %s471
      %s474 = sphi 0, %s473
      %s488 = sphi 0, %s474
      %s492 = sphi 0, %s492
      %s494 = sphi 0, %s492
      %s495 = sphi 0, %s494
      %s509 = sphi 0, %s495
      %s513 = sphi 0, %s513
      %s515 = sphi 0, %s513
      %s516 = sphi 0, %s515
      %s530 = sphi 0, %s516
      %s534 = sphi 0, %s534
      %s536 = sphi 0, %s534
      %s537 = sphi 0, %s536
      %s551 = sphi 0, %s537
      %s557 = sphi 0, %s559
      %s560 = sphi 0, %s557
      %s561 = sphi 0, %s560
      %s577 = sphi 0, %s561
    $region4: #{decoder_layer.1} parent=1 // loop_header_branch
      %36 = sbr.rel (%p34) target = $region8
    $region5: #{decoder_layer.1} parent=1 // loop_body
      %s38 = ssub.s32 %s33, 1
      %s39 = ssub.s32 %s33, 2
      %s40 = sadd.s32 %s33, 1
      %s41 = ssub.s32 %s33, %s40
      %p42 = scmp.eq.s32.totalorder %s41, 0
      %s44 = sadd.s32 %s43, 1
      %s45 = scalar_select %p42, %s43, %s44
      %p48 = pneg %p42
      %p49 = scmp.eq.s32.totalorder %s33, 1
      %p50 = por %p48, %p49
      %p51 = scmp.ne.s32.totalorder %s43, %s46
      %p52 = scmp.eq.s32.totalorder %s33, 0
      %p53 = por %p51, %p52
      %p54 = scmp.ne.s32.totalorder %s43, %s46
      %p55 = scmp.eq.s32.totalorder %s38, 1
      %p56 = por %p54, %p55
      %p57 = scmp.ne.s32.totalorder %s46, %s47
      %p58 = scmp.eq.s32.totalorder %s38, 0
      %p59 = por %p57, %p58
      %p60 = scmp.ne.s32.totalorder %s46, %s47
      %p61 = scmp.eq.s32.totalorder %s39, 1
      %p62 = por %p60, %p61
      %p64 = scmp.ne.s32.totalorder %s47, %s63
      %p65 = scmp.eq.s32.totalorder %s39, 0
      %p66 = por %p64, %p65
      %s67 = ssub.s32 %s33, %s40
      %p68 = scmp.eq.s32.totalorder %s67, 0
      %s70 = sadd.s32 %s69, 1
      %s71 = scalar_select %p68, %s69, %s70
      %p74 = pneg %p68
      %p75 = scmp.eq.s32.totalorder %s33, 1
      %p76 = por %p74, %p75
      %p77 = scmp.ne.s32.totalorder %s69, %s72
      %p78 = scmp.eq.s32.totalorder %s33, 0
      %p79 = por %p77, %p78
      %p80 = scmp.ne.s32.totalorder %s69, %s72
      %p81 = scmp.eq.s32.totalorder %s38, 1
      %p82 = por %p80, %p81
      %p83 = scmp.ne.s32.totalorder %s72, %s73
      %p84 = scmp.eq.s32.totalorder %s38, 0
      %p85 = por %p83, %p84
      %p86 = scmp.ne.s32.totalorder %s72, %s73
      %p87 = scmp.eq.s32.totalorder %s39, 1
      %p88 = por %p86, %p87
      %p90 = scmp.ne.s32.totalorder %s73, %s89
      %p91 = scmp.eq.s32.totalorder %s39, 0
      %p92 = por %p90, %p91
      %s94 = sadd.s32 %s93, 1
      %p97 = scmp.eq.s32.totalorder %s33, 1
      %p98 = scmp.ne.s32.totalorder %s93, %s95
      %p99 = scmp.eq.s32.totalorder %s33, 0
      %p100 = por %p98, %p99
      %p101 = scmp.ne.s32.totalorder %s93, %s95
      %p102 = scmp.eq.s32.totalorder %s38, 1
      %p103 = por %p101, %p102
      %p104 = scmp.ne.s32.totalorder %s95, %s96
      %p105 = scmp.eq.s32.totalorder %s38, 0
      %p106 = por %p104, %p105
      %p107 = scmp.ne.s32.totalorder %s95, %s96
      %p108 = scmp.eq.s32.totalorder %s39, 1
      %p109 = por %p107, %p108
      %p111 = scmp.ne.s32.totalorder %s96, %s110
      %p112 = scmp.eq.s32.totalorder %s39, 0
      %p113 = por %p111, %p112
      %s115 = sadd.s32 %s114, 1
      %p118 = scmp.eq.s32.totalorder %s33, 1
      %p119 = scmp.ne.s32.totalorder %s114, %s116
      %p120 = scmp.eq.s32.totalorder %s33, 0
      %p121 = por %p119, %p120
      %p122 = scmp.ne.s32.totalorder %s114, %s116
      %p123 = scmp.eq.s32.totalorder %s38, 1
      %p124 = por %p122, %p123
      %p125 = scmp.ne.s32.totalorder %s116, %s117
      %p126 = scmp.eq.s32.totalorder %s38, 0
      %p127 = por %p125, %p126
      %p128 = scmp.ne.s32.totalorder %s116, %s117
      %p129 = scmp.eq.s32.totalorder %s39, 1
      %p130 = por %p128, %p129
      %p132 = scmp.ne.s32.totalorder %s117, %s131
      %p133 = scmp.eq.s32.totalorder %s39, 0
      %p134 = por %p132, %p133
      %s136 = sadd.s32 %s135, 1
      %p139 = scmp.eq.s32.totalorder %s33, 1
      %p140 = scmp.ne.s32.totalorder %s135, %s137
      %p141 = scmp.eq.s32.totalorder %s33, 0
      %p142 = por %p140, %p141
      %p143 = scmp.ne.s32.totalorder %s135, %s137
      %p144 = scmp.eq.s32.totalorder %s38, 1
      %p145 = por %p143, %p144
      %p146 = scmp.ne.s32.totalorder %s137, %s138
      %p147 = scmp.eq.s32.totalorder %s38, 0
      %p148 = por %p146, %p147
      %p149 = scmp.ne.s32.totalorder %s137, %s138
      %p150 = scmp.eq.s32.totalorder %s39, 1
      %p151 = por %p149, %p150
      %p153 = scmp.ne.s32.totalorder %s138, %s152
      %p154 = scmp.eq.s32.totalorder %s39, 0
      %p155 = por %p153, %p154
      %s157 = sadd.s32 %s156, 1
      %p160 = scmp.eq.s32.totalorder %s33, 1
      %p161 = scmp.ne.s32.totalorder %s156, %s158
      %p162 = scmp.eq.s32.totalorder %s33, 0
      %p163 = por %p161, %p162
      %p164 = scmp.ne.s32.totalorder %s156, %s158
      %p165 = scmp.eq.s32.totalorder %s38, 1
      %p166 = por %p164, %p165
      %p167 = scmp.ne.s32.totalorder %s158, %s159
      %p168 = scmp.eq.s32.totalorder %s38, 0
      %p169 = por %p167, %p168
      %p170 = scmp.ne.s32.totalorder %s158, %s159
      %p171 = scmp.eq.s32.totalorder %s39, 1
      %p172 = por %p170, %p171
      %p174 = scmp.ne.s32.totalorder %s159, %s173
      %p175 = scmp.eq.s32.totalorder %s39, 0
      %p176 = por %p174, %p175
      %s178 = sadd.s32 %s177, 1
      %p181 = scmp.eq.s32.totalorder %s33, 1
      %p182 = scmp.ne.s32.totalorder %s177, %s179
      %p183 = scmp.eq.s32.totalorder %s33, 0
      %p184 = por %p182, %p183
      %p185 = scmp.ne.s32.totalorder %s177, %s179
      %p186 = scmp.eq.s32.totalorder %s38, 1
      %p187 = por %p185, %p186
      %p188 = scmp.ne.s32.totalorder %s179, %s180
      %p189 = scmp.eq.s32.totalorder %s38, 0
      %p190 = por %p188, %p189
      %p191 = scmp.ne.s32.totalorder %s179, %s180
      %p192 = scmp.eq.s32.totalorder %s39, 1
      %p193 = por %p191, %p192
      %p195 = scmp.ne.s32.totalorder %s180, %s194
      %p196 = scmp.eq.s32.totalorder %s39, 0
      %p197 = por %p195, %p196
      %s199 = sadd.s32 %s198, 1
      %p202 = scmp.eq.s32.totalorder %s33, 1
      %p203 = scmp.ne.s32.totalorder %s198, %s200
      %p204 = scmp.eq.s32.totalorder %s33, 0
      %p205 = por %p203, %p204
      %p206 = scmp.ne.s32.totalorder %s198, %s200
      %p207 = scmp.eq.s32.totalorder %s38, 1
      %p208 = por %p206, %p207
      %p209 = scmp.ne.s32.totalorder %s200, %s201
      %p210 = scmp.eq.s32.totalorder %s38, 0
      %p211 = por %p209, %p210
      %p212 = scmp.ne.s32.totalorder %s200, %s201
      %p213 = scmp.eq.s32.totalorder %s39, 1
      %p214 = por %p212, %p213
      %p216 = scmp.ne.s32.totalorder %s201, %s215
      %p217 = scmp.eq.s32.totalorder %s39, 0
      %p218 = por %p216, %p217
      %s220 = sadd.s32 %s219, 1
      %p223 = scmp.eq.s32.totalorder %s33, 1
      %p224 = scmp.ne.s32.totalorder %s219, %s221
      %p225 = scmp.eq.s32.totalorder %s33, 0
      %p226 = por %p224, %p225
      %p227 = scmp.ne.s32.totalorder %s219, %s221
      %p228 = scmp.eq.s32.totalorder %s38, 1
      %p229 = por %p227, %p228
      %p230 = scmp.ne.s32.totalorder %s221, %s222
      %p231 = scmp.eq.s32.totalorder %s38, 0
      %p232 = por %p230, %p231
      %p233 = scmp.ne.s32.totalorder %s221, %s222
      %p234 = scmp.eq.s32.totalorder %s39, 1
      %p235 = por %p233, %p234
      %p237 = scmp.ne.s32.totalorder %s222, %s236
      %p238 = scmp.eq.s32.totalorder %s39, 0
      %p239 = por %p237, %p238
      %s241 = sadd.s32 %s240, 1
      %p244 = scmp.eq.s32.totalorder %s33, 1
      %p245 = scmp.ne.s32.totalorder %s240, %s242
      %p246 = scmp.eq.s32.totalorder %s33, 0
      %p247 = por %p245, %p246
      %p248 = scmp.ne.s32.totalorder %s240, %s242
      %p249 = scmp.eq.s32.totalorder %s38, 1
      %p250 = por %p248, %p249
      %p251 = scmp.ne.s32.totalorder %s242, %s243
      %p252 = scmp.eq.s32.totalorder %s38, 0
      %p253 = por %p251, %p252
      %p254 = scmp.ne.s32.totalorder %s242, %s243
      %p255 = scmp.eq.s32.totalorder %s39, 1
      %p256 = por %p254, %p255
      %p258 = scmp.ne.s32.totalorder %s243, %s257
      %p259 = scmp.eq.s32.totalorder %s39, 0
      %p260 = por %p258, %p259
      %s262 = sadd.s32 %s261, 1
      %p265 = scmp.eq.s32.totalorder %s33, 1
      %p266 = scmp.ne.s32.totalorder %s261, %s263
      %p267 = scmp.eq.s32.totalorder %s33, 0
      %p268 = por %p266, %p267
      %p269 = scmp.ne.s32.totalorder %s261, %s263
      %p270 = scmp.eq.s32.totalorder %s38, 1
      %p271 = por %p269, %p270
      %p272 = scmp.ne.s32.totalorder %s263, %s264
      %p273 = scmp.eq.s32.totalorder %s38, 0
      %p274 = por %p272, %p273
      %p275 = scmp.ne.s32.totalorder %s263, %s264
      %p276 = scmp.eq.s32.totalorder %s39, 1
      %p277 = por %p275, %p276
      %p279 = scmp.ne.s32.totalorder %s264, %s278
      %p280 = scmp.eq.s32.totalorder %s39, 0
      %p281 = por %p279, %p280
      %s283 = sadd.s32 %s282, 1
      %p286 = scmp.eq.s32.totalorder %s33, 1
      %p287 = scmp.ne.s32.totalorder %s282, %s284
      %p288 = scmp.eq.s32.totalorder %s33, 0
      %p289 = por %p287, %p288
      %p290 = scmp.ne.s32.totalorder %s282, %s284
      %p291 = scmp.eq.s32.totalorder %s38, 1
      %p292 = por %p290, %p291
      %p293 = scmp.ne.s32.totalorder %s284, %s285
      %p294 = scmp.eq.s32.totalorder %s38, 0
      %p295 = por %p293, %p294
      %p296 = scmp.ne.s32.totalorder %s284, %s285
      %p297 = scmp.eq.s32.totalorder %s39, 1
      %p298 = por %p296, %p297
      %p300 = scmp.ne.s32.totalorder %s285, %s299
      %p301 = scmp.eq.s32.totalorder %s39, 0
      %p302 = por %p300, %p301
      %s304 = sadd.s32 %s303, 1
      %p307 = scmp.eq.s32.totalorder %s33, 1
      %p308 = scmp.ne.s32.totalorder %s303, %s305
      %p309 = scmp.eq.s32.totalorder %s33, 0
      %p310 = por %p308, %p309
      %p311 = scmp.ne.s32.totalorder %s303, %s305
      %p312 = scmp.eq.s32.totalorder %s38, 1
      %p313 = por %p311, %p312
      %p314 = scmp.ne.s32.totalorder %s305, %s306
      %p315 = scmp.eq.s32.totalorder %s38, 0
      %p316 = por %p314, %p315
      %p317 = scmp.ne.s32.totalorder %s305, %s306
      %p318 = scmp.eq.s32.totalorder %s39, 1
      %p319 = por %p317, %p318
      %p321 = scmp.ne.s32.totalorder %s306, %s320
      %p322 = scmp.eq.s32.totalorder %s39, 0
      %p323 = por %p321, %p322
      %s325 = sadd.s32 %s324, 1
      %p328 = scmp.eq.s32.totalorder %s33, 1
      %p329 = scmp.ne.s32.totalorder %s324, %s326
      %p330 = scmp.eq.s32.totalorder %s33, 0
      %p331 = por %p329, %p330
      %p332 = scmp.ne.s32.totalorder %s324, %s326
      %p333 = scmp.eq.s32.totalorder %s38, 1
      %p334 = por %p332, %p333
      %p335 = scmp.ne.s32.totalorder %s326, %s327
      %p336 = scmp.eq.s32.totalorder %s38, 0
      %p337 = por %p335, %p336
      %p338 = scmp.ne.s32.totalorder %s326, %s327
      %p339 = scmp.eq.s32.totalorder %s39, 1
      %p340 = por %p338, %p339
      %p342 = scmp.ne.s32.totalorder %s327, %s341
      %p343 = scmp.eq.s32.totalorder %s39, 0
      %p344 = por %p342, %p343
      %s346 = sadd.s32 %s345, 1
      %p349 = scmp.eq.s32.totalorder %s33, 1
      %p350 = scmp.ne.s32.totalorder %s345, %s347
      %p351 = scmp.eq.s32.totalorder %s33, 0
      %p352 = por %p350, %p351
      %p353 = scmp.ne.s32.totalorder %s345, %s347
      %p354 = scmp.eq.s32.totalorder %s38, 1
      %p355 = por %p353, %p354
      %p356 = scmp.ne.s32.totalorder %s347, %s348
      %p357 = scmp.eq.s32.totalorder %s38, 0
      %p358 = por %p356, %p357
      %p359 = scmp.ne.s32.totalorder %s347, %s348
      %p360 = scmp.eq.s32.totalorder %s39, 1
      %p361 = por %p359, %p360
      %p363 = scmp.ne.s32.totalorder %s348, %s362
      %p364 = scmp.eq.s32.totalorder %s39, 0
      %p365 = por %p363, %p364
      %s367 = sadd.s32 %s366, 1
      %p370 = scmp.eq.s32.totalorder %s33, 1
      %p371 = scmp.ne.s32.totalorder %s366, %s368
      %p372 = scmp.eq.s32.totalorder %s33, 0
      %p373 = por %p371, %p372
      %p374 = scmp.ne.s32.totalorder %s366, %s368
      %p375 = scmp.eq.s32.totalorder %s38, 1
      %p376 = por %p374, %p375
      %p377 = scmp.ne.s32.totalorder %s368, %s369
      %p378 = scmp.eq.s32.totalorder %s38, 0
      %p379 = por %p377, %p378
      %p380 = scmp.ne.s32.totalorder %s368, %s369
      %p381 = scmp.eq.s32.totalorder %s39, 1
      %p382 = por %p380, %p381
      %p384 = scmp.ne.s32.totalorder %s369, %s383
      %p385 = scmp.eq.s32.totalorder %s39, 0
      %p386 = por %p384, %p385
      %s388 = sadd.s32 %s387, 1
      %p391 = scmp.eq.s32.totalorder %s33, 1
      %p392 = scmp.ne.s32.totalorder %s387, %s389
      %p393 = scmp.eq.s32.totalorder %s33, 0
      %p394 = por %p392, %p393
      %p395 = scmp.ne.s32.totalorder %s387, %s389
      %p396 = scmp.eq.s32.totalorder %s38, 1
      %p397 = por %p395, %p396
      %p398 = scmp.ne.s32.totalorder %s389, %s390
      %p399 = scmp.eq.s32.totalorder %s38, 0
      %p400 = por %p398, %p399
      %p401 = scmp.ne.s32.totalorder %s389, %s390
      %p402 = scmp.eq.s32.totalorder %s39, 1
      %p403 = por %p401, %p402
      %p405 = scmp.ne.s32.totalorder %s390, %s404
      %p406 = scmp.eq.s32.totalorder %s39, 0
      %p407 = por %p405, %p406
      %s409 = sadd.s32 %s408, 1
      %p412 = scmp.eq.s32.totalorder %s33, 1
      %p413 = scmp.ne.s32.totalorder %s408, %s410
      %p414 = scmp.eq.s32.totalorder %s33, 0
      %p415 = por %p413, %p414
      %p416 = scmp.ne.s32.totalorder %s408, %s410
      %p417 = scmp.eq.s32.totalorder %s38, 1
      %p418 = por %p416, %p417
      %p419 = scmp.ne.s32.totalorder %s410, %s411
      %p420 = scmp.eq.s32.totalorder %s38, 0
      %p421 = por %p419, %p420
      %p422 = scmp.ne.s32.totalorder %s410, %s411
      %p423 = scmp.eq.s32.totalorder %s39, 1
      %p424 = por %p422, %p423
      %p426 = scmp.ne.s32.totalorder %s411, %s425
      %p427 = scmp.eq.s32.totalorder %s39, 0
      %p428 = por %p426, %p427
      %s430 = sadd.s32 %s429, 1
      %p433 = scmp.eq.s32.totalorder %s33, 1
      %p434 = scmp.ne.s32.totalorder %s429, %s431
      %p435 = scmp.eq.s32.totalorder %s33, 0
      %p436 = por %p434, %p435
      %p437 = scmp.ne.s32.totalorder %s429, %s431
      %p438 = scmp.eq.s32.totalorder %s38, 1
      %p439 = por %p437, %p438
      %p440 = scmp.ne.s32.totalorder %s431, %s432
      %p441 = scmp.eq.s32.totalorder %s38, 0
      %p442 = por %p440, %p441
      %p443 = scmp.ne.s32.totalorder %s431, %s432
      %p444 = scmp.eq.s32.totalorder %s39, 1
      %p445 = por %p443, %p444
      %p447 = scmp.ne.s32.totalorder %s432, %s446
      %p448 = scmp.eq.s32.totalorder %s39, 0
      %p449 = por %p447, %p448
      %s451 = sadd.s32 %s450, 1
      %p454 = scmp.eq.s32.totalorder %s33, 1
      %p455 = scmp.ne.s32.totalorder %s450, %s452
      %p456 = scmp.eq.s32.totalorder %s33, 0
      %p457 = por %p455, %p456
      %p458 = scmp.ne.s32.totalorder %s450, %s452
      %p459 = scmp.eq.s32.totalorder %s38, 1
      %p460 = por %p458, %p459
      %p461 = scmp.ne.s32.totalorder %s452, %s453
      %p462 = scmp.eq.s32.totalorder %s38, 0
      %p463 = por %p461, %p462
      %p464 = scmp.ne.s32.totalorder %s452, %s453
      %p465 = scmp.eq.s32.totalorder %s39, 1
      %p466 = por %p464, %p465
      %p468 = scmp.ne.s32.totalorder %s453, %s467
      %p469 = scmp.eq.s32.totalorder %s39, 0
      %p470 = por %p468, %p469
      %s472 = sadd.s32 %s471, 1
      %p475 = scmp.eq.s32.totalorder %s33, 1
      %p476 = scmp.ne.s32.totalorder %s471, %s473
      %p477 = scmp.eq.s32.totalorder %s33, 0
      %p478 = por %p476, %p477
      %p479 = scmp.ne.s32.totalorder %s471, %s473
      %p480 = scmp.eq.s32.totalorder %s38, 1
      %p481 = por %p479, %p480
      %p482 = scmp.ne.s32.totalorder %s473, %s474
      %p483 = scmp.eq.s32.totalorder %s38, 0
      %p484 = por %p482, %p483
      %p485 = scmp.ne.s32.totalorder %s473, %s474
      %p486 = scmp.eq.s32.totalorder %s39, 1
      %p487 = por %p485, %p486
      %p489 = scmp.ne.s32.totalorder %s474, %s488
      %p490 = scmp.eq.s32.totalorder %s39, 0
      %p491 = por %p489, %p490
      %s493 = sadd.s32 %s492, 1
      %p496 = scmp.eq.s32.totalorder %s33, 1
      %p497 = scmp.ne.s32.totalorder %s492, %s494
      %p498 = scmp.eq.s32.totalorder %s33, 0
      %p499 = por %p497, %p498
      %p500 = scmp.ne.s32.totalorder %s492, %s494
      %p501 = scmp.eq.s32.totalorder %s38, 1
      %p502 = por %p500, %p501
      %p503 = scmp.ne.s32.totalorder %s494, %s495
      %p504 = scmp.eq.s32.totalorder %s38, 0
      %p505 = por %p503, %p504
      %p506 = scmp.ne.s32.totalorder %s494, %s495
      %p507 = scmp.eq.s32.totalorder %s39, 1
      %p508 = por %p506, %p507
      %p510 = scmp.ne.s32.totalorder %s495, %s509
      %p511 = scmp.eq.s32.totalorder %s39, 0
      %p512 = por %p510, %p511
      %s514 = sadd.s32 %s513, 1
      %p517 = scmp.eq.s32.totalorder %s33, 1
      %p518 = scmp.ne.s32.totalorder %s513, %s515
      %p519 = scmp.eq.s32.totalorder %s33, 0
      %p520 = por %p518, %p519
      %p521 = scmp.ne.s32.totalorder %s513, %s515
      %p522 = scmp.eq.s32.totalorder %s38, 1
      %p523 = por %p521, %p522
      %p524 = scmp.ne.s32.totalorder %s515, %s516
      %p525 = scmp.eq.s32.totalorder %s38, 0
      %p526 = por %p524, %p525
      %p527 = scmp.ne.s32.totalorder %s515, %s516
      %p528 = scmp.eq.s32.totalorder %s39, 1
      %p529 = por %p527, %p528
      %p531 = scmp.ne.s32.totalorder %s516, %s530
      %p532 = scmp.eq.s32.totalorder %s39, 0
      %p533 = por %p531, %p532
      %s535 = sadd.s32 %s534, 1
      %p538 = scmp.eq.s32.totalorder %s33, 1
      %p539 = scmp.ne.s32.totalorder %s534, %s536
      %p540 = scmp.eq.s32.totalorder %s33, 0
      %p541 = por %p539, %p540
      %p542 = scmp.ne.s32.totalorder %s534, %s536
      %p543 = scmp.eq.s32.totalorder %s38, 1
      %p544 = por %p542, %p543
      %p545 = scmp.ne.s32.totalorder %s536, %s537
      %p546 = scmp.eq.s32.totalorder %s38, 0
      %p547 = por %p545, %p546
      %p548 = scmp.ne.s32.totalorder %s536, %s537
      %p549 = scmp.eq.s32.totalorder %s39, 1
      %p550 = por %p548, %p549
      %p552 = scmp.ne.s32.totalorder %s537, %s551
      %p553 = scmp.eq.s32.totalorder %s39, 0
      %p554 = por %p552, %p553
      %s555 = ssub.s32 %s33, %s40
      %p556 = scmp.eq.s32.totalorder %s555, 0
      %s558 = sadd.s32 %s557, 1
      %s559 = scalar_select %p556, %s557, %s558
      %p562 = pneg %p556
      %p563 = scmp.eq.s32.totalorder %s33, 1
      %p564 = por %p562, %p563
      %p565 = scmp.ne.s32.totalorder %s557, %s560
      %p566 = scmp.eq.s32.totalorder %s33, 0
      %p567 = por %p565, %p566
      %p568 = scmp.ne.s32.totalorder %s557, %s560
      %p569 = scmp.eq.s32.totalorder %s38, 1
      %p570 = por %p568, %p569
      %p571 = scmp.ne.s32.totalorder %s560, %s561
      %p572 = scmp.eq.s32.totalorder %s38, 0
      %p573 = por %p571, %p572
      %p574 = scmp.ne.s32.totalorder %s560, %s561
      %p575 = scmp.eq.s32.totalorder %s39, 1
      %p576 = por %p574, %p575
      %p578 = scmp.ne.s32.totalorder %s561, %s577
      %p579 = scmp.eq.s32.totalorder %s39, 0
      %p580 = por %p578, %p579
      %p581 = scmp.le.s32.totalorder 1, %s33
      %p582 = scmp.lt.s32.totalorder %s33, 3
      %p583 = pnand %p581, %p582
      %p584 = pneg %p583
      // Predicated region
      $region9: #{decoder_layer.1} parent=5 // pred_check
        _
      $region10: #{decoder_layer.1} parent=5 // pred_check_branch
        %586 = sbr.rel (%p583) target = $region12
      $region11: #{decoder_layer.1} parent=5 // pred_region
        %s587 = ssub.s32 %s33, 1
        // Predicated region
        $region13: #{decoder_layer.1} parent=11 // pred_check
          %p588 = pneg %p106
        $region14: #{decoder_layer.1} parent=11 // pred_check_branch
          %590 = sbr.rel (%p588) target = $region16
        $region15: #{decoder_layer.1} parent=11 // pred_region
          _
        $region16: #{decoder_layer.1} parent=11 // pred_fallthru
          _
        // Predicated region
        $region17: #{decoder_layer.1} parent=11 // pred_check
          %p591 = pneg %p127
        $region18: #{decoder_layer.1} parent=11 // pred_check_branch
          %593 = sbr.rel (%p591) target = $region20
        $region19: #{decoder_layer.1} parent=11 // pred_region
          _
        $region20: #{decoder_layer.1} parent=11 // pred_fallthru
          _
        // Predicated region
        $region21: #{decoder_layer.1} parent=11 // pred_check
          %p594 = pneg %p148
        $region22: #{decoder_layer.1} parent=11 // pred_check_branch
          %596 = sbr.rel (%p594) target = $region24
        $region23: #{decoder_layer.1} parent=11 // pred_region
          _
        $region24: #{decoder_layer.1} parent=11 // pred_fallthru
          _
        // Predicated region
        $region25: #{decoder_layer.1} parent=11 // pred_check
          %p597 = pneg %p169
        $region26: #{decoder_layer.1} parent=11 // pred_check_branch
          %599 = sbr.rel (%p597) target = $region28
        $region27: #{decoder_layer.1} parent=11 // pred_region
          _
        $region28: #{decoder_layer.1} parent=11 // pred_fallthru
          _
        // Predicated region
        $region29: #{decoder_layer.1} parent=11 // pred_check
          %p600 = pneg %p190
        $region30: #{decoder_layer.1} parent=11 // pred_check_branch
          %602 = sbr.rel (%p600) target = $region32
        $region31: #{decoder_layer.1} parent=11 // pred_region
          _
        $region32: #{decoder_layer.1} parent=11 // pred_fallthru
          _
        // Predicated region
        $region33: #{decoder_layer.1} parent=11 // pred_check
          %p603 = pneg %p211
        $region34: #{decoder_layer.1} parent=11 // pred_check_branch
          %605 = sbr.rel (%p603) target = $region36
        $region35: #{decoder_layer.1} parent=11 // pred_region
          _
        $region36: #{decoder_layer.1} parent=11 // pred_fallthru
          _
        // Predicated region
        $region37: #{decoder_layer.1} parent=11 // pred_check
          %p606 = pneg %p232
        $region38: #{decoder_layer.1} parent=11 // pred_check_branch
          %608 = sbr.rel (%p606) target = $region40
        $region39: #{decoder_layer.1} parent=11 // pred_region
          _
        $region40: #{decoder_layer.1} parent=11 // pred_fallthru
          _
        // Predicated region
        $region41: #{decoder_layer.1} parent=11 // pred_check
          %p609 = pneg %p253
        $region42: #{decoder_layer.1} parent=11 // pred_check_branch
          %611 = sbr.rel (%p609) target = $region44
        $region43: #{decoder_layer.1} parent=11 // pred_region
          _
        $region44: #{decoder_layer.1} parent=11 // pred_fallthru
          _
        // Predicated region
        $region45: #{decoder_layer.1} parent=11 // pred_check
          %p612 = pneg %p274
        $region46: #{decoder_layer.1} parent=11 // pred_check_branch
          %614 = sbr.rel (%p612) target = $region48
        $region47: #{decoder_layer.1} parent=11 // pred_region
          _
        $region48: #{decoder_layer.1} parent=11 // pred_fallthru
          _
        // Predicated region
        $region49: #{decoder_layer.1} parent=11 // pred_check
          %p615 = pneg %p295
        $region50: #{decoder_layer.1} parent=11 // pred_check_branch
          %617 = sbr.rel (%p615) target = $region52
        $region51: #{decoder_layer.1} parent=11 // pred_region
          _
        $region52: #{decoder_layer.1} parent=11 // pred_fallthru
          _
        // Predicated region
        $region53: #{decoder_layer.1} parent=11 // pred_check
          %p618 = pneg %p316
        $region54: #{decoder_layer.1} parent=11 // pred_check_branch
          %620 = sbr.rel (%p618) target = $region56
        $region55: #{decoder_layer.1} parent=11 // pred_region
          _
        $region56: #{decoder_layer.1} parent=11 // pred_fallthru
          _
        // Predicated region
        $region57: #{decoder_layer.1} parent=11 // pred_check
          %p621 = pneg %p337
        $region58: #{decoder_layer.1} parent=11 // pred_check_branch
          %623 = sbr.rel (%p621) target = $region60
        $region59: #{decoder_layer.1} parent=11 // pred_region
          _
        $region60: #{decoder_layer.1} parent=11 // pred_fallthru
          _
        // Predicated region
        $region61: #{decoder_layer.1} parent=11 // pred_check
          %p624 = pneg %p358
        $region62: #{decoder_layer.1} parent=11 // pred_check_branch
          %626 = sbr.rel (%p624) target = $region64
        $region63: #{decoder_layer.1} parent=11 // pred_region
          _
        $region64: #{decoder_layer.1} parent=11 // pred_fallthru
          _
        // Predicated region
        $region65: #{decoder_layer.1} parent=11 // pred_check
          %p627 = pneg %p379
        $region66: #{decoder_layer.1} parent=11 // pred_check_branch
          %629 = sbr.rel (%p627) target = $region68
        $region67: #{decoder_layer.1} parent=11 // pred_region
          _
        $region68: #{decoder_layer.1} parent=11 // pred_fallthru
          _
        // Predicated region
        $region69: #{decoder_layer.1} parent=11 // pred_check
          %p630 = pneg %p400
        $region70: #{decoder_layer.1} parent=11 // pred_check_branch
          %632 = sbr.rel (%p630) target = $region72
        $region71: #{decoder_layer.1} parent=11 // pred_region
          _
        $region72: #{decoder_layer.1} parent=11 // pred_fallthru
          _
        // Predicated region
        $region73: #{decoder_layer.1} parent=11 // pred_check
          %p633 = pneg %p421
        $region74: #{decoder_layer.1} parent=11 // pred_check_branch
          %635 = sbr.rel (%p633) target = $region76
        $region75: #{decoder_layer.1} parent=11 // pred_region
          _
        $region76: #{decoder_layer.1} parent=11 // pred_fallthru
          _
        // Predicated region
        $region77: #{decoder_layer.1} parent=11 // pred_check
          %p636 = pneg %p442
        $region78: #{decoder_layer.1} parent=11 // pred_check_branch
          %638 = sbr.rel (%p636) target = $region80
        $region79: #{decoder_layer.1} parent=11 // pred_region
          _
        $region80: #{decoder_layer.1} parent=11 // pred_fallthru
          _
        // Predicated region
        $region81: #{decoder_layer.1} parent=11 // pred_check
          %p639 = pneg %p463
        $region82: #{decoder_layer.1} parent=11 // pred_check_branch
          %641 = sbr.rel (%p639) target = $region84
        $region83: #{decoder_layer.1} parent=11 // pred_region
          _
        $region84: #{decoder_layer.1} parent=11 // pred_fallthru
          _
        // Predicated region
        $region85: #{decoder_layer.1} parent=11 // pred_check
          %p642 = pneg %p484
        $region86: #{decoder_layer.1} parent=11 // pred_check_branch
          %644 = sbr.rel (%p642) target = $region88
        $region87: #{decoder_layer.1} parent=11 // pred_region
          _
        $region88: #{decoder_layer.1} parent=11 // pred_fallthru
          _
        // Predicated region
        $region89: #{decoder_layer.1} parent=11 // pred_check
          %p645 = pneg %p505
        $region90: #{decoder_layer.1} parent=11 // pred_check_branch
          %647 = sbr.rel (%p645) target = $region92
        $region91: #{decoder_layer.1} parent=11 // pred_region
          _
        $region92: #{decoder_layer.1} parent=11 // pred_fallthru
          _
        // Predicated region
        $region93: #{decoder_layer.1} parent=11 // pred_check
          %p648 = pneg %p526
        $region94: #{decoder_layer.1} parent=11 // pred_check_branch
          %650 = sbr.rel (%p648) target = $region96
        $region95: #{decoder_layer.1} parent=11 // pred_region
          _
        $region96: #{decoder_layer.1} parent=11 // pred_fallthru
          _
        // Predicated region
        $region97: #{decoder_layer.1} parent=11 // pred_check
          %p651 = pneg %p547
        $region98: #{decoder_layer.1} parent=11 // pred_check_branch
          %653 = sbr.rel (%p651) target = $region100
        $region99: #{decoder_layer.1} parent=11 // pred_region
          _
        $region100: #{decoder_layer.1} parent=11 // pred_fallthru
          _
      $region12: #{decoder_layer.1} parent=5 // pred_fallthru
        _
      %p654 = scmp.lt.s32.totalorder %s33, 2
      // Predicated region
      $region101: #{decoder_layer.1} parent=5 // pred_check
        %p655 = pneg %p654
      $region102: #{decoder_layer.1} parent=5 // pred_check_branch
        %657 = sbr.rel (%p655) target = $region104
      $region103: #{decoder_layer.1} parent=5 // pred_region
        // Predicated region
        $region105: #{decoder_layer.1} parent=103 // pred_check
          %p658 = pneg %p53
        $region106: #{decoder_layer.1} parent=103 // pred_check_branch
          %660 = sbr.rel (%p658) target = $region108
        $region107: #{decoder_layer.1} parent=103 // pred_region
          %p661 = scmp.lt.s32.totalorder %s33, 1
          %s662 = scalar_select %p661, %s33, 1
          %s663 = smul.addr %s662, 8
          %s664 = scalar_lea.vmem %s0, %s663
        $region108: #{decoder_layer.1} parent=103 // pred_fallthru
          _
        // Predicated region
        $region109: #{decoder_layer.1} parent=103 // pred_check
          %p665 = pneg %p79
        $region110: #{decoder_layer.1} parent=103 // pred_check_branch
          %667 = sbr.rel (%p665) target = $region112
        $region111: #{decoder_layer.1} parent=103 // pred_region
          %p668 = scmp.lt.s32.totalorder %s33, 1
          %s669 = scalar_select %p668, %s33, 1
          %s670 = smul.addr %s669, 8
          %s671 = scalar_lea.vmem %s1, %s670
        $region112: #{decoder_layer.1} parent=103 // pred_fallthru
          _
      $region104: #{decoder_layer.1} parent=5 // pred_fallthru
        _
      %p672 = scmp.le.s32.totalorder 1, %s33
      %p673 = scmp.lt.s32.totalorder %s33, 3
      %p674 = pnand %p672, %p673
      %p675 = pneg %p674
      // Predicated region
      $region113: #{decoder_layer.1} parent=5 // pred_check
        _
      $region114: #{decoder_layer.1} parent=5 // pred_check_branch
        %677 = sbr.rel (%p674) target = $region116
      $region115: #{decoder_layer.1} parent=5 // pred_region
        %s678 = ssub.s32 %s33, 1
        %p679 = scmp.lt.s32.totalorder %s38, 1
        %s680 = scalar_select %p679, %s38, 1
        %s681 = smul.addr %s680, 8
        %s682 = scalar_lea.vmem %s0, %s681
        %p683 = pneg %p59
        %p684 = pneg %p56
        %p685 = scmp.lt.s32.totalorder %s38, 1
        %s686 = scalar_select %p685, %s38, 1
        %s687 = smul.addr %s686, 8
        %s688 = scalar_lea.vmem %s1, %s687
        %p689 = pneg %p85
        %p690 = pneg %p82
        %p691 = pneg %p106
        %p692 = pneg %p103
        %p693 = pneg %p127
        %p694 = pneg %p124
        %p695 = pneg %p148
        %p696 = pneg %p145
        %p697 = pneg %p169
        %p698 = pneg %p166
        %p699 = pneg %p190
        %p700 = pneg %p187
        %p701 = pneg %p211
        %p702 = pneg %p208
        %p703 = pneg %p232
        %p704 = pneg %p229
        %p705 = pneg %p253
        %p706 = pneg %p250
        %p707 = pneg %p274
        %p708 = pneg %p271
        %p709 = pneg %p295
        %p710 = pneg %p292
        %p711 = pneg %p316
        %p712 = pneg %p313
        %p713 = pneg %p337
        %p714 = pneg %p334
        %p715 = pneg %p358
        %p716 = pneg %p355
        %p717 = pneg %p379
        %p718 = pneg %p376
        %p719 = pneg %p400
        %p720 = pneg %p397
        %p721 = pneg %p421
        %p722 = pneg %p418
        %p723 = pneg %p442
        %p724 = pneg %p439
        %p725 = pneg %p463
        %p726 = pneg %p460
        %p727 = pneg %p484
        %p728 = pneg %p481
        %p729 = pneg %p505
        %p730 = pneg %p502
        %p731 = pneg %p526
        %p732 = pneg %p523
        %p733 = pneg %p547
        %p734 = pneg %p544
        %p735 = pneg %p573
        %p736 = pneg %p570
        %s737 = sand.u32 %s560, 1
        %s738 = scalar_lea.sflag [#allocation3], %s737
        %s739 = sand.u32 %s560, 1
        %s740 = smul.addr %s739, 8
        %s741 = scalar_lea.vmem [#allocation2], %s740
        %p742 = scmp.lt.s32.totalorder %s38, 1
        %s743 = scalar_select %p742, %s38, 1
        %s744 = smul.addr %s743, 8
        %s745 = scalar_lea.vmem %s0, %s744
        %p746 = scmp.lt.s32.totalorder %s38, 1
        %s747 = scalar_select %p746, %s38, 1
        %s748 = smul.addr %s747, 8
        %s749 = scalar_lea.vmem %s1, %s748
        %v751 = vld [vmem:[%s745] sm:$0xff]
        %v752 = vld [vmem:[%s749] sm:$0xff]
        %v753 = vpack.c.bf16 %v751, %v751
        %v754 = vld [vmem:[%s4] sm:$0xff]
        %v755 = vld [vmem:[%s4 + $0x8] sm:$0xf]
        %v756 = vld [vmem:[%s4 + $0xc] sm:$0xff]
        %v757 = vld [vmem:[%s4 + $0x14] sm:$0xf]
        %v758 = vld [vmem:[%s4 + $0x18] sm:$0xff]
        %v759 = vld [vmem:[%s4 + $0x20] sm:$0xf]
        %v760 = vld [vmem:[%s4 + $0x24] sm:$0xff]
        %v761 = vld [vmem:[%s4 + $0x2c] sm:$0xf]
        %v762 = vld [vmem:[%s4 + $0x30] sm:$0xff]
        %v763 = vld [vmem:[%s4 + $0x38] sm:$0xf]
        %v764 = vld [vmem:[%s4 + $0x3c] sm:$0xff]
        %v765 = vld [vmem:[%s4 + $0x44] sm:$0xf]
        %v766 = vld [vmem:[%s4 + $0x48] sm:$0xff]
        %v767 = vld [vmem:[%s4 + $0x50] sm:$0xf]
        %v768 = vld [vmem:[%s4 + $0x54] sm:$0xff]
        %v769 = vld [vmem:[%s4 + $0x5c] sm:$0xf]
        %v770 = vld [vmem:[%s4 + $0x60] sm:$0xff]
        %v771 = vld [vmem:[%s4 + $0x68] sm:$0xf]
        %v772 = vld [vmem:[%s4 + $0x6c] sm:$0xff]
        %v773 = vld [vmem:[%s4 + $0x74] sm:$0xf]
        %v774 = vld [vmem:[%s4 + $0x78] sm:$0xff]
        %v775 = vld [vmem:[%s4 + $0x80] sm:$0xf]
        %v776 = vld [vmem:[%s4 + $0x84] sm:$0xff]
        %v777 = vld [vmem:[%s4 + $0x8c] sm:$0xf]
        %v778 = vld [vmem:[%s4 + $0x90] sm:$0xff]
        %v779 = vld [vmem:[%s4 + $0x98] sm:$0xf]
        %v780 = vld [vmem:[%s4 + $0x9c] sm:$0xff]
        %v781 = vld [vmem:[%s4 + $0xa4] sm:$0xf]
        %v782 = vld [vmem:[%s4 + $0xa8] sm:$0xff]
        %v783 = vld [vmem:[%s4 + $0xb0] sm:$0xf]
        %v784 = vld [vmem:[%s4 + $0xb4] sm:$0xff]
        %v785 = vld [vmem:[%s4 + $0xbc] sm:$0xf]
        %v786 = vld [vmem:[%s5] sm:$0x7]
        %v788 = vlaneseq
        %v789 = vshrl.u32 %v788, 7
        %v790 = vsub.s32 0, %v789
        %v791 = vrot.slane %v786, %v790
        %v792 = vlaneseq
        %v793 = vshrl.u32 %v792, 7
        %v794 = vsub.s32 1, %v793
        %v795 = vrot.slane %v786, %v794
        %v796 = vlaneseq
        %v797 = vshrl.u32 %v796, 7
        %v798 = vsub.s32 2, %v797
        %v799 = vrot.slane %v786, %v798
        %v835 = vunpack.c.l.b16 %v754
        %v836 = vunpack.c.h.b16 %v754
        %v837 = vunpack.c.l.b16 %v755
        %v838 = vunpack.c.l.b16 %v756
        %v839 = vunpack.c.h.b16 %v756
        %v840 = vunpack.c.l.b16 %v757
        %v841 = vunpack.c.l.b16 %v758
        %v842 = vunpack.c.h.b16 %v758
        %v843 = vunpack.c.l.b16 %v759
        %v844 = vunpack.c.l.b16 %v760
        %v845 = vunpack.c.h.b16 %v760
        %v846 = vunpack.c.l.b16 %v761
        %v847 = vunpack.c.l.b16 %v762
        %v848 = vunpack.c.h.b16 %v762
        %v849 = vunpack.c.l.b16 %v763
        %v850 = vunpack.c.l.b16 %v764
        %v851 = vunpack.c.h.b16 %v764
        %v852 = vunpack.c.l.b16 %v765
        %v853 = vunpack.c.l.b16 %v766
        %v854 = vunpack.c.h.b16 %v766
        %v855 = vunpack.c.l.b16 %v767
        %v856 = vunpack.c.l.b16 %v768
        %v857 = vunpack.c.h.b16 %v768
        %v858 = vunpack.c.l.b16 %v769
        %v859 = vunpack.c.l.b16 %v770
        %v860 = vunpack.c.h.b16 %v770
        %v861 = vunpack.c.l.b16 %v771
        %v862 = vunpack.c.l.b16 %v772
        %v863 = vunpack.c.h.b16 %v772
        %v864 = vunpack.c.l.b16 %v773
        %v865 = vunpack.c.l.b16 %v774
        %v866 = vunpack.c.h.b16 %v774
        %v867 = vunpack.c.l.b16 %v775
        %v868 = vunpack.c.l.b16 %v776
        %v869 = vunpack.c.h.b16 %v776
        %v870 = vunpack.c.l.b16 %v777
        %v871 = vunpack.c.l.b16 %v778
        %v872 = vunpack.c.h.b16 %v778
        %v873 = vunpack.c.l.b16 %v779
        %v874 = vunpack.c.l.b16 %v780
        %v875 = vunpack.c.h.b16 %v780
        %v876 = vunpack.c.l.b16 %v781
        %v877 = vunpack.c.l.b16 %v782
        %v878 = vunpack.c.h.b16 %v782
        %v879 = vunpack.c.l.b16 %v783
        %v880 = vunpack.c.l.b16 %v784
        %v881 = vunpack.c.h.b16 %v784
        %v882 = vunpack.c.l.b16 %v785
        %v883 = vpack.c.b16 %v838, %v835
        %v884 = vpack.c.b16 %v839, %v836
        %v885 = vpack.c.b16 %v840, %v837
        %v886 = vpack.c.b16 %v844, %v841
        %v887 = vpack.c.b16 %v845, %v842
        %v888 = vpack.c.b16 %v846, %v843
        %v889 = vpack.c.b16 %v850, %v847
        %v890 = vpack.c.b16 %v851, %v848
        %v891 = vpack.c.b16 %v852, %v849
        %v892 = vpack.c.b16 %v856, %v853
        %v893 = vpack.c.b16 %v857, %v854
        %v894 = vpack.c.b16 %v858, %v855
        %v895 = vpack.c.b16 %v862, %v859
        %v896 = vpack.c.b16 %v863, %v860
        %v897 = vpack.c.b16 %v864, %v861
        %v898 = vpack.c.b16 %v868, %v865
        %v899 = vpack.c.b16 %v869, %v866
        %v900 = vpack.c.b16 %v870, %v867
        %v901 = vpack.c.b16 %v874, %v871
        %v902 = vpack.c.b16 %v875, %v872
        %v903 = vpack.c.b16 %v876, %v873
        %v904 = vpack.c.b16 %v880, %v877
        %v905 = vpack.c.b16 %v881, %v878
        %v906 = vpack.c.b16 %v882, %v879
        %931 = vmatprep.subr.bf16.mxu0 %v905
        %932 = vmatpush1.bf16.msra.mxu0 %v904
        %933 = vmatprep.subr.bf16.mxu0 %v902
        %934 = vmatpush1.bf16.msra.mxu0 %v901
        %935 = vmatprep.subr.bf16.mxu0 %v899
        %936 = vmatpush1.bf16.msra.mxu0 %v898
        %937 = vmatprep.subr.bf16.mxu0 %v896
        %938 = vmatpush1.bf16.msra.mxu0 %v895
        %939 = vmatprep.subr.bf16.mxu0 %v893
        %940 = vmatpush1.bf16.msra.mxu0 %v892
        %941 = vmatprep.subr.bf16.mxu0 %v890
        %942 = vmatpush1.bf16.msra.mxu0 %v889
        %943 = vmatprep.subr.bf16.mxu0 %v887
        %944 = vmatpush1.bf16.msra.mxu0 %v886
        %945 = vmatprep.subr.bf16.mxu0 %v884
        %946 = vmatpush1.bf16.msra.mxu0 %v883
        %947 = vmatprep.subr.bf16.mxu0 0
        %948 = vmatpush2.bf16.msra.mxu0 0
        %949 = vmatprep.subr.bf16.mxu0 0
        %950 = vmatpush2.bf16.msra.mxu0 0
        %951 = vmatprep.subr.bf16.mxu0 0
        %952 = vmatpush2.bf16.msra.mxu0 0
        %953 = vmatprep.subr.bf16.mxu0 0
        %954 = vmatpush2.bf16.msra.mxu0 0
        %955 = vmatprep.subr.bf16.mxu0 0
        %956 = vmatpush2.bf16.msra.mxu0 0
        %957 = vmatprep.subr.bf16.mxu0 0
        %958 = vmatpush2.bf16.msra.mxu0 0
        %959 = vmatprep.subr.bf16.mxu0 0
        %960 = vmatpush2.bf16.msra.mxu0 0
        %961 = vmatprep.subr.bf16.mxu0 0
        %962 = vmatpush2.bf16.msra.mxu0 0
        %963 = vmatprep.mubr.bf16.mxu0 0
        %964 = vmatmul.mubr.bf16.gmra.mxu0 %v753
        %v965 = vpop.f32.mrf.mxu0
        %v966 = vadd.f32 %v791, %v965
        %v967 = vpop.f32.mrf.mxu0
        %v968 = vadd.f32 %v795, %v967
        %v969 = vpop.f32.mrf.mxu0
        %v970 = vpop.f32.mrf.mxu0
        %971 = vdwg.mxu0
        %972 = vmatprep.subr.bf16.mxu0 0
        %973 = vmatpush1.bf16.msra.mxu0 %v906
        %974 = vmatprep.subr.bf16.mxu0 0
        %975 = vmatpush1.bf16.msra.mxu0 %v903
        %976 = vmatprep.subr.bf16.mxu0 0
        %977 = vmatpush1.bf16.msra.mxu0 %v900
        %978 = vmatprep.subr.bf16.mxu0 0
        %979 = vmatpush1.bf16.msra.mxu0 %v897
        %980 = vmatprep.subr.bf16.mxu0 0
        %981 = vmatpush1.bf16.msra.mxu0 %v894
        %982 = vmatprep.subr.bf16.mxu0 0
        %983 = vmatpush1.bf16.msra.mxu0 %v891
        %984 = vmatprep.subr.bf16.mxu0 0
        %985 = vmatpush1.bf16.msra.mxu0 %v888
        %986 = vmatprep.subr.bf16.mxu0 0
        %987 = vmatpush1.bf16.msra.mxu0 %v885
        %988 = vmatprep.subr.bf16.mxu0 0
        %989 = vmatpush2.bf16.msra.mxu0 0
        %990 = vmatprep.subr.bf16.mxu0 0
        %991 = vmatpush2.bf16.msra.mxu0 0
        %992 = vmatprep.subr.bf16.mxu0 0
        %993 = vmatpush2.bf16.msra.mxu0 0
        %994 = vmatprep.subr.bf16.mxu0 0
        %995 = vmatpush2.bf16.msra.mxu0 0
        %996 = vmatprep.subr.bf16.mxu0 0
        %997 = vmatpush2.bf16.msra.mxu0 0
        %998 = vmatprep.subr.bf16.mxu0 0
        %999 = vmatpush2.bf16.msra.mxu0 0
        %1000 = vmatprep.subr.bf16.mxu0 0
        %1001 = vmatpush2.bf16.msra.mxu0 0
        %1002 = vmatprep.subr.bf16.mxu0 0
        %1003 = vmatpush2.bf16.msra.mxu0 0
        %1004 = vmatprep.mubr.bf16.mxu0 0
        %1005 = vmatmul.mubr.bf16.gmra.mxu0 %v753
        %v1006 = vpop.f32.mrf.mxu0
        %v1007 = vadd.f32 %v799, %v1006
        %v1008 = vpop.f32.mrf.mxu0
        %v1009 = vpop.f32.mrf.mxu0
        %v1010 = vpop.f32.mrf.mxu0
        %1011 = vdwg.mxu0
        %v1012 = vld [vmem:[%s2] sm:$0xff]
        %v1013 = vld [vmem:[%s6] sm:$0xf]
        %v1014 = vld [vmem:[%s6 + $0x4] sm:$0xf]
        %v1015 = vld [vmem:[%s6 + $0x8] sm:$0xf]
        %v1016 = vld [vmem:[%s6 + $0xc] sm:$0xf]
        %v1017 = vld [vmem:[%s6 + $0x10] sm:$0xf]
        %v1018 = vld [vmem:[%s6 + $0x14] sm:$0xf]
        %v1019 = vld [vmem:[%s6 + $0x18] sm:$0xf]
        %v1020 = vld [vmem:[%s6 + $0x1c] sm:$0xf]
        %v1021 = vld [vmem:[%s6 + $0x20] sm:$0xf]
        %v1022 = vld [vmem:[%s6 + $0x24] sm:$0xf]
        %v1023 = vld [vmem:[%s6 + $0x28] sm:$0xf]
        %v1024 = vld [vmem:[%s6 + $0x2c] sm:$0xf]
        %v1025 = vld [vmem:[%s6 + $0x30] sm:$0xf]
        %v1026 = vld [vmem:[%s6 + $0x34] sm:$0xf]
        %v1027 = vld [vmem:[%s6 + $0x38] sm:$0xf]
        %v1028 = vld [vmem:[%s6 + $0x3c] sm:$0xf]
        %v1029 = vld [vmem:[%s7] sm:$0x1]
        %v1030 = vld [vmem:[%s8] sm:$0x1]
        %v1031 = vld [vmem:[%s9] sm:$0x1]
        %v1032 = vmul.f32 %v966, 0.17677669
        %v1033 = vpack.c.bf16 %v1032, %v1032
        %v1034 = vpack.c.bf16 %v968, %v968
        %v1035 = vpack.c.bf16 %v1007, %v1007
        %vm1036 = vcmask 261120
        %v1038 = vsel %vm1036, %v1033, 0
        %v1041 = vsel %vm1036, %v1034, 0
        %1043 = vmatprep.subr.bf16.mxu0 0
        %1044 = vmatpush1.bf16.xpose.msra.mxu0 0
        %1045 = vmatprep.subr.bf16.mxu0 0
        %1046 = vmatpush1.bf16.xpose.msra.mxu0 0
        %1047 = vmatprep.subr.bf16.mxu0 0
        %1048 = vmatpush1.bf16.xpose.msra.mxu0 0
        %1049 = vmatprep.subr.bf16.mxu0 0
        %1050 = vmatpush1.bf16.xpose.msra.mxu0 0
        %1051 = vmatprep.subr.bf16.mxu0 0
        %1052 = vmatpush1.bf16.xpose.msra.mxu0 0
        %1053 = vmatprep.subr.bf16.mxu0 0
        %1054 = vmatpush1.bf16.xpose.msra.mxu0 0
        %1055 = vmatprep.subr.bf16.mxu0 0
        %1056 = vmatpush1.bf16.xpose.msra.mxu0 0
        %1057 = vmatprep.subr.bf16.mxu0 0
        %1058 = vmatpush1.bf16.xpose.msra.mxu0 %v1041
        %1059 = vmatprep.subr.bf16.mxu0 0
        %1060 = vmatpush2.bf16.xpose.msra.mxu0 0
        %1061 = vmatprep.subr.bf16.mxu0 0
        %1062 = vmatpush2.bf16.xpose.msra.mxu0 0
        %1063 = vmatprep.subr.bf16.mxu0 0
        %1064 = vmatpush2.bf16.xpose.msra.mxu0 0
        %1065 = vmatprep.subr.bf16.mxu0 0
        %1066 = vmatpush2.bf16.xpose.msra.mxu0 0
        %1067 = vmatprep.subr.bf16.mxu0 0
        %1068 = vmatpush2.bf16.xpose.msra.mxu0 0
        %1069 = vmatprep.subr.bf16.mxu0 0
        %1070 = vmatpush2.bf16.xpose.msra.mxu0 0
        %1071 = vmatprep.subr.bf16.mxu0 0
        %1072 = vmatpush2.bf16.xpose.msra.mxu0 0
        %1073 = vmatprep.subr.bf16.mxu0 0
        %1074 = vmatpush2.bf16.xpose.msra.mxu0 0
        %1075 = vmatprep.mubr.bf16.mxu0 0
        %1076 = vmatmul.mubr.bf16.gmra.mxu0 %v1038
        %v1077 = vpop.f32.mrf.mxu0
        %v1078 = vadd.f32 %v1012, %v1077
        %v1079 = vpop.f32.mrf.mxu0
        %v1080 = vpop.f32.mrf.mxu0
        %v1081 = vpop.f32.mrf.mxu0
        %1082 = vdwg.mxu0
        %vm1083 = vcmask 64512
        %v1084 = vsel %vm1083, %v1078, -inf
        %1085 = vmax.xlane.f32.xlu0 %v1084
        %v1086 = vpop.xlane.xlu0 %1085
        %v1087 = vsub.f32 %v1078, %v1086
        %v1088 = vmul.f32 %v1087, 1.442695
        %v1089 = vpow.pop %v1088
        %v1090 = vsel %vm1083, %v1089, 0.0
        %1091 = vadd.xlane.f32.xlu0 %v1090
        %v1092 = vpop.xlane.xlu0 %1091
        %v1093 = vrcp.pop %v1092
        %v1094 = vmul.f32 %v1089, %v1093
        %v1095 = vpack.c.bf16 %v1094, %v1094
        %v1097 = vsel %vm1083, %v1095, 0
        %vm1099 = vcmask 1043456
        %v1101 = vsel %vm1099, %v1035, 0
        %1103 = vmatprep.subr.bf16.mxu0 0
        %1104 = vmatpush1.bf16.msra.mxu0 0
        %1105 = vmatprep.subr.bf16.mxu0 0
        %1106 = vmatpush1.bf16.msra.mxu0 0
        %1107 = vmatprep.subr.bf16.mxu0 0
        %1108 = vmatpush1.bf16.msra.mxu0 0
        %1109 = vmatprep.subr.bf16.mxu0 0
        %1110 = vmatpush1.bf16.msra.mxu0 0
        %1111 = vmatprep.subr.bf16.mxu0 0
        %1112 = vmatpush1.bf16.msra.mxu0 0
        %1113 = vmatprep.subr.bf16.mxu0 0
        %1114 = vmatpush1.bf16.msra.mxu0 0
        %1115 = vmatprep.subr.bf16.mxu0 0
        %1116 = vmatpush1.bf16.msra.mxu0 0
        %1117 = vmatprep.subr.bf16.mxu0 0
        %1118 = vmatpush1.bf16.msra.mxu0 %v1101
        %1119 = vmatprep.subr.bf16.mxu0 0
        %1120 = vmatpush2.bf16.msra.mxu0 0
        %1121 = vmatprep.subr.bf16.mxu0 0
        %1122 = vmatpush2.bf16.msra.mxu0 0
        %1123 = vmatprep.subr.bf16.mxu0 0
        %1124 = vmatpush2.bf16.msra.mxu0 0
        %1125 = vmatprep.subr.bf16.mxu0 0
        %1126 = vmatpush2.bf16.msra.mxu0 0
        %1127 = vmatprep.subr.bf16.mxu0 0
        %1128 = vmatpush2.bf16.msra.mxu0 0
        %1129 = vmatprep.subr.bf16.mxu0 0
        %1130 = vmatpush2.bf16.msra.mxu0 0
        %1131 = vmatprep.subr.bf16.mxu0 0
        %1132 = vmatpush2.bf16.msra.mxu0 0
        %1133 = vmatprep.subr.bf16.mxu0 0
        %1134 = vmatpush2.bf16.msra.mxu0 0
        %1135 = vmatprep.mubr.bf16.mxu0 0
        %1136 = vmatmul.mubr.bf16.gmra.mxu0 %v1097
        %v1137 = vpop.f32.mrf.mxu0
        %v1138 = vadd.f32 0.0, %v1137
        %v1139 = vpop.f32.mrf.mxu0
        %v1140 = vpop.f32.mrf.mxu0
        %v1141 = vpop.f32.mrf.mxu0
        %1142 = vdwg.mxu0
        %1144 = vrot.lane.b32.xlu0 %v1033, 96
        %v1145 = vpop.permute.xlu0 %1144
        %1147 = vrot.lane.b32.xlu0 %v1034, 96
        %v1148 = vpop.permute.xlu0 %1147
        %v1150 = vsel %vm1036, %v1145, 0
        %v1153 = vsel %vm1036, %v1148, 0
        %1155 = vmatprep.subr.bf16.mxu0 0
        %1156 = vmatpush1.bf16.xpose.msra.mxu0 0
        %1157 = vmatprep.subr.bf16.mxu0 0
        %1158 = vmatpush1.bf16.xpose.msra.mxu0 0
        %1159 = vmatprep.subr.bf16.mxu0 0
        %1160 = vmatpush1.bf16.xpose.msra.mxu0 0
        %1161 = vmatprep.subr.bf16.mxu0 0
        %1162 = vmatpush1.bf16.xpose.msra.mxu0 0
        %1163 = vmatprep.subr.bf16.mxu0 0
        %1164 = vmatpush1.bf16.xpose.msra.mxu0 0
        %1165 = vmatprep.subr.bf16.mxu0 0
        %1166 = vmatpush1.bf16.xpose.msra.mxu0 0
        %1167 = vmatprep.subr.bf16.mxu0 0
        %1168 = vmatpush1.bf16.xpose.msra.mxu0 0
        %1169 = vmatprep.subr.bf16.mxu0 0
        %1170 = vmatpush1.bf16.xpose.msra.mxu0 %v1153
        %1171 = vmatprep.subr.bf16.mxu0 0
        %1172 = vmatpush2.bf16.xpose.msra.mxu0 0
        %1173 = vmatprep.subr.bf16.mxu0 0
        %1174 = vmatpush2.bf16.xpose.msra.mxu0 0
        %1175 = vmatprep.subr.bf16.mxu0 0
        %1176 = vmatpush2.bf16.xpose.msra.mxu0 0
        %1177 = vmatprep.subr.bf16.mxu0 0
        %1178 = vmatpush2.bf16.xpose.msra.mxu0 0
        %1179 = vmatprep.subr.bf16.mxu0 0
        %1180 = vmatpush2.bf16.xpose.msra.mxu0 0
        %1181 = vmatprep.subr.bf16.mxu0 0
        %1182 = vmatpush2.bf16.xpose.msra.mxu0 0
        %1183 = vmatprep.subr.bf16.mxu0 0
        %1184 = vmatpush2.bf16.xpose.msra.mxu0 0
        %1185 = vmatprep.subr.bf16.mxu0 0
        %1186 = vmatpush2.bf16.xpose.msra.mxu0 0
        %1187 = vmatprep.mubr.bf16.mxu0 0
        %1188 = vmatmul.mubr.bf16.gmra.mxu0 %v1150
        %v1189 = vpop.f32.mrf.mxu0
        %v1190 = vadd.f32 %v1012, %v1189
        %v1191 = vpop.f32.mrf.mxu0
        %v1192 = vpop.f32.mrf.mxu0
        %v1193 = vpop.f32.mrf.mxu0
        %1194 = vdwg.mxu0
        %v1195 = vsel %vm1083, %v1190, -inf
        %1196 = vmax.xlane.f32.xlu0 %v1195
        %v1197 = vpop.xlane.xlu0 %1196
        %v1198 = vsub.f32 %v1190, %v1197
        %v1199 = vmul.f32 %v1198, 1.442695
        %v1200 = vpow.pop %v1199
        %v1201 = vsel %vm1083, %v1200, 0.0
        %1202 = vadd.xlane.f32.xlu0 %v1201
        %v1203 = vpop.xlane.xlu0 %1202
        %v1204 = vrcp.pop %v1203
        %v1205 = vmul.f32 %v1200, %v1204
        %v1206 = vpack.c.bf16 %v1205, %v1205
        %1208 = vrot.lane.b32.xlu0 %v1035, 96
        %v1209 = vpop.permute.xlu0 %1208
        %v1211 = vsel %vm1083, %v1206, 0
        %v1214 = vsel %vm1099, %v1209, 0
        %1216 = vmatprep.subr.bf16.mxu0 0
        %1217 = vmatpush1.bf16.msra.mxu0 0
        %1218 = vmatprep.subr.bf16.mxu0 0
        %1219 = vmatpush1.bf16.msra.mxu0 0
        %1220 = vmatprep.subr.bf16.mxu0 0
        %1221 = vmatpush1.bf16.msra.mxu0 0
        %1222 = vmatprep.subr.bf16.mxu0 0
        %1223 = vmatpush1.bf16.msra.mxu0 0
        %1224 = vmatprep.subr.bf16.mxu0 0
        %1225 = vmatpush1.bf16.msra.mxu0 0
        %1226 = vmatprep.subr.bf16.mxu0 0
        %1227 = vmatpush1.bf16.msra.mxu0 0
        %1228 = vmatprep.subr.bf16.mxu0 0
        %1229 = vmatpush1.bf16.msra.mxu0 0
        %1230 = vmatprep.subr.bf16.mxu0 0
        %1231 = vmatpush1.bf16.msra.mxu0 %v1214
        %1232 = vmatprep.subr.bf16.mxu0 0
        %1233 = vmatpush2.bf16.msra.mxu0 0
        %1234 = vmatprep.subr.bf16.mxu0 0
        %1235 = vmatpush2.bf16.msra.mxu0 0
        %1236 = vmatprep.subr.bf16.mxu0 0
        %1237 = vmatpush2.bf16.msra.mxu0 0
        %1238 = vmatprep.subr.bf16.mxu0 0
        %1239 = vmatpush2.bf16.msra.mxu0 0
        %1240 = vmatprep.subr.bf16.mxu0 0
        %1241 = vmatpush2.bf16.msra.mxu0 0
        %1242 = vmatprep.subr.bf16.mxu0 0
        %1243 = vmatpush2.bf16.msra.mxu0 0
        %1244 = vmatprep.subr.bf16.mxu0 0
        %1245 = vmatpush2.bf16.msra.mxu0 0
        %1246 = vmatprep.subr.bf16.mxu0 0
        %1247 = vmatpush2.bf16.msra.mxu0 0
        %1248 = vmatprep.mubr.bf16.mxu0 0
        %1249 = vmatmul.mubr.bf16.gmra.mxu0 %v1211
        %v1250 = vpop.f32.mrf.mxu0
        %v1251 = vadd.f32 0.0, %v1250
        %v1252 = vpop.f32.mrf.mxu0
        %v1253 = vpop.f32.mrf.mxu0
        %v1254 = vpop.f32.mrf.mxu0
        %1255 = vdwg.mxu0
        %1256 = vrot.lane.b32.xlu0 %v1033, 64
        %v1257 = vpop.permute.xlu0 %1256
        %1258 = vrot.lane.b32.xlu0 %v1034, 64
        %v1259 = vpop.permute.xlu0 %1258
        %v1261 = vsel %vm1036, %v1257, 0
        %v1264 = vsel %vm1036, %v1259, 0
        %1266 = vmatprep.subr.bf16.mxu0 0
        %1267 = vmatpush1.bf16.xpose.msra.mxu0 0
        %1268 = vmatprep.subr.bf16.mxu0 0
        %1269 = vmatpush1.bf16.xpose.msra.mxu0 0
        %1270 = vmatprep.subr.bf16.mxu0 0
        %1271 = vmatpush1.bf16.xpose.msra.mxu0 0
        %1272 = vmatprep.subr.bf16.mxu0 0
        %1273 = vmatpush1.bf16.xpose.msra.mxu0 0
        %1274 = vmatprep.subr.bf16.mxu0 0
        %1275 = vmatpush1.bf16.xpose.msra.mxu0 0
        %1276 = vmatprep.subr.bf16.mxu0 0
        %1277 = vmatpush1.bf16.xpose.msra.mxu0 0
        %1278 = vmatprep.subr.bf16.mxu0 0
        %1279 = vmatpush1.bf16.xpose.msra.mxu0 0
        %1280 = vmatprep.subr.bf16.mxu0 0
        %1281 = vmatpush1.bf16.xpose.msra.mxu0 %v1264
        %1282 = vmatprep.subr.bf16.mxu0 0
        %1283 = vmatpush2.bf16.xpose.msra.mxu0 0
        %1284 = vmatprep.subr.bf16.mxu0 0
        %1285 = vmatpush2.bf16.xpose.msra.mxu0 0
        %1286 = vmatprep.subr.bf16.mxu0 0
        %1287 = vmatpush2.bf16.xpose.msra.mxu0 0
        %1288 = vmatprep.subr.bf16.mxu0 0
        %1289 = vmatpush2.bf16.xpose.msra.mxu0 0
        %1290 = vmatprep.subr.bf16.mxu0 0
        %1291 = vmatpush2.bf16.xpose.msra.mxu0 0
        %1292 = vmatprep.subr.bf16.mxu0 0
        %1293 = vmatpush2.bf16.xpose.msra.mxu0 0
        %1294 = vmatprep.subr.bf16.mxu0 0
        %1295 = vmatpush2.bf16.xpose.msra.mxu0 0
        %1296 = vmatprep.subr.bf16.mxu0 0
        %1297 = vmatpush2.bf16.xpose.msra.mxu0 0
        %1298 = vmatprep.mubr.bf16.mxu0 0
        %1299 = vmatmul.mubr.bf16.gmra.mxu0 %v1261
        %v1300 = vpop.f32.mrf.mxu0
        %v1301 = vadd.f32 %v1012, %v1300
        %v1302 = vpop.f32.mrf.mxu0
        %v1303 = vpop.f32.mrf.mxu0
        %v1304 = vpop.f32.mrf.mxu0
        %1305 = vdwg.mxu0
        %v1306 = vsel %vm1083, %v1301, -inf
        %1307 = vmax.xlane.f32.xlu0 %v1306
        %v1308 = vpop.xlane.xlu0 %1307
        %v1309 = vsub.f32 %v1301, %v1308
        %v1310 = vmul.f32 %v1309, 1.442695
        %v1311 = vpow.pop %v1310
        %v1312 = vsel %vm1083, %v1311, 0.0
        %1313 = vadd.xlane.f32.xlu0 %v1312
        %v1314 = vpop.xlane.xlu0 %1313
        %v1315 = vrcp.pop %v1314
        %v1316 = vmul.f32 %v1311, %v1315
        %v1317 = vpack.c.bf16 %v1316, %v1316
        %1318 = vrot.lane.b32.xlu0 %v1035, 64
        %v1319 = vpop.permute.xlu0 %1318
        %v1321 = vsel %vm1083, %v1317, 0
        %v1324 = vsel %vm1099, %v1319, 0
        %1326 = vmatprep.subr.bf16.mxu0 0
        %1327 = vmatpush1.bf16.msra.mxu0 0
        %1328 = vmatprep.subr.bf16.mxu0 0
        %1329 = vmatpush1.bf16.msra.mxu0 0
        %1330 = vmatprep.subr.bf16.mxu0 0
        %1331 = vmatpush1.bf16.msra.mxu0 0
        %1332 = vmatprep.subr.bf16.mxu0 0
        %1333 = vmatpush1.bf16.msra.mxu0 0
        %1334 = vmatprep.subr.bf16.mxu0 0
        %1335 = vmatpush1.bf16.msra.mxu0 0
        %1336 = vmatprep.subr.bf16.mxu0 0
        %1337 = vmatpush1.bf16.msra.mxu0 0
        %1338 = vmatprep.subr.bf16.mxu0 0
        %1339 = vmatpush1.bf16.msra.mxu0 0
        %1340 = vmatprep.subr.bf16.mxu0 0
        %1341 = vmatpush1.bf16.msra.mxu0 %v1324
        %1342 = vmatprep.subr.bf16.mxu0 0
        %1343 = vmatpush2.bf16.msra.mxu0 0
        %1344 = vmatprep.subr.bf16.mxu0 0
        %1345 = vmatpush2.bf16.msra.mxu0 0
        %1346 = vmatprep.subr.bf16.mxu0 0
        %1347 = vmatpush2.bf16.msra.mxu0 0
        %1348 = vmatprep.subr.bf16.mxu0 0
        %1349 = vmatpush2.bf16.msra.mxu0 0
        %1350 = vmatprep.subr.bf16.mxu0 0
        %1351 = vmatpush2.bf16.msra.mxu0 0
        %1352 = vmatprep.subr.bf16.mxu0 0
        %1353 = vmatpush2.bf16.msra.mxu0 0
        %1354 = vmatprep.subr.bf16.mxu0 0
        %1355 = vmatpush2.bf16.msra.mxu0 0
        %1356 = vmatprep.subr.bf16.mxu0 0
        %1357 = vmatpush2.bf16.msra.mxu0 0
        %1358 = vmatprep.mubr.bf16.mxu0 0
        %1359 = vmatmul.mubr.bf16.gmra.mxu0 %v1321
        %v1360 = vpop.f32.mrf.mxu0
        %v1361 = vadd.f32 0.0, %v1360
        %v1362 = vpop.f32.mrf.mxu0
        %v1363 = vpop.f32.mrf.mxu0
        %v1364 = vpop.f32.mrf.mxu0
        %1365 = vdwg.mxu0
        %1366 = vrot.lane.b32.xlu0 %v1033, 32
        %v1367 = vpop.permute.xlu0 %1366
        %1368 = vrot.lane.b32.xlu0 %v1034, 32
        %v1369 = vpop.permute.xlu0 %1368
        %v1371 = vsel %vm1036, %v1367, 0
        %v1374 = vsel %vm1036, %v1369, 0
        %1376 = vmatprep.subr.bf16.mxu0 0
        %1377 = vmatpush1.bf16.xpose.msra.mxu0 0
        %1378 = vmatprep.subr.bf16.mxu0 0
        %1379 = vmatpush1.bf16.xpose.msra.mxu0 0
        %1380 = vmatprep.subr.bf16.mxu0 0
        %1381 = vmatpush1.bf16.xpose.msra.mxu0 0
        %1382 = vmatprep.subr.bf16.mxu0 0
        %1383 = vmatpush1.bf16.xpose.msra.mxu0 0
        %1384 = vmatprep.subr.bf16.mxu0 0
        %1385 = vmatpush1.bf16.xpose.msra.mxu0 0
        %1386 = vmatprep.subr.bf16.mxu0 0
        %1387 = vmatpush1.bf16.xpose.msra.mxu0 0
        %1388 = vmatprep.subr.bf16.mxu0 0
        %1389 = vmatpush1.bf16.xpose.msra.mxu0 0
        %1390 = vmatprep.subr.bf16.mxu0 0
        %1391 = vmatpush1.bf16.xpose.msra.mxu0 %v1374
        %1392 = vmatprep.subr.bf16.mxu0 0
        %1393 = vmatpush2.bf16.xpose.msra.mxu0 0
        %1394 = vmatprep.subr.bf16.mxu0 0
        %1395 = vmatpush2.bf16.xpose.msra.mxu0 0
        %1396 = vmatprep.subr.bf16.mxu0 0
        %1397 = vmatpush2.bf16.xpose.msra.mxu0 0
        %1398 = vmatprep.subr.bf16.mxu0 0
        %1399 = vmatpush2.bf16.xpose.msra.mxu0 0
        %1400 = vmatprep.subr.bf16.mxu0 0
        %1401 = vmatpush2.bf16.xpose.msra.mxu0 0
        %1402 = vmatprep.subr.bf16.mxu0 0
        %1403 = vmatpush2.bf16.xpose.msra.mxu0 0
        %1404 = vmatprep.subr.bf16.mxu0 0
        %1405 = vmatpush2.bf16.xpose.msra.mxu0 0
        %1406 = vmatprep.subr.bf16.mxu0 0
        %1407 = vmatpush2.bf16.xpose.msra.mxu0 0
        %1408 = vmatprep.mubr.bf16.mxu0 0
        %1409 = vmatmul.mubr.bf16.gmra.mxu0 %v1371
        %v1410 = vpop.f32.mrf.mxu0
        %v1411 = vadd.f32 %v1012, %v1410
        %v1412 = vpop.f32.mrf.mxu0
        %v1413 = vpop.f32.mrf.mxu0
        %v1414 = vpop.f32.mrf.mxu0
        %1415 = vdwg.mxu0
        %v1416 = vsel %vm1083, %v1411, -inf
        %1417 = vmax.xlane.f32.xlu0 %v1416
        %v1418 = vpop.xlane.xlu0 %1417
        %v1419 = vsub.f32 %v1411, %v1418
        %v1420 = vmul.f32 %v1419, 1.442695
        %v1421 = vpow.pop %v1420
        %v1422 = vsel %vm1083, %v1421, 0.0
        %1423 = vadd.xlane.f32.xlu0 %v1422
        %v1424 = vpop.xlane.xlu0 %1423
        %v1425 = vrcp.pop %v1424
        %v1426 = vmul.f32 %v1421, %v1425
        %v1427 = vpack.c.bf16 %v1426, %v1426
        %1428 = vrot.lane.b32.xlu0 %v1035, 32
        %v1429 = vpop.permute.xlu0 %1428
        %v1431 = vsel %vm1083, %v1427, 0
        %v1434 = vsel %vm1099, %v1429, 0
        %1436 = vmatprep.subr.bf16.mxu0 0
        %1437 = vmatpush1.bf16.msra.mxu0 0
        %1438 = vmatprep.subr.bf16.mxu0 0
        %1439 = vmatpush1.bf16.msra.mxu0 0
        %1440 = vmatprep.subr.bf16.mxu0 0
        %1441 = vmatpush1.bf16.msra.mxu0 0
        %1442 = vmatprep.subr.bf16.mxu0 0
        %1443 = vmatpush1.bf16.msra.mxu0 0
        %1444 = vmatprep.subr.bf16.mxu0 0
        %1445 = vmatpush1.bf16.msra.mxu0 0
        %1446 = vmatprep.subr.bf16.mxu0 0
        %1447 = vmatpush1.bf16.msra.mxu0 0
        %1448 = vmatprep.subr.bf16.mxu0 0
        %1449 = vmatpush1.bf16.msra.mxu0 0
        %1450 = vmatprep.subr.bf16.mxu0 0
        %1451 = vmatpush1.bf16.msra.mxu0 %v1434
        %1452 = vmatprep.subr.bf16.mxu0 0
        %1453 = vmatpush2.bf16.msra.mxu0 0
        %1454 = vmatprep.subr.bf16.mxu0 0
        %1455 = vmatpush2.bf16.msra.mxu0 0
        %1456 = vmatprep.subr.bf16.mxu0 0
        %1457 = vmatpush2.bf16.msra.mxu0 0
        %1458 = vmatprep.subr.bf16.mxu0 0
        %1459 = vmatpush2.bf16.msra.mxu0 0
        %1460 = vmatprep.subr.bf16.mxu0 0
        %1461 = vmatpush2.bf16.msra.mxu0 0
        %1462 = vmatprep.subr.bf16.mxu0 0
        %1463 = vmatpush2.bf16.msra.mxu0 0
        %1464 = vmatprep.subr.bf16.mxu0 0
        %1465 = vmatpush2.bf16.msra.mxu0 0
        %1466 = vmatprep.subr.bf16.mxu0 0
        %1467 = vmatpush2.bf16.msra.mxu0 0
        %1468 = vmatprep.mubr.bf16.mxu0 0
        %1469 = vmatmul.mubr.bf16.gmra.mxu0 %v1431
        %v1470 = vpop.f32.mrf.mxu0
        %v1471 = vadd.f32 0.0, %v1470
        %v1472 = vpop.f32.mrf.mxu0
        %v1473 = vpop.f32.mrf.mxu0
        %v1474 = vpop.f32.mrf.mxu0
        %1475 = vdwg.mxu0
        %1477 = vrot.lane.b32.xlu0 %v1251, 32
        %v1478 = vpop.permute.xlu0 %1477
        %1481 = vrot.lane.b32.xlu0 %v1361, 64
        %v1482 = vpop.permute.xlu0 %1481
        %1485 = vrot.lane.b32.xlu0 %v1471, 96
        %v1486 = vpop.permute.xlu0 %1485
        %v1488 = vsel %vm1036, %v1138, %v1478
        %vm1489 = vcmask 523264
        %v1490 = vsel %vm1489, %v1488, %v1482
        %vm1491 = vcmask 785408
        %v1492 = vsel %vm1491, %v1490, %v1486
        %v1493 = vpack.c.bf16 %v1492, %v1492
        %v1495 = vlaneseq
        %v1496 = vshrl.u32 %v1495, 7
        %v1497 = vsub.s32 0, %v1496
        %v1498 = vrot.slane %v1029, %v1497
        %v1516 = vunpack.c.l.b16 %v1013
        %v1517 = vunpack.c.l.b16 %v1014
        %v1518 = vunpack.c.l.b16 %v1015
        %v1519 = vunpack.c.l.b16 %v1016
        %v1520 = vunpack.c.l.b16 %v1017
        %v1521 = vunpack.c.l.b16 %v1018
        %v1522 = vunpack.c.l.b16 %v1019
        %v1523 = vunpack.c.l.b16 %v1020
        %v1524 = vunpack.c.l.b16 %v1021
        %v1525 = vunpack.c.l.b16 %v1022
        %v1526 = vunpack.c.l.b16 %v1023
        %v1527 = vunpack.c.l.b16 %v1024
        %v1528 = vunpack.c.l.b16 %v1025
        %v1529 = vunpack.c.l.b16 %v1026
        %v1530 = vunpack.c.l.b16 %v1027
        %v1531 = vunpack.c.l.b16 %v1028
        %v1532 = vpack.c.b16 %v1517, %v1516
        %v1533 = vpack.c.b16 %v1519, %v1518
        %v1534 = vpack.c.b16 %v1521, %v1520
        %v1535 = vpack.c.b16 %v1523, %v1522
        %v1536 = vpack.c.b16 %v1525, %v1524
        %v1537 = vpack.c.b16 %v1527, %v1526
        %v1538 = vpack.c.b16 %v1529, %v1528
        %v1539 = vpack.c.b16 %v1531, %v1530
        %1548 = vmatprep.subr.bf16.mxu0 0
        %1549 = vmatpush1.bf16.msra.mxu0 %v1539
        %1550 = vmatprep.subr.bf16.mxu0 0
        %1551 = vmatpush1.bf16.msra.mxu0 %v1538
        %1552 = vmatprep.subr.bf16.mxu0 0
        %1553 = vmatpush1.bf16.msra.mxu0 %v1537
        %1554 = vmatprep.subr.bf16.mxu0 0
        %1555 = vmatpush1.bf16.msra.mxu0 %v1536
        %1556 = vmatprep.subr.bf16.mxu0 0
        %1557 = vmatpush1.bf16.msra.mxu0 %v1535
        %1558 = vmatprep.subr.bf16.mxu0 0
        %1559 = vmatpush1.bf16.msra.mxu0 %v1534
        %1560 = vmatprep.subr.bf16.mxu0 0
        %1561 = vmatpush1.bf16.msra.mxu0 %v1533
        %1562 = vmatprep.subr.bf16.mxu0 0
        %1563 = vmatpush1.bf16.msra.mxu0 %v1532
        %1564 = vmatprep.subr.bf16.mxu0 0
        %1565 = vmatpush2.bf16.msra.mxu0 0
        %1566 = vmatprep.subr.bf16.mxu0 0
        %1567 = vmatpush2.bf16.msra.mxu0 0
        %1568 = vmatprep.subr.bf16.mxu0 0
        %1569 = vmatpush2.bf16.msra.mxu0 0
        %1570 = vmatprep.subr.bf16.mxu0 0
        %1571 = vmatpush2.bf16.msra.mxu0 0
        %1572 = vmatprep.subr.bf16.mxu0 0
        %1573 = vmatpush2.bf16.msra.mxu0 0
        %1574 = vmatprep.subr.bf16.mxu0 0
        %1575 = vmatpush2.bf16.msra.mxu0 0
        %1576 = vmatprep.subr.bf16.mxu0 0
        %1577 = vmatpush2.bf16.msra.mxu0 0
        %1578 = vmatprep.subr.bf16.mxu0 0
        %1579 = vmatpush2.bf16.msra.mxu0 0
        %1580 = vmatprep.mubr.bf16.mxu0 0
        %1581 = vmatmul.mubr.bf16.gmra.mxu0 %v1493
        %v1582 = vpop.f32.mrf.mxu0
        %v1583 = vadd.f32 %v1498, %v1582
        %v1584 = vpop.f32.mrf.mxu0
        %v1585 = vpop.f32.mrf.mxu0
        %v1586 = vpop.f32.mrf.mxu0
        %1587 = vdwg.mxu0
        %v1588 = vadd.f32 %v1583, %v751
        %1589 = vadd.xlane.f32.xlu0 %v1588
        %v1590 = vpop.xlane.xlu0 %1589
        %v1591 = vrcp.pop 128.0
        %v1592 = vmul.f32 %v1590, %v1591
        %v1593 = vsub.f32 %v1588, %v1592
        %v1594 = vmul.f32 %v1593, %v1593
        %1595 = vadd.xlane.f32.xlu0 %v1594
        %v1596 = vpop.xlane.xlu0 %1595
        %v1597 = vmul.f32 %v1596, %v1591
        %v1598 = vadd.f32 %v1597, 1e-05
        %v1599 = vrsqrt.pop %v1598
        %v1600 = vmul.f32 %v1593, %v1599
        %v1602 = vlaneseq
        %v1603 = vshrl.u32 %v1602, 7
        %v1604 = vsub.s32 0, %v1603
        %v1605 = vrot.slane %v1030, %v1604
        %v1607 = vmul.f32 %v1600, %v1605
        %v1609 = vlaneseq
        %v1610 = vshrl.u32 %v1609, 7
        %v1611 = vsub.s32 0, %v1610
        %v1612 = vrot.slane %v1031, %v1611
        %v1614 = vadd.f32 %v1607, %v1612
        %v1615 = vpack.c.bf16 %v1614, %v1614
        %v1616 = vld [vmem:[%s10] sm:$0xf]
        %v1617 = vld [vmem:[%s10 + $0x4] sm:$0xf]
        %v1618 = vld [vmem:[%s10 + $0x8] sm:$0xf]
        %v1619 = vld [vmem:[%s10 + $0xc] sm:$0xf]
        %v1620 = vld [vmem:[%s10 + $0x10] sm:$0xf]
        %v1621 = vld [vmem:[%s10 + $0x14] sm:$0xf]
        %v1622 = vld [vmem:[%s10 + $0x18] sm:$0xf]
        %v1623 = vld [vmem:[%s10 + $0x1c] sm:$0xf]
        %v1624 = vld [vmem:[%s10 + $0x20] sm:$0xf]
        %v1625 = vld [vmem:[%s10 + $0x24] sm:$0xf]
        %v1626 = vld [vmem:[%s10 + $0x28] sm:$0xf]
        %v1627 = vld [vmem:[%s10 + $0x2c] sm:$0xf]
        %v1628 = vld [vmem:[%s10 + $0x30] sm:$0xf]
        %v1629 = vld [vmem:[%s10 + $0x34] sm:$0xf]
        %v1630 = vld [vmem:[%s10 + $0x38] sm:$0xf]
        %v1631 = vld [vmem:[%s10 + $0x3c] sm:$0xf]
        %v1632 = vld [vmem:[%s11] sm:$0x1]
        %v1634 = vlaneseq
        %v1635 = vshrl.u32 %v1634, 7
        %v1636 = vsub.s32 0, %v1635
        %v1637 = vrot.slane %v1632, %v1636
        %v1655 = vunpack.c.l.b16 %v1616
        %v1656 = vunpack.c.l.b16 %v1617
        %v1657 = vunpack.c.l.b16 %v1618
        %v1658 = vunpack.c.l.b16 %v1619
        %v1659 = vunpack.c.l.b16 %v1620
        %v1660 = vunpack.c.l.b16 %v1621
        %v1661 = vunpack.c.l.b16 %v1622
        %v1662 = vunpack.c.l.b16 %v1623
        %v1663 = vunpack.c.l.b16 %v1624
        %v1664 = vunpack.c.l.b16 %v1625
        %v1665 = vunpack.c.l.b16 %v1626
        %v1666 = vunpack.c.l.b16 %v1627
        %v1667 = vunpack.c.l.b16 %v1628
        %v1668 = vunpack.c.l.b16 %v1629
        %v1669 = vunpack.c.l.b16 %v1630
        %v1670 = vunpack.c.l.b16 %v1631
        %v1671 = vpack.c.b16 %v1656, %v1655
        %v1672 = vpack.c.b16 %v1658, %v1657
        %v1673 = vpack.c.b16 %v1660, %v1659
        %v1674 = vpack.c.b16 %v1662, %v1661
        %v1675 = vpack.c.b16 %v1664, %v1663
        %v1676 = vpack.c.b16 %v1666, %v1665
        %v1677 = vpack.c.b16 %v1668, %v1667
        %v1678 = vpack.c.b16 %v1670, %v1669
        %1687 = vmatprep.subr.bf16.mxu0 0
        %1688 = vmatpush1.bf16.msra.mxu0 %v1678
        %1689 = vmatprep.subr.bf16.mxu0 0
        %1690 = vmatpush1.bf16.msra.mxu0 %v1677
        %1691 = vmatprep.subr.bf16.mxu0 0
        %1692 = vmatpush1.bf16.msra.mxu0 %v1676
        %1693 = vmatprep.subr.bf16.mxu0 0
        %1694 = vmatpush1.bf16.msra.mxu0 %v1675
        %1695 = vmatprep.subr.bf16.mxu0 0
        %1696 = vmatpush1.bf16.msra.mxu0 %v1674
        %1697 = vmatprep.subr.bf16.mxu0 0
        %1698 = vmatpush1.bf16.msra.mxu0 %v1673
        %1699 = vmatprep.subr.bf16.mxu0 0
        %1700 = vmatpush1.bf16.msra.mxu0 %v1672
        %1701 = vmatprep.subr.bf16.mxu0 0
        %1702 = vmatpush1.bf16.msra.mxu0 %v1671
        %1703 = vmatprep.subr.bf16.mxu0 0
        %1704 = vmatpush2.bf16.msra.mxu0 0
        %1705 = vmatprep.subr.bf16.mxu0 0
        %1706 = vmatpush2.bf16.msra.mxu0 0
        %1707 = vmatprep.subr.bf16.mxu0 0
        %1708 = vmatpush2.bf16.msra.mxu0 0
        %1709 = vmatprep.subr.bf16.mxu0 0
        %1710 = vmatpush2.bf16.msra.mxu0 0
        %1711 = vmatprep.subr.bf16.mxu0 0
        %1712 = vmatpush2.bf16.msra.mxu0 0
        %1713 = vmatprep.subr.bf16.mxu0 0
        %1714 = vmatpush2.bf16.msra.mxu0 0
        %1715 = vmatprep.subr.bf16.mxu0 0
        %1716 = vmatpush2.bf16.msra.mxu0 0
        %1717 = vmatprep.subr.bf16.mxu0 0
        %1718 = vmatpush2.bf16.msra.mxu0 0
        %1719 = vmatprep.mubr.bf16.mxu0 0
        %1720 = vmatmul.mubr.bf16.gmra.mxu0 %v1615
        %v1721 = vpop.f32.mrf.mxu0
        %v1722 = vadd.f32 %v1637, %v1721
        %v1723 = vpop.f32.mrf.mxu0
        %v1724 = vpop.f32.mrf.mxu0
        %v1725 = vpop.f32.mrf.mxu0
        %1726 = vdwg.mxu0
        %v1727 = vpack.c.bf16 %v752, %v752
        %v1728 = vld [vmem:[%s12] sm:$0xff]
        %v1729 = vld [vmem:[%s12 + $0x8] sm:$0xff]
        %v1730 = vld [vmem:[%s12 + $0x10] sm:$0xff]
        %v1731 = vld [vmem:[%s12 + $0x18] sm:$0xff]
        %v1732 = vld [vmem:[%s12 + $0x20] sm:$0xff]
        %v1733 = vld [vmem:[%s12 + $0x28] sm:$0xff]
        %v1734 = vld [vmem:[%s12 + $0x30] sm:$0xff]
        %v1735 = vld [vmem:[%s12 + $0x38] sm:$0xff]
        %v1736 = vld [vmem:[%s12 + $0x40] sm:$0xff]
        %v1737 = vld [vmem:[%s12 + $0x48] sm:$0xff]
        %v1738 = vld [vmem:[%s12 + $0x50] sm:$0xff]
        %v1739 = vld [vmem:[%s12 + $0x58] sm:$0xff]
        %v1740 = vld [vmem:[%s12 + $0x60] sm:$0xff]
        %v1741 = vld [vmem:[%s12 + $0x68] sm:$0xff]
        %v1742 = vld [vmem:[%s12 + $0x70] sm:$0xff]
        %v1743 = vld [vmem:[%s12 + $0x78] sm:$0xff]
        %v1744 = vld [vmem:[%s13] sm:$0x3]
        %v1746 = vlaneseq
        %v1747 = vshrl.u32 %v1746, 7
        %v1748 = vsub.s32 0, %v1747
        %v1749 = vrot.slane %v1744, %v1748
        %v1750 = vlaneseq
        %v1751 = vshrl.u32 %v1750, 7
        %v1752 = vsub.s32 1, %v1751
        %v1753 = vrot.slane %v1744, %v1752
        %v1772 = vunpack.c.l.b16 %v1728
        %v1773 = vunpack.c.h.b16 %v1728
        %v1774 = vunpack.c.l.b16 %v1729
        %v1775 = vunpack.c.h.b16 %v1729
        %v1776 = vunpack.c.l.b16 %v1730
        %v1777 = vunpack.c.h.b16 %v1730
        %v1778 = vunpack.c.l.b16 %v1731
        %v1779 = vunpack.c.h.b16 %v1731
        %v1780 = vunpack.c.l.b16 %v1732
        %v1781 = vunpack.c.h.b16 %v1732
        %v1782 = vunpack.c.l.b16 %v1733
        %v1783 = vunpack.c.h.b16 %v1733
        %v1784 = vunpack.c.l.b16 %v1734
        %v1785 = vunpack.c.h.b16 %v1734
        %v1786 = vunpack.c.l.b16 %v1735
        %v1787 = vunpack.c.h.b16 %v1735
        %v1788 = vunpack.c.l.b16 %v1736
        %v1789 = vunpack.c.h.b16 %v1736
        %v1790 = vunpack.c.l.b16 %v1737
        %v1791 = vunpack.c.h.b16 %v1737
        %v1792 = vunpack.c.l.b16 %v1738
        %v1793 = vunpack.c.h.b16 %v1738
        %v1794 = vunpack.c.l.b16 %v1739
        %v1795 = vunpack.c.h.b16 %v1739
        %v1796 = vunpack.c.l.b16 %v1740
        %v1797 = vunpack.c.h.b16 %v1740
        %v1798 = vunpack.c.l.b16 %v1741
        %v1799 = vunpack.c.h.b16 %v1741
        %v1800 = vunpack.c.l.b16 %v1742
        %v1801 = vunpack.c.h.b16 %v1742
        %v1802 = vunpack.c.l.b16 %v1743
        %v1803 = vunpack.c.h.b16 %v1743
        %v1804 = vpack.c.b16 %v1774, %v1772
        %v1805 = vpack.c.b16 %v1775, %v1773
        %v1806 = vpack.c.b16 %v1778, %v1776
        %v1807 = vpack.c.b16 %v1779, %v1777
        %v1808 = vpack.c.b16 %v1782, %v1780
        %v1809 = vpack.c.b16 %v1783, %v1781
        %v1810 = vpack.c.b16 %v1786, %v1784
        %v1811 = vpack.c.b16 %v1787, %v1785
        %v1812 = vpack.c.b16 %v1790, %v1788
        %v1813 = vpack.c.b16 %v1791, %v1789
        %v1814 = vpack.c.b16 %v1794, %v1792
        %v1815 = vpack.c.b16 %v1795, %v1793
        %v1816 = vpack.c.b16 %v1798, %v1796
        %v1817 = vpack.c.b16 %v1799, %v1797
        %v1818 = vpack.c.b16 %v1802, %v1800
        %v1819 = vpack.c.b16 %v1803, %v1801
        %1836 = vmatprep.subr.bf16.mxu0 %v1819
        %1837 = vmatpush1.bf16.msra.mxu0 %v1818
        %1838 = vmatprep.subr.bf16.mxu0 %v1817
        %1839 = vmatpush1.bf16.msra.mxu0 %v1816
        %1840 = vmatprep.subr.bf16.mxu0 %v1815
        %1841 = vmatpush1.bf16.msra.mxu0 %v1814
        %1842 = vmatprep.subr.bf16.mxu0 %v1813
        %1843 = vmatpush1.bf16.msra.mxu0 %v1812
        %1844 = vmatprep.subr.bf16.mxu0 %v1811
        %1845 = vmatpush1.bf16.msra.mxu0 %v1810
        %1846 = vmatprep.subr.bf16.mxu0 %v1809
        %1847 = vmatpush1.bf16.msra.mxu0 %v1808
        %1848 = vmatprep.subr.bf16.mxu0 %v1807
        %1849 = vmatpush1.bf16.msra.mxu0 %v1806
        %1850 = vmatprep.subr.bf16.mxu0 %v1805
        %1851 = vmatpush1.bf16.msra.mxu0 %v1804
        %1852 = vmatprep.subr.bf16.mxu0 0
        %1853 = vmatpush2.bf16.msra.mxu0 0
        %1854 = vmatprep.subr.bf16.mxu0 0
        %1855 = vmatpush2.bf16.msra.mxu0 0
        %1856 = vmatprep.subr.bf16.mxu0 0
        %1857 = vmatpush2.bf16.msra.mxu0 0
        %1858 = vmatprep.subr.bf16.mxu0 0
        %1859 = vmatpush2.bf16.msra.mxu0 0
        %1860 = vmatprep.subr.bf16.mxu0 0
        %1861 = vmatpush2.bf16.msra.mxu0 0
        %1862 = vmatprep.subr.bf16.mxu0 0
        %1863 = vmatpush2.bf16.msra.mxu0 0
        %1864 = vmatprep.subr.bf16.mxu0 0
        %1865 = vmatpush2.bf16.msra.mxu0 0
        %1866 = vmatprep.subr.bf16.mxu0 0
        %1867 = vmatpush2.bf16.msra.mxu0 0
        %1868 = vmatprep.mubr.bf16.mxu0 0
        %1869 = vmatmul.mubr.bf16.gmra.mxu0 %v1727
        %v1870 = vpop.f32.mrf.mxu0
        %v1871 = vadd.f32 %v1749, %v1870
        %v1872 = vpop.f32.mrf.mxu0
        %v1873 = vadd.f32 %v1753, %v1872
        %v1874 = vpop.f32.mrf.mxu0
        %v1875 = vpop.f32.mrf.mxu0
        %1876 = vdwg.mxu0
        %v1877 = vld [vmem:[%s3] sm:$0xff]
        %v1878 = vld [vmem:[%s14] sm:$0xf]
        %v1879 = vld [vmem:[%s14 + $0x4] sm:$0xf]
        %v1880 = vld [vmem:[%s14 + $0x8] sm:$0xf]
        %v1881 = vld [vmem:[%s14 + $0xc] sm:$0xf]
        %v1882 = vld [vmem:[%s14 + $0x10] sm:$0xf]
        %v1883 = vld [vmem:[%s14 + $0x14] sm:$0xf]
        %v1884 = vld [vmem:[%s14 + $0x18] sm:$0xf]
        %v1885 = vld [vmem:[%s14 + $0x1c] sm:$0xf]
        %v1886 = vld [vmem:[%s14 + $0x20] sm:$0xf]
        %v1887 = vld [vmem:[%s14 + $0x24] sm:$0xf]
        %v1888 = vld [vmem:[%s14 + $0x28] sm:$0xf]
        %v1889 = vld [vmem:[%s14 + $0x2c] sm:$0xf]
        %v1890 = vld [vmem:[%s14 + $0x30] sm:$0xf]
        %v1891 = vld [vmem:[%s14 + $0x34] sm:$0xf]
        %v1892 = vld [vmem:[%s14 + $0x38] sm:$0xf]
        %v1893 = vld [vmem:[%s14 + $0x3c] sm:$0xf]
        %v1894 = vld [vmem:[%s15] sm:$0x1]
        %v1895 = vld [vmem:[%s16] sm:$0x1]
        %v1896 = vld [vmem:[%s17] sm:$0x1]
        %v1897 = vmul.f32 %v1722, 0.17677669
        %v1898 = vpack.c.bf16 %v1897, %v1897
        %v1899 = vpack.c.bf16 %v1871, %v1871
        %v1900 = vpack.c.bf16 %v1873, %v1873
        %v1902 = vsel %vm1036, %v1898, 0
        %v1905 = vsel %vm1036, %v1899, 0
        %1907 = vmatprep.subr.bf16.mxu0 0
        %1908 = vmatpush1.bf16.xpose.msra.mxu0 0
        %1909 = vmatprep.subr.bf16.mxu0 0
        %1910 = vmatpush1.bf16.xpose.msra.mxu0 0
        %1911 = vmatprep.subr.bf16.mxu0 0
        %1912 = vmatpush1.bf16.xpose.msra.mxu0 0
        %1913 = vmatprep.subr.bf16.mxu0 0
        %1914 = vmatpush1.bf16.xpose.msra.mxu0 0
        %1915 = vmatprep.subr.bf16.mxu0 0
        %1916 = vmatpush1.bf16.xpose.msra.mxu0 0
        %1917 = vmatprep.subr.bf16.mxu0 0
        %1918 = vmatpush1.bf16.xpose.msra.mxu0 0
        %1919 = vmatprep.subr.bf16.mxu0 0
        %1920 = vmatpush1.bf16.xpose.msra.mxu0 0
        %1921 = vmatprep.subr.bf16.mxu0 0
        %1922 = vmatpush1.bf16.xpose.msra.mxu0 %v1905
        %1923 = vmatprep.subr.bf16.mxu0 0
        %1924 = vmatpush2.bf16.xpose.msra.mxu0 0
        %1925 = vmatprep.subr.bf16.mxu0 0
        %1926 = vmatpush2.bf16.xpose.msra.mxu0 0
        %1927 = vmatprep.subr.bf16.mxu0 0
        %1928 = vmatpush2.bf16.xpose.msra.mxu0 0
        %1929 = vmatprep.subr.bf16.mxu0 0
        %1930 = vmatpush2.bf16.xpose.msra.mxu0 0
        %1931 = vmatprep.subr.bf16.mxu0 0
        %1932 = vmatpush2.bf16.xpose.msra.mxu0 0
        %1933 = vmatprep.subr.bf16.mxu0 0
        %1934 = vmatpush2.bf16.xpose.msra.mxu0 0
        %1935 = vmatprep.subr.bf16.mxu0 0
        %1936 = vmatpush2.bf16.xpose.msra.mxu0 0
        %1937 = vmatprep.subr.bf16.mxu0 0
        %1938 = vmatpush2.bf16.xpose.msra.mxu0 0
        %1939 = vmatprep.mubr.bf16.mxu0 0
        %1940 = vmatmul.mubr.bf16.gmra.mxu0 %v1902
        %v1941 = vpop.f32.mrf.mxu0
        %v1942 = vadd.f32 %v1877, %v1941
        %v1943 = vpop.f32.mrf.mxu0
        %v1944 = vpop.f32.mrf.mxu0
        %v1945 = vpop.f32.mrf.mxu0
        %1946 = vdwg.mxu0
        %v1947 = vsel %vm1083, %v1942, -inf
        %1948 = vmax.xlane.f32.xlu0 %v1947
        %v1949 = vpop.xlane.xlu0 %1948
        %v1950 = vsub.f32 %v1942, %v1949
        %v1951 = vmul.f32 %v1950, 1.442695
        %v1952 = vpow.pop %v1951
        %v1953 = vsel %vm1083, %v1952, 0.0
        %1954 = vadd.xlane.f32.xlu0 %v1953
        %v1955 = vpop.xlane.xlu0 %1954
        %v1956 = vrcp.pop %v1955
        %v1957 = vmul.f32 %v1952, %v1956
        %v1958 = vpack.c.bf16 %v1957, %v1957
        %v1960 = vsel %vm1083, %v1958, 0
        %v1963 = vsel %vm1099, %v1900, 0
        %1965 = vmatprep.subr.bf16.mxu0 0
        %1966 = vmatpush1.bf16.msra.mxu0 0
        %1967 = vmatprep.subr.bf16.mxu0 0
        %1968 = vmatpush1.bf16.msra.mxu0 0
        %1969 = vmatprep.subr.bf16.mxu0 0
        %1970 = vmatpush1.bf16.msra.mxu0 0
        %1971 = vmatprep.subr.bf16.mxu0 0
        %1972 = vmatpush1.bf16.msra.mxu0 0
        %1973 = vmatprep.subr.bf16.mxu0 0
        %1974 = vmatpush1.bf16.msra.mxu0 0
        %1975 = vmatprep.subr.bf16.mxu0 0
        %1976 = vmatpush1.bf16.msra.mxu0 0
        %1977 = vmatprep.subr.bf16.mxu0 0
        %1978 = vmatpush1.bf16.msra.mxu0 0
        %1979 = vmatprep.subr.bf16.mxu0 0
        %1980 = vmatpush1.bf16.msra.mxu0 %v1963
        %1981 = vmatprep.subr.bf16.mxu0 0
        %1982 = vmatpush2.bf16.msra.mxu0 0
        %1983 = vmatprep.subr.bf16.mxu0 0
        %1984 = vmatpush2.bf16.msra.mxu0 0
        %1985 = vmatprep.subr.bf16.mxu0 0
        %1986 = vmatpush2.bf16.msra.mxu0 0
        %1987 = vmatprep.subr.bf16.mxu0 0
        %1988 = vmatpush2.bf16.msra.mxu0 0
        %1989 = vmatprep.subr.bf16.mxu0 0
        %1990 = vmatpush2.bf16.msra.mxu0 0
        %1991 = vmatprep.subr.bf16.mxu0 0
        %1992 = vmatpush2.bf16.msra.mxu0 0
        %1993 = vmatprep.subr.bf16.mxu0 0
        %1994 = vmatpush2.bf16.msra.mxu0 0
        %1995 = vmatprep.subr.bf16.mxu0 0
        %1996 = vmatpush2.bf16.msra.mxu0 0
        %1997 = vmatprep.mubr.bf16.mxu0 0
        %1998 = vmatmul.mubr.bf16.gmra.mxu0 %v1960
        %v1999 = vpop.f32.mrf.mxu0
        %v2000 = vadd.f32 0.0, %v1999
        %v2001 = vpop.f32.mrf.mxu0
        %v2002 = vpop.f32.mrf.mxu0
        %v2003 = vpop.f32.mrf.mxu0
        %2004 = vdwg.mxu0
        %2006 = vrot.lane.b32.xlu0 %v1898, 96
        %v2007 = vpop.permute.xlu0 %2006
        %2009 = vrot.lane.b32.xlu0 %v1899, 96
        %v2010 = vpop.permute.xlu0 %2009
        %v2012 = vsel %vm1036, %v2007, 0
        %v2015 = vsel %vm1036, %v2010, 0
        %2017 = vmatprep.subr.bf16.mxu0 0
        %2018 = vmatpush1.bf16.xpose.msra.mxu0 0
        %2019 = vmatprep.subr.bf16.mxu0 0
        %2020 = vmatpush1.bf16.xpose.msra.mxu0 0
        %2021 = vmatprep.subr.bf16.mxu0 0
        %2022 = vmatpush1.bf16.xpose.msra.mxu0 0
        %2023 = vmatprep.subr.bf16.mxu0 0
        %2024 = vmatpush1.bf16.xpose.msra.mxu0 0
        %2025 = vmatprep.subr.bf16.mxu0 0
        %2026 = vmatpush1.bf16.xpose.msra.mxu0 0
        %2027 = vmatprep.subr.bf16.mxu0 0
        %2028 = vmatpush1.bf16.xpose.msra.mxu0 0
        %2029 = vmatprep.subr.bf16.mxu0 0
        %2030 = vmatpush1.bf16.xpose.msra.mxu0 0
        %2031 = vmatprep.subr.bf16.mxu0 0
        %2032 = vmatpush1.bf16.xpose.msra.mxu0 %v2015
        %2033 = vmatprep.subr.bf16.mxu0 0
        %2034 = vmatpush2.bf16.xpose.msra.mxu0 0
        %2035 = vmatprep.subr.bf16.mxu0 0
        %2036 = vmatpush2.bf16.xpose.msra.mxu0 0
        %2037 = vmatprep.subr.bf16.mxu0 0
        %2038 = vmatpush2.bf16.xpose.msra.mxu0 0
        %2039 = vmatprep.subr.bf16.mxu0 0
        %2040 = vmatpush2.bf16.xpose.msra.mxu0 0
        %2041 = vmatprep.subr.bf16.mxu0 0
        %2042 = vmatpush2.bf16.xpose.msra.mxu0 0
        %2043 = vmatprep.subr.bf16.mxu0 0
        %2044 = vmatpush2.bf16.xpose.msra.mxu0 0
        %2045 = vmatprep.subr.bf16.mxu0 0
        %2046 = vmatpush2.bf16.xpose.msra.mxu0 0
        %2047 = vmatprep.subr.bf16.mxu0 0
        %2048 = vmatpush2.bf16.xpose.msra.mxu0 0
        %2049 = vmatprep.mubr.bf16.mxu0 0
        %2050 = vmatmul.mubr.bf16.gmra.mxu0 %v2012
        %v2051 = vpop.f32.mrf.mxu0
        %v2052 = vadd.f32 %v1877, %v2051
        %v2053 = vpop.f32.mrf.mxu0
        %v2054 = vpop.f32.mrf.mxu0
        %v2055 = vpop.f32.mrf.mxu0
        %2056 = vdwg.mxu0
        %v2057 = vsel %vm1083, %v2052, -inf
        %2058 = vmax.xlane.f32.xlu0 %v2057
        %v2059 = vpop.xlane.xlu0 %2058
        %v2060 = vsub.f32 %v2052, %v2059
        %v2061 = vmul.f32 %v2060, 1.442695
        %v2062 = vpow.pop %v2061
        %v2063 = vsel %vm1083, %v2062, 0.0
        %2064 = vadd.xlane.f32.xlu0 %v2063
        %v2065 = vpop.xlane.xlu0 %2064
        %v2066 = vrcp.pop %v2065
        %v2067 = vmul.f32 %v2062, %v2066
        %v2068 = vpack.c.bf16 %v2067, %v2067
        %2070 = vrot.lane.b32.xlu0 %v1900, 96
        %v2071 = vpop.permute.xlu0 %2070
        %v2073 = vsel %vm1083, %v2068, 0
        %v2076 = vsel %vm1099, %v2071, 0
        %2078 = vmatprep.subr.bf16.mxu0 0
        %2079 = vmatpush1.bf16.msra.mxu0 0
        %2080 = vmatprep.subr.bf16.mxu0 0
        %2081 = vmatpush1.bf16.msra.mxu0 0
        %2082 = vmatprep.subr.bf16.mxu0 0
        %2083 = vmatpush1.bf16.msra.mxu0 0
        %2084 = vmatprep.subr.bf16.mxu0 0
        %2085 = vmatpush1.bf16.msra.mxu0 0
        %2086 = vmatprep.subr.bf16.mxu0 0
        %2087 = vmatpush1.bf16.msra.mxu0 0
        %2088 = vmatprep.subr.bf16.mxu0 0
        %2089 = vmatpush1.bf16.msra.mxu0 0
        %2090 = vmatprep.subr.bf16.mxu0 0
        %2091 = vmatpush1.bf16.msra.mxu0 0
        %2092 = vmatprep.subr.bf16.mxu0 0
        %2093 = vmatpush1.bf16.msra.mxu0 %v2076
        %2094 = vmatprep.subr.bf16.mxu0 0
        %2095 = vmatpush2.bf16.msra.mxu0 0
        %2096 = vmatprep.subr.bf16.mxu0 0
        %2097 = vmatpush2.bf16.msra.mxu0 0
        %2098 = vmatprep.subr.bf16.mxu0 0
        %2099 = vmatpush2.bf16.msra.mxu0 0
        %2100 = vmatprep.subr.bf16.mxu0 0
        %2101 = vmatpush2.bf16.msra.mxu0 0
        %2102 = vmatprep.subr.bf16.mxu0 0
        %2103 = vmatpush2.bf16.msra.mxu0 0
        %2104 = vmatprep.subr.bf16.mxu0 0
        %2105 = vmatpush2.bf16.msra.mxu0 0
        %2106 = vmatprep.subr.bf16.mxu0 0
        %2107 = vmatpush2.bf16.msra.mxu0 0
        %2108 = vmatprep.subr.bf16.mxu0 0
        %2109 = vmatpush2.bf16.msra.mxu0 0
        %2110 = vmatprep.mubr.bf16.mxu0 0
        %2111 = vmatmul.mubr.bf16.gmra.mxu0 %v2073
        %v2112 = vpop.f32.mrf.mxu0
        %v2113 = vadd.f32 0.0, %v2112
        %v2114 = vpop.f32.mrf.mxu0
        %v2115 = vpop.f32.mrf.mxu0
        %v2116 = vpop.f32.mrf.mxu0
        %2117 = vdwg.mxu0
        %2118 = vrot.lane.b32.xlu0 %v1898, 64
        %v2119 = vpop.permute.xlu0 %2118
        %2120 = vrot.lane.b32.xlu0 %v1899, 64
        %v2121 = vpop.permute.xlu0 %2120
        %v2123 = vsel %vm1036, %v2119, 0
        %v2126 = vsel %vm1036, %v2121, 0
        %2128 = vmatprep.subr.bf16.mxu0 0
        %2129 = vmatpush1.bf16.xpose.msra.mxu0 0
        %2130 = vmatprep.subr.bf16.mxu0 0
        %2131 = vmatpush1.bf16.xpose.msra.mxu0 0
        %2132 = vmatprep.subr.bf16.mxu0 0
        %2133 = vmatpush1.bf16.xpose.msra.mxu0 0
        %2134 = vmatprep.subr.bf16.mxu0 0
        %2135 = vmatpush1.bf16.xpose.msra.mxu0 0
        %2136 = vmatprep.subr.bf16.mxu0 0
        %2137 = vmatpush1.bf16.xpose.msra.mxu0 0
        %2138 = vmatprep.subr.bf16.mxu0 0
        %2139 = vmatpush1.bf16.xpose.msra.mxu0 0
        %2140 = vmatprep.subr.bf16.mxu0 0
        %2141 = vmatpush1.bf16.xpose.msra.mxu0 0
        %2142 = vmatprep.subr.bf16.mxu0 0
        %2143 = vmatpush1.bf16.xpose.msra.mxu0 %v2126
        %2144 = vmatprep.subr.bf16.mxu0 0
        %2145 = vmatpush2.bf16.xpose.msra.mxu0 0
        %2146 = vmatprep.subr.bf16.mxu0 0
        %2147 = vmatpush2.bf16.xpose.msra.mxu0 0
        %2148 = vmatprep.subr.bf16.mxu0 0
        %2149 = vmatpush2.bf16.xpose.msra.mxu0 0
        %2150 = vmatprep.subr.bf16.mxu0 0
        %2151 = vmatpush2.bf16.xpose.msra.mxu0 0
        %2152 = vmatprep.subr.bf16.mxu0 0
        %2153 = vmatpush2.bf16.xpose.msra.mxu0 0
        %2154 = vmatprep.subr.bf16.mxu0 0
        %2155 = vmatpush2.bf16.xpose.msra.mxu0 0
        %2156 = vmatprep.subr.bf16.mxu0 0
        %2157 = vmatpush2.bf16.xpose.msra.mxu0 0
        %2158 = vmatprep.subr.bf16.mxu0 0
        %2159 = vmatpush2.bf16.xpose.msra.mxu0 0
        %2160 = vmatprep.mubr.bf16.mxu0 0
        %2161 = vmatmul.mubr.bf16.gmra.mxu0 %v2123
        %v2162 = vpop.f32.mrf.mxu0
        %v2163 = vadd.f32 %v1877, %v2162
        %v2164 = vpop.f32.mrf.mxu0
        %v2165 = vpop.f32.mrf.mxu0
        %v2166 = vpop.f32.mrf.mxu0
        %2167 = vdwg.mxu0
        %v2168 = vsel %vm1083, %v2163, -inf
        %2169 = vmax.xlane.f32.xlu0 %v2168
        %v2170 = vpop.xlane.xlu0 %2169
        %v2171 = vsub.f32 %v2163, %v2170
        %v2172 = vmul.f32 %v2171, 1.442695
        %v2173 = vpow.pop %v2172
        %v2174 = vsel %vm1083, %v2173, 0.0
        %2175 = vadd.xlane.f32.xlu0 %v2174
        %v2176 = vpop.xlane.xlu0 %2175
        %v2177 = vrcp.pop %v2176
        %v2178 = vmul.f32 %v2173, %v2177
        %v2179 = vpack.c.bf16 %v2178, %v2178
        %2180 = vrot.lane.b32.xlu0 %v1900, 64
        %v2181 = vpop.permute.xlu0 %2180
        %v2183 = vsel %vm1083, %v2179, 0
        %v2186 = vsel %vm1099, %v2181, 0
        %2188 = vmatprep.subr.bf16.mxu0 0
        %2189 = vmatpush1.bf16.msra.mxu0 0
        %2190 = vmatprep.subr.bf16.mxu0 0
        %2191 = vmatpush1.bf16.msra.mxu0 0
        %2192 = vmatprep.subr.bf16.mxu0 0
        %2193 = vmatpush1.bf16.msra.mxu0 0
        %2194 = vmatprep.subr.bf16.mxu0 0
        %2195 = vmatpush1.bf16.msra.mxu0 0
        %2196 = vmatprep.subr.bf16.mxu0 0
        %2197 = vmatpush1.bf16.msra.mxu0 0
        %2198 = vmatprep.subr.bf16.mxu0 0
        %2199 = vmatpush1.bf16.msra.mxu0 0
        %2200 = vmatprep.subr.bf16.mxu0 0
        %2201 = vmatpush1.bf16.msra.mxu0 0
        %2202 = vmatprep.subr.bf16.mxu0 0
        %2203 = vmatpush1.bf16.msra.mxu0 %v2186
        %2204 = vmatprep.subr.bf16.mxu0 0
        %2205 = vmatpush2.bf16.msra.mxu0 0
        %2206 = vmatprep.subr.bf16.mxu0 0
        %2207 = vmatpush2.bf16.msra.mxu0 0
        %2208 = vmatprep.subr.bf16.mxu0 0
        %2209 = vmatpush2.bf16.msra.mxu0 0
        %2210 = vmatprep.subr.bf16.mxu0 0
        %2211 = vmatpush2.bf16.msra.mxu0 0
        %2212 = vmatprep.subr.bf16.mxu0 0
        %2213 = vmatpush2.bf16.msra.mxu0 0
        %2214 = vmatprep.subr.bf16.mxu0 0
        %2215 = vmatpush2.bf16.msra.mxu0 0
        %2216 = vmatprep.subr.bf16.mxu0 0
        %2217 = vmatpush2.bf16.msra.mxu0 0
        %2218 = vmatprep.subr.bf16.mxu0 0
        %2219 = vmatpush2.bf16.msra.mxu0 0
        %2220 = vmatprep.mubr.bf16.mxu0 0
        %2221 = vmatmul.mubr.bf16.gmra.mxu0 %v2183
        %v2222 = vpop.f32.mrf.mxu0
        %v2223 = vadd.f32 0.0, %v2222
        %v2224 = vpop.f32.mrf.mxu0
        %v2225 = vpop.f32.mrf.mxu0
        %v2226 = vpop.f32.mrf.mxu0
        %2227 = vdwg.mxu0
        %2228 = vrot.lane.b32.xlu0 %v1898, 32
        %v2229 = vpop.permute.xlu0 %2228
        %2230 = vrot.lane.b32.xlu0 %v1899, 32
        %v2231 = vpop.permute.xlu0 %2230
        %v2233 = vsel %vm1036, %v2229, 0
        %v2236 = vsel %vm1036, %v2231, 0
        %2238 = vmatprep.subr.bf16.mxu0 0
        %2239 = vmatpush1.bf16.xpose.msra.mxu0 0
        %2240 = vmatprep.subr.bf16.mxu0 0
        %2241 = vmatpush1.bf16.xpose.msra.mxu0 0
        %2242 = vmatprep.subr.bf16.mxu0 0
        %2243 = vmatpush1.bf16.xpose.msra.mxu0 0
        %2244 = vmatprep.subr.bf16.mxu0 0
        %2245 = vmatpush1.bf16.xpose.msra.mxu0 0
        %2246 = vmatprep.subr.bf16.mxu0 0
        %2247 = vmatpush1.bf16.xpose.msra.mxu0 0
        %2248 = vmatprep.subr.bf16.mxu0 0
        %2249 = vmatpush1.bf16.xpose.msra.mxu0 0
        %2250 = vmatprep.subr.bf16.mxu0 0
        %2251 = vmatpush1.bf16.xpose.msra.mxu0 0
        %2252 = vmatprep.subr.bf16.mxu0 0
        %2253 = vmatpush1.bf16.xpose.msra.mxu0 %v2236
        %2254 = vmatprep.subr.bf16.mxu0 0
        %2255 = vmatpush2.bf16.xpose.msra.mxu0 0
        %2256 = vmatprep.subr.bf16.mxu0 0
        %2257 = vmatpush2.bf16.xpose.msra.mxu0 0
        %2258 = vmatprep.subr.bf16.mxu0 0
        %2259 = vmatpush2.bf16.xpose.msra.mxu0 0
        %2260 = vmatprep.subr.bf16.mxu0 0
        %2261 = vmatpush2.bf16.xpose.msra.mxu0 0
        %2262 = vmatprep.subr.bf16.mxu0 0
        %2263 = vmatpush2.bf16.xpose.msra.mxu0 0
        %2264 = vmatprep.subr.bf16.mxu0 0
        %2265 = vmatpush2.bf16.xpose.msra.mxu0 0
        %2266 = vmatprep.subr.bf16.mxu0 0
        %2267 = vmatpush2.bf16.xpose.msra.mxu0 0
        %2268 = vmatprep.subr.bf16.mxu0 0
        %2269 = vmatpush2.bf16.xpose.msra.mxu0 0
        %2270 = vmatprep.mubr.bf16.mxu0 0
        %2271 = vmatmul.mubr.bf16.gmra.mxu0 %v2233
        %v2272 = vpop.f32.mrf.mxu0
        %v2273 = vadd.f32 %v1877, %v2272
        %v2274 = vpop.f32.mrf.mxu0
        %v2275 = vpop.f32.mrf.mxu0
        %v2276 = vpop.f32.mrf.mxu0
        %2277 = vdwg.mxu0
        %v2278 = vsel %vm1083, %v2273, -inf
        %2279 = vmax.xlane.f32.xlu0 %v2278
        %v2280 = vpop.xlane.xlu0 %2279
        %v2281 = vsub.f32 %v2273, %v2280
        %v2282 = vmul.f32 %v2281, 1.442695
        %v2283 = vpow.pop %v2282
        %v2284 = vsel %vm1083, %v2283, 0.0
        %2285 = vadd.xlane.f32.xlu0 %v2284
        %v2286 = vpop.xlane.xlu0 %2285
        %v2287 = vrcp.pop %v2286
        %v2288 = vmul.f32 %v2283, %v2287
        %v2289 = vpack.c.bf16 %v2288, %v2288
        %2290 = vrot.lane.b32.xlu0 %v1900, 32
        %v2291 = vpop.permute.xlu0 %2290
        %v2293 = vsel %vm1083, %v2289, 0
        %v2296 = vsel %vm1099, %v2291, 0
        %2298 = vmatprep.subr.bf16.mxu0 0
        %2299 = vmatpush1.bf16.msra.mxu0 0
        %2300 = vmatprep.subr.bf16.mxu0 0
        %2301 = vmatpush1.bf16.msra.mxu0 0
        %2302 = vmatprep.subr.bf16.mxu0 0
        %2303 = vmatpush1.bf16.msra.mxu0 0
        %2304 = vmatprep.subr.bf16.mxu0 0
        %2305 = vmatpush1.bf16.msra.mxu0 0
        %2306 = vmatprep.subr.bf16.mxu0 0
        %2307 = vmatpush1.bf16.msra.mxu0 0
        %2308 = vmatprep.subr.bf16.mxu0 0
        %2309 = vmatpush1.bf16.msra.mxu0 0
        %2310 = vmatprep.subr.bf16.mxu0 0
        %2311 = vmatpush1.bf16.msra.mxu0 0
        %2312 = vmatprep.subr.bf16.mxu0 0
        %2313 = vmatpush1.bf16.msra.mxu0 %v2296
        %2314 = vmatprep.subr.bf16.mxu0 0
        %2315 = vmatpush2.bf16.msra.mxu0 0
        %2316 = vmatprep.subr.bf16.mxu0 0
        %2317 = vmatpush2.bf16.msra.mxu0 0
        %2318 = vmatprep.subr.bf16.mxu0 0
        %2319 = vmatpush2.bf16.msra.mxu0 0
        %2320 = vmatprep.subr.bf16.mxu0 0
        %2321 = vmatpush2.bf16.msra.mxu0 0
        %2322 = vmatprep.subr.bf16.mxu0 0
        %2323 = vmatpush2.bf16.msra.mxu0 0
        %2324 = vmatprep.subr.bf16.mxu0 0
        %2325 = vmatpush2.bf16.msra.mxu0 0
        %2326 = vmatprep.subr.bf16.mxu0 0
        %2327 = vmatpush2.bf16.msra.mxu0 0
        %2328 = vmatprep.subr.bf16.mxu0 0
        %2329 = vmatpush2.bf16.msra.mxu0 0
        %2330 = vmatprep.mubr.bf16.mxu0 0
        %2331 = vmatmul.mubr.bf16.gmra.mxu0 %v2293
        %v2332 = vpop.f32.mrf.mxu0
        %v2333 = vadd.f32 0.0, %v2332
        %v2334 = vpop.f32.mrf.mxu0
        %v2335 = vpop.f32.mrf.mxu0
        %v2336 = vpop.f32.mrf.mxu0
        %2337 = vdwg.mxu0
        %2339 = vrot.lane.b32.xlu0 %v2113, 32
        %v2340 = vpop.permute.xlu0 %2339
        %2343 = vrot.lane.b32.xlu0 %v2223, 64
        %v2344 = vpop.permute.xlu0 %2343
        %2347 = vrot.lane.b32.xlu0 %v2333, 96
        %v2348 = vpop.permute.xlu0 %2347
        %v2350 = vsel %vm1036, %v2000, %v2340
        %v2351 = vsel %vm1489, %v2350, %v2344
        %v2352 = vsel %vm1491, %v2351, %v2348
        %v2353 = vpack.c.bf16 %v2352, %v2352
        %v2355 = vlaneseq
        %v2356 = vshrl.u32 %v2355, 7
        %v2357 = vsub.s32 0, %v2356
        %v2358 = vrot.slane %v1894, %v2357
        %v2376 = vunpack.c.l.b16 %v1878
        %v2377 = vunpack.c.l.b16 %v1879
        %v2378 = vunpack.c.l.b16 %v1880
        %v2379 = vunpack.c.l.b16 %v1881
        %v2380 = vunpack.c.l.b16 %v1882
        %v2381 = vunpack.c.l.b16 %v1883
        %v2382 = vunpack.c.l.b16 %v1884
        %v2383 = vunpack.c.l.b16 %v1885
        %v2384 = vunpack.c.l.b16 %v1886
        %v2385 = vunpack.c.l.b16 %v1887
        %v2386 = vunpack.c.l.b16 %v1888
        %v2387 = vunpack.c.l.b16 %v1889
        %v2388 = vunpack.c.l.b16 %v1890
        %v2389 = vunpack.c.l.b16 %v1891
        %v2390 = vunpack.c.l.b16 %v1892
        %v2391 = vunpack.c.l.b16 %v1893
        %v2392 = vpack.c.b16 %v2377, %v2376
        %v2393 = vpack.c.b16 %v2379, %v2378
        %v2394 = vpack.c.b16 %v2381, %v2380
        %v2395 = vpack.c.b16 %v2383, %v2382
        %v2396 = vpack.c.b16 %v2385, %v2384
        %v2397 = vpack.c.b16 %v2387, %v2386
        %v2398 = vpack.c.b16 %v2389, %v2388
        %v2399 = vpack.c.b16 %v2391, %v2390
        %2408 = vmatprep.subr.bf16.mxu0 0
        %2409 = vmatpush1.bf16.msra.mxu0 %v2399
        %2410 = vmatprep.subr.bf16.mxu0 0
        %2411 = vmatpush1.bf16.msra.mxu0 %v2398
        %2412 = vmatprep.subr.bf16.mxu0 0
        %2413 = vmatpush1.bf16.msra.mxu0 %v2397
        %2414 = vmatprep.subr.bf16.mxu0 0
        %2415 = vmatpush1.bf16.msra.mxu0 %v2396
        %2416 = vmatprep.subr.bf16.mxu0 0
        %2417 = vmatpush1.bf16.msra.mxu0 %v2395
        %2418 = vmatprep.subr.bf16.mxu0 0
        %2419 = vmatpush1.bf16.msra.mxu0 %v2394
        %2420 = vmatprep.subr.bf16.mxu0 0
        %2421 = vmatpush1.bf16.msra.mxu0 %v2393
        %2422 = vmatprep.subr.bf16.mxu0 0
        %2423 = vmatpush1.bf16.msra.mxu0 %v2392
        %2424 = vmatprep.subr.bf16.mxu0 0
        %2425 = vmatpush2.bf16.msra.mxu0 0
        %2426 = vmatprep.subr.bf16.mxu0 0
        %2427 = vmatpush2.bf16.msra.mxu0 0
        %2428 = vmatprep.subr.bf16.mxu0 0
        %2429 = vmatpush2.bf16.msra.mxu0 0
        %2430 = vmatprep.subr.bf16.mxu0 0
        %2431 = vmatpush2.bf16.msra.mxu0 0
        %2432 = vmatprep.subr.bf16.mxu0 0
        %2433 = vmatpush2.bf16.msra.mxu0 0
        %2434 = vmatprep.subr.bf16.mxu0 0
        %2435 = vmatpush2.bf16.msra.mxu0 0
        %2436 = vmatprep.subr.bf16.mxu0 0
        %2437 = vmatpush2.bf16.msra.mxu0 0
        %2438 = vmatprep.subr.bf16.mxu0 0
        %2439 = vmatpush2.bf16.msra.mxu0 0
        %2440 = vmatprep.mubr.bf16.mxu0 0
        %2441 = vmatmul.mubr.bf16.gmra.mxu0 %v2353
        %v2442 = vpop.f32.mrf.mxu0
        %v2443 = vadd.f32 %v2358, %v2442
        %v2444 = vpop.f32.mrf.mxu0
        %v2445 = vpop.f32.mrf.mxu0
        %v2446 = vpop.f32.mrf.mxu0
        %2447 = vdwg.mxu0
        %v2448 = vadd.f32 %v2443, %v1614
        %2449 = vadd.xlane.f32.xlu0 %v2448
        %v2450 = vpop.xlane.xlu0 %2449
        %v2451 = vmul.f32 %v2450, %v1591
        %v2452 = vsub.f32 %v2448, %v2451
        %v2453 = vmul.f32 %v2452, %v2452
        %2454 = vadd.xlane.f32.xlu0 %v2453
        %v2455 = vpop.xlane.xlu0 %2454
        %v2456 = vmul.f32 %v2455, %v1591
        %v2457 = vadd.f32 %v2456, 1e-05
        %v2458 = vrsqrt.pop %v2457
        %v2459 = vmul.f32 %v2452, %v2458
        %v2461 = vlaneseq
        %v2462 = vshrl.u32 %v2461, 7
        %v2463 = vsub.s32 0, %v2462
        %v2464 = vrot.slane %v1895, %v2463
        %v2466 = vmul.f32 %v2459, %v2464
        %v2468 = vlaneseq
        %v2469 = vshrl.u32 %v2468, 7
        %v2470 = vsub.s32 0, %v2469
        %v2471 = vrot.slane %v1896, %v2470
        %v2473 = vadd.f32 %v2466, %v2471
        %v2474 = vpack.c.bf16 %v2473, %v2473
        %v2475 = vld [vmem:[%s18] sm:$0xff]
        %v2476 = vld [vmem:[%s18 + $0x8] sm:$0xff]
        %v2477 = vld [vmem:[%s18 + $0x10] sm:$0xff]
        %v2478 = vld [vmem:[%s18 + $0x18] sm:$0xff]
        %v2479 = vld [vmem:[%s18 + $0x20] sm:$0xff]
        %v2480 = vld [vmem:[%s18 + $0x28] sm:$0xff]
        %v2481 = vld [vmem:[%s18 + $0x30] sm:$0xff]
        %v2482 = vld [vmem:[%s18 + $0x38] sm:$0xff]
        %v2483 = vld [vmem:[%s18 + $0x40] sm:$0xff]
        %v2484 = vld [vmem:[%s18 + $0x48] sm:$0xff]
        %v2485 = vld [vmem:[%s18 + $0x50] sm:$0xff]
        %v2486 = vld [vmem:[%s18 + $0x58] sm:$0xff]
        %v2487 = vld [vmem:[%s18 + $0x60] sm:$0xff]
        %v2488 = vld [vmem:[%s18 + $0x68] sm:$0xff]
        %v2489 = vld [vmem:[%s18 + $0x70] sm:$0xff]
        %v2490 = vld [vmem:[%s18 + $0x78] sm:$0xff]
        %v2491 = vld [vmem:[%s19] sm:$0x3]
        %v2493 = vlaneseq
        %v2494 = vshrl.u32 %v2493, 7
        %v2495 = vsub.s32 0, %v2494
        %v2496 = vrot.slane %v2491, %v2495
        %v2497 = vlaneseq
        %v2498 = vshrl.u32 %v2497, 7
        %v2499 = vsub.s32 1, %v2498
        %v2500 = vrot.slane %v2491, %v2499
        %v2519 = vunpack.c.l.b16 %v2475
        %v2520 = vunpack.c.h.b16 %v2475
        %v2521 = vunpack.c.l.b16 %v2476
        %v2522 = vunpack.c.h.b16 %v2476
        %v2523 = vunpack.c.l.b16 %v2477
        %v2524 = vunpack.c.h.b16 %v2477
        %v2525 = vunpack.c.l.b16 %v2478
        %v2526 = vunpack.c.h.b16 %v2478
        %v2527 = vunpack.c.l.b16 %v2479
        %v2528 = vunpack.c.h.b16 %v2479
        %v2529 = vunpack.c.l.b16 %v2480
        %v2530 = vunpack.c.h.b16 %v2480
        %v2531 = vunpack.c.l.b16 %v2481
        %v2532 = vunpack.c.h.b16 %v2481
        %v2533 = vunpack.c.l.b16 %v2482
        %v2534 = vunpack.c.h.b16 %v2482
        %v2535 = vunpack.c.l.b16 %v2483
        %v2536 = vunpack.c.h.b16 %v2483
        %v2537 = vunpack.c.l.b16 %v2484
        %v2538 = vunpack.c.h.b16 %v2484
        %v2539 = vunpack.c.l.b16 %v2485
        %v2540 = vunpack.c.h.b16 %v2485
        %v2541 = vunpack.c.l.b16 %v2486
        %v2542 = vunpack.c.h.b16 %v2486
        %v2543 = vunpack.c.l.b16 %v2487
        %v2544 = vunpack.c.h.b16 %v2487
        %v2545 = vunpack.c.l.b16 %v2488
        %v2546 = vunpack.c.h.b16 %v2488
        %v2547 = vunpack.c.l.b16 %v2489
        %v2548 = vunpack.c.h.b16 %v2489
        %v2549 = vunpack.c.l.b16 %v2490
        %v2550 = vunpack.c.h.b16 %v2490
        %v2551 = vpack.c.b16 %v2521, %v2519
        %v2552 = vpack.c.b16 %v2522, %v2520
        %v2553 = vpack.c.b16 %v2525, %v2523
        %v2554 = vpack.c.b16 %v2526, %v2524
        %v2555 = vpack.c.b16 %v2529, %v2527
        %v2556 = vpack.c.b16 %v2530, %v2528
        %v2557 = vpack.c.b16 %v2533, %v2531
        %v2558 = vpack.c.b16 %v2534, %v2532
        %v2559 = vpack.c.b16 %v2537, %v2535
        %v2560 = vpack.c.b16 %v2538, %v2536
        %v2561 = vpack.c.b16 %v2541, %v2539
        %v2562 = vpack.c.b16 %v2542, %v2540
        %v2563 = vpack.c.b16 %v2545, %v2543
        %v2564 = vpack.c.b16 %v2546, %v2544
        %v2565 = vpack.c.b16 %v2549, %v2547
        %v2566 = vpack.c.b16 %v2550, %v2548
        %2583 = vmatprep.subr.bf16.mxu0 %v2566
        %2584 = vmatpush1.bf16.msra.mxu0 %v2565
        %2585 = vmatprep.subr.bf16.mxu0 %v2564
        %2586 = vmatpush1.bf16.msra.mxu0 %v2563
        %2587 = vmatprep.subr.bf16.mxu0 %v2562
        %2588 = vmatpush1.bf16.msra.mxu0 %v2561
        %2589 = vmatprep.subr.bf16.mxu0 %v2560
        %2590 = vmatpush1.bf16.msra.mxu0 %v2559
        %2591 = vmatprep.subr.bf16.mxu0 %v2558
        %2592 = vmatpush1.bf16.msra.mxu0 %v2557
        %2593 = vmatprep.subr.bf16.mxu0 %v2556
        %2594 = vmatpush1.bf16.msra.mxu0 %v2555
        %2595 = vmatprep.subr.bf16.mxu0 %v2554
        %2596 = vmatpush1.bf16.msra.mxu0 %v2553
        %2597 = vmatprep.subr.bf16.mxu0 %v2552
        %2598 = vmatpush1.bf16.msra.mxu0 %v2551
        %2599 = vmatprep.subr.bf16.mxu0 0
        %2600 = vmatpush2.bf16.msra.mxu0 0
        %2601 = vmatprep.subr.bf16.mxu0 0
        %2602 = vmatpush2.bf16.msra.mxu0 0
        %2603 = vmatprep.subr.bf16.mxu0 0
        %2604 = vmatpush2.bf16.msra.mxu0 0
        %2605 = vmatprep.subr.bf16.mxu0 0
        %2606 = vmatpush2.bf16.msra.mxu0 0
        %2607 = vmatprep.subr.bf16.mxu0 0
        %2608 = vmatpush2.bf16.msra.mxu0 0
        %2609 = vmatprep.subr.bf16.mxu0 0
        %2610 = vmatpush2.bf16.msra.mxu0 0
        %2611 = vmatprep.subr.bf16.mxu0 0
        %2612 = vmatpush2.bf16.msra.mxu0 0
        %2613 = vmatprep.subr.bf16.mxu0 0
        %2614 = vmatpush2.bf16.msra.mxu0 0
        %2615 = vmatprep.mubr.bf16.mxu0 0
        %2616 = vmatmul.mubr.bf16.gmra.mxu0 %v2474
        %v2617 = vpop.f32.mrf.mxu0
        %v2618 = vadd.f32 %v2496, %v2617
        %v2619 = vpop.f32.mrf.mxu0
        %v2620 = vadd.f32 %v2500, %v2619
        %v2621 = vpop.f32.mrf.mxu0
        %v2622 = vpop.f32.mrf.mxu0
        %2623 = vdwg.mxu0
        %v2624 = vmax.f32 %v2618, 0.0
        %v2625 = vmax.f32 %v2620, 0.0
        %v2626 = vpack.c.bf16 %v2624, %v2624
        %v2627 = vpack.c.bf16 %v2625, %v2625
        %v2628 = vld [vmem:[%s20] sm:$0xf]
        %v2629 = vld [vmem:[%s20 + $0x4] sm:$0xf]
        %v2630 = vld [vmem:[%s20 + $0x8] sm:$0xf]
        %v2631 = vld [vmem:[%s20 + $0xc] sm:$0xf]
        %v2632 = vld [vmem:[%s20 + $0x10] sm:$0xf]
        %v2633 = vld [vmem:[%s20 + $0x14] sm:$0xf]
        %v2634 = vld [vmem:[%s20 + $0x18] sm:$0xf]
        %v2635 = vld [vmem:[%s20 + $0x1c] sm:$0xf]
        %v2636 = vld [vmem:[%s20 + $0x20] sm:$0xf]
        %v2637 = vld [vmem:[%s20 + $0x24] sm:$0xf]
        %v2638 = vld [vmem:[%s20 + $0x28] sm:$0xf]
        %v2639 = vld [vmem:[%s20 + $0x2c] sm:$0xf]
        %v2640 = vld [vmem:[%s20 + $0x30] sm:$0xf]
        %v2641 = vld [vmem:[%s20 + $0x34] sm:$0xf]
        %v2642 = vld [vmem:[%s20 + $0x38] sm:$0xf]
        %v2643 = vld [vmem:[%s20 + $0x3c] sm:$0xf]
        %v2644 = vld [vmem:[%s20 + $0x40] sm:$0xf]
        %v2645 = vld [vmem:[%s20 + $0x44] sm:$0xf]
        %v2646 = vld [vmem:[%s20 + $0x48] sm:$0xf]
        %v2647 = vld [vmem:[%s20 + $0x4c] sm:$0xf]
        %v2648 = vld [vmem:[%s20 + $0x50] sm:$0xf]
        %v2649 = vld [vmem:[%s20 + $0x54] sm:$0xf]
        %v2650 = vld [vmem:[%s20 + $0x58] sm:$0xf]
        %v2651 = vld [vmem:[%s20 + $0x5c] sm:$0xf]
        %v2652 = vld [vmem:[%s20 + $0x60] sm:$0xf]
        %v2653 = vld [vmem:[%s20 + $0x64] sm:$0xf]
        %v2654 = vld [vmem:[%s20 + $0x68] sm:$0xf]
        %v2655 = vld [vmem:[%s20 + $0x6c] sm:$0xf]
        %v2656 = vld [vmem:[%s20 + $0x70] sm:$0xf]
        %v2657 = vld [vmem:[%s20 + $0x74] sm:$0xf]
        %v2658 = vld [vmem:[%s20 + $0x78] sm:$0xf]
        %v2659 = vld [vmem:[%s20 + $0x7c] sm:$0xf]
        %v2660 = vld [vmem:[%s21] sm:$0x1]
        %v2662 = vlaneseq
        %v2663 = vshrl.u32 %v2662, 7
        %v2664 = vsub.s32 0, %v2663
        %v2665 = vrot.slane %v2660, %v2664
        %v2699 = vunpack.c.l.b16 %v2628
        %v2700 = vunpack.c.l.b16 %v2629
        %v2701 = vunpack.c.l.b16 %v2630
        %v2702 = vunpack.c.l.b16 %v2631
        %v2703 = vunpack.c.l.b16 %v2632
        %v2704 = vunpack.c.l.b16 %v2633
        %v2705 = vunpack.c.l.b16 %v2634
        %v2706 = vunpack.c.l.b16 %v2635
        %v2707 = vunpack.c.l.b16 %v2636
        %v2708 = vunpack.c.l.b16 %v2637
        %v2709 = vunpack.c.l.b16 %v2638
        %v2710 = vunpack.c.l.b16 %v2639
        %v2711 = vunpack.c.l.b16 %v2640
        %v2712 = vunpack.c.l.b16 %v2641
        %v2713 = vunpack.c.l.b16 %v2642
        %v2714 = vunpack.c.l.b16 %v2643
        %v2715 = vunpack.c.l.b16 %v2644
        %v2716 = vunpack.c.l.b16 %v2645
        %v2717 = vunpack.c.l.b16 %v2646
        %v2718 = vunpack.c.l.b16 %v2647
        %v2719 = vunpack.c.l.b16 %v2648
        %v2720 = vunpack.c.l.b16 %v2649
        %v2721 = vunpack.c.l.b16 %v2650
        %v2722 = vunpack.c.l.b16 %v2651
        %v2723 = vunpack.c.l.b16 %v2652
        %v2724 = vunpack.c.l.b16 %v2653
        %v2725 = vunpack.c.l.b16 %v2654
        %v2726 = vunpack.c.l.b16 %v2655
        %v2727 = vunpack.c.l.b16 %v2656
        %v2728 = vunpack.c.l.b16 %v2657
        %v2729 = vunpack.c.l.b16 %v2658
        %v2730 = vunpack.c.l.b16 %v2659
        %v2731 = vpack.c.b16 %v2700, %v2699
        %v2732 = vpack.c.b16 %v2702, %v2701
        %v2733 = vpack.c.b16 %v2704, %v2703
        %v2734 = vpack.c.b16 %v2706, %v2705
        %v2735 = vpack.c.b16 %v2708, %v2707
        %v2736 = vpack.c.b16 %v2710, %v2709
        %v2737 = vpack.c.b16 %v2712, %v2711
        %v2738 = vpack.c.b16 %v2714, %v2713
        %v2739 = vpack.c.b16 %v2716, %v2715
        %v2740 = vpack.c.b16 %v2718, %v2717
        %v2741 = vpack.c.b16 %v2720, %v2719
        %v2742 = vpack.c.b16 %v2722, %v2721
        %v2743 = vpack.c.b16 %v2724, %v2723
        %v2744 = vpack.c.b16 %v2726, %v2725
        %v2745 = vpack.c.b16 %v2728, %v2727
        %v2746 = vpack.c.b16 %v2730, %v2729
        %2763 = vmatprep.subr.bf16.mxu0 0
        %2764 = vmatpush1.bf16.msra.mxu0 %v2738
        %2765 = vmatprep.subr.bf16.mxu0 0
        %2766 = vmatpush1.bf16.msra.mxu0 %v2737
        %2767 = vmatprep.subr.bf16.mxu0 0
        %2768 = vmatpush1.bf16.msra.mxu0 %v2736
        %2769 = vmatprep.subr.bf16.mxu0 0
        %2770 = vmatpush1.bf16.msra.mxu0 %v2735
        %2771 = vmatprep.subr.bf16.mxu0 0
        %2772 = vmatpush1.bf16.msra.mxu0 %v2734
        %2773 = vmatprep.subr.bf16.mxu0 0
        %2774 = vmatpush1.bf16.msra.mxu0 %v2733
        %2775 = vmatprep.subr.bf16.mxu0 0
        %2776 = vmatpush1.bf16.msra.mxu0 %v2732
        %2777 = vmatprep.subr.bf16.mxu0 0
        %2778 = vmatpush1.bf16.msra.mxu0 %v2731
        %2779 = vmatprep.subr.bf16.mxu0 0
        %2780 = vmatpush2.bf16.msra.mxu0 %v2746
        %2781 = vmatprep.subr.bf16.mxu0 0
        %2782 = vmatpush2.bf16.msra.mxu0 %v2745
        %2783 = vmatprep.subr.bf16.mxu0 0
        %2784 = vmatpush2.bf16.msra.mxu0 %v2744
        %2785 = vmatprep.subr.bf16.mxu0 0
        %2786 = vmatpush2.bf16.msra.mxu0 %v2743
        %2787 = vmatprep.subr.bf16.mxu0 0
        %2788 = vmatpush2.bf16.msra.mxu0 %v2742
        %2789 = vmatprep.subr.bf16.mxu0 0
        %2790 = vmatpush2.bf16.msra.mxu0 %v2741
        %2791 = vmatprep.subr.bf16.mxu0 0
        %2792 = vmatpush2.bf16.msra.mxu0 %v2740
        %2793 = vmatprep.subr.bf16.mxu0 0
        %2794 = vmatpush2.bf16.msra.mxu0 %v2739
        %2795 = vmatprep.mubr.bf16.mxu0 %v2627
        %2796 = vmatmul.mubr.bf16.gmra.mxu0 %v2626
        %v2797 = vpop.f32.mrf.mxu0
        %v2798 = vadd.f32 %v2665, %v2797
        %v2799 = vpop.f32.mrf.mxu0
        %v2800 = vpop.f32.mrf.mxu0
        %v2801 = vpop.f32.mrf.mxu0
        %2802 = vdwg.mxu0
        %v2803 = vadd.f32 %v2798, %v2473
        %v2804 = vld [vmem:[%s22] sm:$0x1]
        %v2805 = vld [vmem:[%s23] sm:$0x1]
        %2806 = vadd.xlane.f32.xlu0 %v2803
        %v2807 = vpop.xlane.xlu0 %2806
        %v2808 = vmul.f32 %v2807, %v1591
        %v2809 = vsub.f32 %v2803, %v2808
        %v2810 = vmul.f32 %v2809, %v2809
        %2811 = vadd.xlane.f32.xlu0 %v2810
        %v2812 = vpop.xlane.xlu0 %2811
        %v2813 = vmul.f32 %v2812, %v1591
        %v2814 = vadd.f32 %v2813, 1e-05
        %v2815 = vrsqrt.pop %v2814
        %v2816 = vmul.f32 %v2809, %v2815
        %v2818 = vlaneseq
        %v2819 = vshrl.u32 %v2818, 7
        %v2820 = vsub.s32 0, %v2819
        %v2821 = vrot.slane %v2804, %v2820
        %v2823 = vmul.f32 %v2816, %v2821
        %v2825 = vlaneseq
        %v2826 = vshrl.u32 %v2825, 7
        %v2827 = vsub.s32 0, %v2826
        %v2828 = vrot.slane %v2805, %v2827
        %v2830 = vadd.f32 %v2823, %v2828
        %2831 = vst [vmem:[%s741] sm:$0xff] %v2830
        %s2832 = sand.u32 %s560, 1
        %s2833 = scalar_lea.sflag [#allocation3], %s2832
        %s2834 = sand.u32 %s560, 1
        %s2835 = smul.addr %s2834, 8
        %s2836 = scalar_lea.vmem [#allocation2], %s2835
        // Predicated region
        $region117: #{decoder_layer.1} parent=115 // pred_check
          %p2837 = pneg %p570
        $region118: #{decoder_layer.1} parent=115 // pred_check_branch
          %2839 = sbr.rel (%p2837) target = $region120
        $region119: #{decoder_layer.1} parent=115 // pred_region
          %s2841 = ssub.s32 128, 128
          %2842 = vsyncadd %s2833, %s2841
          %s2843 = smul.addr %s38, 128
          %s2844 = scalar_lea.hbm %s24, %s2843
          %s2846 = sshll.u32 %s2836, 4
          %s2847 = int_to_ptr.vmem [resolvable:$true] %s2846
          %2849 = dma.vmem_to_hbm [thread:$0]  %s2847, 128, %s2844, %s2833
        $region120: #{decoder_layer.1} parent=115 // pred_fallthru
          _
      $region116: #{decoder_layer.1} parent=5 // pred_fallthru
        _
      %p2850 = scmp.le.s32.totalorder 2, %s33
      // Predicated region
      $region121: #{decoder_layer.1} parent=5 // pred_check
        %p2851 = pneg %p2850
      $region122: #{decoder_layer.1} parent=5 // pred_check_branch
        %2853 = sbr.rel (%p2851) target = $region124
      $region123: #{decoder_layer.1} parent=5 // pred_region
        %s2854 = ssub.s32 %s33, 2
        // Predicated region
        $region125: #{decoder_layer.1} parent=123 // pred_check
          %p2855 = pneg %p576
        $region126: #{decoder_layer.1} parent=123 // pred_check_branch
          %2857 = sbr.rel (%p2855) target = $region128
        $region127: #{decoder_layer.1} parent=123 // pred_region
          %s2858 = sand.u32 %s561, 1
          %s2859 = scalar_lea.sflag [#allocation3], %s2858
          %s2860 = sand.u32 %s561, 1
          %s2861 = smul.addr %s2860, 8
          %s2862 = scalar_lea.vmem [#allocation2], %s2861
          %2863 = dma.done %s2859, 128
        $region128: #{decoder_layer.1} parent=123 // pred_fallthru
          _
      $region124: #{decoder_layer.1} parent=5 // pred_fallthru
        _
    $region6: #{decoder_layer.1} parent=1 // loop_footer
      %s37 = sadd.s32 1, %s33
    $region7: #{decoder_layer.1} parent=1 // loop_footer_branch
      %32 = sbr.rel target = $region3
    $region8: #{decoder_layer.1} parent=1 // loop_exit
      _
    %2864 = vsyncpa [#allocation3], 1
    %s2865 = scalar_lea.sflag [#allocation3], 1
    %2866 = vsyncpa %s2865, 1

</llo_original>
